<compile_context>
chip_gen: v6e
topology: v6e:2x2x1
jax: 0.10.0
libtpu: 0.0.40
codegen_flags: <defaults>
</compile_context>

<pallas_src>
import math

import jax
import jax.numpy as jnp
from jax.experimental import pallas as pl
from jax.experimental.pallas import tpu as pltpu

# --------------------------------------------------------------------------
# Model hyper-parameters (small, consistent with the module's __init__)
# --------------------------------------------------------------------------
STATE_DIM = 8
ACTION_DIM = 4
MAX_ACTION = 1.0
SEQ_LEN = 8          # T
EPISODE_LEN = 16
EMBED_DIM = 32       # D
NUM_LAYERS = 2
NUM_HEADS = 2
BATCH = 2
SEQ_REPEAT = 2                       # state + action tokens
DT_SEQ_LEN = SEQ_REPEAT * SEQ_LEN    # L
TIME_TABLE = EPISODE_LEN + SEQ_LEN   # timestep-embedding vocabulary

D = EMBED_DIM
HEAD_DIM = EMBED_DIM // NUM_HEADS

# --------------------------------------------------------------------------
# Packed-parameter slab layouts (shared between pack_params() and the kernel)
# --------------------------------------------------------------------------
# slab_d: (SD_ROWS, D) f32 — everything whose last dim is D.
SD_SE_W = 0                                   # (S, D)
SD_AE_W = SD_SE_W + STATE_DIM                 # (A, D)
SD_TEMB = 16                                  # (TIME_TABLE, D), 8-aligned start
SD_SE_B = SD_TEMB + TIME_TABLE                # 40
SD_AE_B = SD_SE_B + 1
SD_EMBN_W = SD_SE_B + 2
SD_EMBN_B = SD_SE_B + 3
SD_OUTN_W = SD_SE_B + 4
SD_OUTN_B = SD_SE_B + 5
SD_LAYER = 48                                 # first per-layer block, 8-aligned
SD_LN1_W, SD_LN1_B, SD_LN2_W, SD_LN2_B, SD_BO, SD_B2 = 0, 1, 2, 3, 4, 5
SD_WO = 8                                     # (D, D)   rows  +8 .. +39
SD_W2 = 8 + D                                 # (4D, D)  rows +40 .. +167
SD_LAYER_STRIDE = 8 + D + 4 * D               # 168 (8-aligned)
SD_ROWS = SD_LAYER + NUM_LAYERS * SD_LAYER_STRIDE   # 384

# slab_w: (SW_ROWS, 4D=128) f32 — everything lane-dense / wide.
SW_WQKV = 0                                   # (D, 3D) in cols [0, 3D), rows +0 .. +31
SW_W1 = D                                     # (D, 4D)                 rows +32 .. +63
SW_BQKV = 2 * D                               # (3D,)  in cols [0, 3D)
SW_B1 = 2 * D + 1                             # (4D,)
SW_LAYER_STRIDE = 72                          # 8-aligned
SW_HEAD_W = NUM_LAYERS * SW_LAYER_STRIDE      # 144: fused pred head (D, A+S) zero-padded to 128
SW_HEAD_B = SW_HEAD_W + D                     # 176
SW_ROWS = ((SW_HEAD_B + 1 + 7) // 8) * 8      # 184


# --------------------------------------------------------------------------
# In-kernel math helpers (Mosaic-safe: exp / mul / add / rsqrt / where / recip)
# --------------------------------------------------------------------------
def _layernorm(x, w, b, eps=1e-5):
    # single-pass variance: E[x^2] - mu^2 (f32, D=32 — numerically safe here)
    mu = jnp.mean(x, axis=-1, keepdims=True)
    ms = jnp.mean(x * x, axis=-1, keepdims=True)
    var = ms - mu * mu
    return (x - mu) * jax.lax.rsqrt(var + eps) * w + b


def _erf(x):
    # Abramowitz & Stegun 7.1.26 polynomial (|err| < 1.5e-7) — GELU's exact-erf semantics
    # to ~1e-4 rel. accuracy once the EUP approx reciprocal is used for 1/(1+p|x|).
    a1, a2, a3, a4, a5 = (0.254829592, -0.284496736, 1.421413741,
                          -1.453152027, 1.061405429)
    p = 0.3275911
    ax = jnp.abs(x)
    t = pl.reciprocal(1.0 + p * ax, approx=True)
    poly = ((((a5 * t + a4) * t + a3) * t + a2) * t + a1) * t
    y = 1.0 - poly * jnp.exp(-ax * ax)
    return jnp.where(x >= 0.0, y, -y)


def _gelu(x):
    return 0.5 * x * (1.0 + _erf(x * 0.7071067811865476))


# --------------------------------------------------------------------------
# Fused CDT forward kernel (single pallas_call, no grid — all data in VMEM)
# --------------------------------------------------------------------------
def make_cdt_kernel(batch, seq_len):
    BT = batch * seq_len
    NTOK = SEQ_REPEAT * BT
    H = NUM_HEADS
    hd = HEAD_DIM
    scale = 1.0 / math.sqrt(hd)
    # Mask decoding uses shifts/masks (int division avoided in-kernel).
    log_bt = BT.bit_length() - 1
    log_t = seq_len.bit_length() - 1
    assert BT == (1 << log_bt) and seq_len == (1 << log_t), \
        "power-of-two B*T and T assumed"  # TODO(synk): fall back to integer // otherwise

    def kernel(tok_ref, sd_ref, sw_ref, out_ref):
        f32 = jnp.float32

        # static-slice readers into the two parameter slabs (zero-cost views)
        def drow(r):
            return sd_ref[r:r + 1, :]

        def drows(r, n):
            return sd_ref[r:r + n, :]

        def wrow(r):
            return sw_ref[r:r + 1, :]

        def wrows(r, n):
            return sw_ref[r:r + n, :]

        # --- unpack tokens: [states | actions | timestep] ---
        tok = tok_ref[...]                                            # (BT, S+A+1)
        st = tok[:, :STATE_DIM]
        ac = tok[:, STATE_DIM:STATE_DIM + ACTION_DIM]
        ts = tok[:, STATE_DIM + ACTION_DIM:].astype(jnp.int32)        # (BT, 1)

        # --- in-kernel timestep-embedding gather (one-hot @ table on the MXU) ---
        tab_ids = jax.lax.broadcasted_iota(jnp.int32, (BT, TIME_TABLE), 1)
        onehot = (tab_ids == ts).astype(f32)                          # (BT, TT)
        t_emb = jnp.dot(onehot, drows(SD_TEMB, TIME_TABLE),
                        preferred_element_type=f32)                   # (BT, D)

        # --- token embeddings (state / action linears + shared time emb) ---
        s_e = jnp.dot(st, drows(SD_SE_W, STATE_DIM),
                      preferred_element_type=f32) + drow(SD_SE_B) + t_emb
        a_e = jnp.dot(ac, drows(SD_AE_W, ACTION_DIM),
                      preferred_element_type=f32) + drow(SD_AE_B) + t_emb
        # De-interleaved layout: rows [0, BT) = state tokens, [BT, 2BT) = action tokens.
        x = jnp.concatenate([s_e, a_e], axis=0)                       # (NTOK, D)

        # --- emb_norm (emb_drop is identity, p=0) ---
        x = _layernorm(x, drow(SD_EMBN_W), drow(SD_EMBN_B))

        # --- block-diagonal causal additive bias over interleaved positions,
        #     built once in-kernel from iotas (no HBM operand) ---
        r_id = jax.lax.broadcasted_iota(jnp.int32, (NTOK, 1), 0)
        c_id = jax.lax.broadcasted_iota(jnp.int32, (1, NTOK), 1)

        def decode(n):
            typ = jnp.right_shift(n, log_bt)          # n // BT : 0=state, 1=action
            rem = jnp.bitwise_and(n, BT - 1)          # n %  BT
            bat = jnp.right_shift(rem, log_t)         # rem // T
            t = jnp.bitwise_and(rem, seq_len - 1)     # rem %  T
            return bat, 2 * t + typ                   # interleaved position 2*t + typ

        bat_r, pos_r = decode(r_id)
        bat_c, pos_c = decode(c_id)
        allowed = (bat_r == bat_c) & (pos_r >= pos_c)
        bias = jnp.where(allowed, 0.0, -1e30).astype(f32)             # (NTOK, NTOK)

        # --- transformer blocks (static unroll, NUM_LAYERS = 2) ---
        for l in range(NUM_LAYERS):
            db = SD_LAYER + l * SD_LAYER_STRIDE
            wb = l * SW_LAYER_STRIDE

            # pre-norm MHSA with a single fused, lane-dense QKV projection
            h1 = _layernorm(x, drow(db + SD_LN1_W), drow(db + SD_LN1_B))
            qkv = jnp.dot(h1, wrows(wb + SW_WQKV, D),
                          preferred_element_type=f32) + wrow(wb + SW_BQKV)   # (NTOK, 4D)

            head_outs = []
            for hh in range(H):
                q_h = qkv[:, hh * hd:(hh + 1) * hd]                   # (NTOK, hd)
                k_h = qkv[:, D + hh * hd:D + (hh + 1) * hd]
                v_h = qkv[:, 2 * D + hh * hd:2 * D + (hh + 1) * hd]
                s = jax.lax.dot_general(q_h, k_h, (((1,), (1,)), ((), ())),
                                        preferred_element_type=f32) * scale + bias
                s = s - jnp.max(s, axis=-1, keepdims=True)
                e = jnp.exp(s)
                p = e * pl.reciprocal(jnp.sum(e, axis=-1, keepdims=True), approx=True)
                head_outs.append(jnp.dot(p, v_h, preferred_element_type=f32))
            o_cat = jnp.concatenate(head_outs, axis=-1)               # (NTOK, D)
            x = x + jnp.dot(o_cat, drows(db + SD_WO, D),
                            preferred_element_type=f32) + drow(db + SD_BO)

            # pre-norm MLP (GELU), 4x expansion — lane-dense (NTOK, 128) activation
            h2 = _layernorm(x, drow(db + SD_LN2_W), drow(db + SD_LN2_B))
            m = jnp.dot(h2, wrows(wb + SW_W1, D),
                        preferred_element_type=f32) + wrow(wb + SW_B1)
            m = _gelu(m)
            x = x + jnp.dot(m, drows(db + SD_W2, 4 * D),
                            preferred_element_type=f32) + drow(db + SD_B2)

        # --- out_norm + fused prediction heads, padded to a lane-dense 128-col store ---
        y = _layernorm(x, drow(SD_OUTN_W), drow(SD_OUTN_B))
        out_ref[...] = (jnp.dot(y, wrows(SW_HEAD_W, D), preferred_element_type=f32)
                        + wrow(SW_HEAD_B))                            # (NTOK, 128)

    return kernel


# --------------------------------------------------------------------------
# Parameter construction (deterministic, normal(0, 0.02) like _init_weights)
# --------------------------------------------------------------------------
def init_params(key):
    keys = iter(jax.random.split(key, 64))

    def nrm(shape):
        return 0.02 * jax.random.normal(next(keys), shape, dtype=jnp.float32)

    S, A = STATE_DIM, ACTION_DIM
    params = {
        "timestep_emb": nrm((TIME_TABLE, D)),
        "state_emb_w": nrm((S, D)), "state_emb_b": jnp.zeros((D,), jnp.float32),
        "action_emb_w": nrm((A, D)), "action_emb_b": jnp.zeros((D,), jnp.float32),
        "emb_norm_w": jnp.ones((D,), jnp.float32),
        "emb_norm_b": jnp.zeros((D,), jnp.float32),
        "out_norm_w": jnp.ones((D,), jnp.float32),
        "out_norm_b": jnp.zeros((D,), jnp.float32),
        "action_head_w": nrm((D, A)), "action_head_b": jnp.zeros((A,), jnp.float32),
        "state_pred_w": nrm((D, S)), "state_pred_b": jnp.zeros((S,), jnp.float32),
        "blocks": [],
    }
    for _ in range(NUM_LAYERS):
        params["blocks"].append({
            "ln1_w": jnp.ones((D,), jnp.float32), "ln1_b": jnp.zeros((D,), jnp.float32),
            "ln2_w": jnp.ones((D,), jnp.float32), "ln2_b": jnp.zeros((D,), jnp.float32),
            "w_qkv": nrm((D, 3 * D)), "b_qkv": jnp.zeros((3 * D,), jnp.float32),
            "w_out": nrm((D, D)), "b_out": jnp.zeros((D,), jnp.float32),
            "w_fc1": nrm((D, 4 * D)), "b_fc1": jnp.zeros((4 * D,), jnp.float32),
            "w_fc2": nrm((4 * D, D)), "b_fc2": jnp.zeros((D,), jnp.float32),
        })
    return params


def pack_params(params):
    """One-time host-side repacking into TWO kernel operands:
    slab_d (rows x D): all D-wide weights / biases / LN vectors / timestep table;
    slab_w (rows x 4D): fused QKV weight+bias, MLP fc1 weight+bias, fused & zero-padded
    prediction head (action cols [0,A), state cols [A,A+S))."""
    S, A = STATE_DIM, ACTION_DIM
    sd = jnp.zeros((SD_ROWS, D), jnp.float32)
    sw = jnp.zeros((SW_ROWS, 4 * D), jnp.float32)

    sd = sd.at[SD_SE_W:SD_SE_W + S].set(params["state_emb_w"])
    sd = sd.at[SD_AE_W:SD_AE_W + A].set(params["action_emb_w"])
    sd = sd.at[SD_TEMB:SD_TEMB + TIME_TABLE].set(params["timestep_emb"])
    sd = sd.at[SD_SE_B].set(params["state_emb_b"])
    sd = sd.at[SD_AE_B].set(params["action_emb_b"])
    sd = sd.at[SD_EMBN_W].set(params["emb_norm_w"])
    sd = sd.at[SD_EMBN_B].set(params["emb_norm_b"])
    sd = sd.at[SD_OUTN_W].set(params["out_norm_w"])
    sd = sd.at[SD_OUTN_B].set(params["out_norm_b"])

    for l, blk in enumerate(params["blocks"]):
        db = SD_LAYER + l * SD_LAYER_STRIDE
        wb = l * SW_LAYER_STRIDE
        sd = sd.at[db + SD_LN1_W].set(blk["ln1_w"])
        sd = sd.at[db + SD_LN1_B].set(blk["ln1_b"])
        sd = sd.at[db + SD_LN2_W].set(blk["ln2_w"])
        sd = sd.at[db + SD_LN2_B].set(blk["ln2_b"])
        sd = sd.at[db + SD_BO].set(blk["b_out"])
        sd = sd.at[db + SD_B2].set(blk["b_fc2"])
        sd = sd.at[db + SD_WO:db + SD_WO + D].set(blk["w_out"])
        sd = sd.at[db + SD_W2:db + SD_W2 + 4 * D].set(blk["w_fc2"])
        sw = sw.at[wb + SW_WQKV:wb + SW_WQKV + D, :3 * D].set(blk["w_qkv"])
        sw = sw.at[wb + SW_BQKV, :3 * D].set(blk["b_qkv"])
        sw = sw.at[wb + SW_W1:wb + SW_W1 + D].set(blk["w_fc1"])
        sw = sw.at[wb + SW_B1].set(blk["b_fc1"])

    sw = sw.at[SW_HEAD_W:SW_HEAD_W + D, :A].set(params["action_head_w"])
    sw = sw.at[SW_HEAD_W:SW_HEAD_W + D, A:A + S].set(params["state_pred_w"])
    sw = sw.at[SW_HEAD_B, :A].set(params["action_head_b"])
    sw = sw.at[SW_HEAD_B, A:A + S].set(params["state_pred_b"])
    return {"slab_d": sd, "slab_w": sw}


# --------------------------------------------------------------------------
# CDT forward: pack tokens in XLA, everything else fused in one pallas_call
# --------------------------------------------------------------------------
@jax.jit
def cdt_forward(slab_d, slab_w, states, actions, returns_to_go, costs_to_go, time_steps):
    del returns_to_go, costs_to_go          # unused (use_rew=False / use_cost=False)
    B, T, S = states.shape
    A = actions.shape[-1]
    BT = B * T
    NTOK = SEQ_REPEAT * BT

    # single packed token operand: [states | actions | timestep]
    tokens = jnp.concatenate(
        [states.reshape(BT, S), actions.reshape(BT, A),
         time_steps.reshape(BT, 1).astype(jnp.float32)], axis=1)      # (BT, S+A+1)

    preds = pl.pallas_call(
        make_cdt_kernel(B, T),
        out_shape=jax.ShapeDtypeStruct((NTOK, 4 * EMBED_DIM), jnp.float32),
        # Footprint (3 operands + activations) is ~250 KB, far under every generation's
        # scoped limit; set explicitly so scaling up N/B never silently OOMs on v5e.
        compiler_params=pltpu.CompilerParams(vmem_limit_bytes=32 * 1024 * 1024),
    )(tokens, slab_d, slab_w)

    # action head acts on state-token features (rows [0, BT)), columns [0, A);
    # state pred head acts on action-token features (rows [BT, 2BT)), columns [A, A+S).
    action_preds = preds[:BT, :A].reshape(B, T, A)
    state_preds = preds[BT:, A:A + S].reshape(B, T, S)
    cost_preds = None      # use_cost=False -> cost_pred_head is None
    return_preds = None    # use_rew=False  -> return_pred_head is None
    return action_preds, cost_preds, state_preds, return_preds


# --------------------------------------------------------------------------
if __name__ == "__main__":
    root = jax.random.PRNGKey(0)
    k_p, k_s, k_a, k_r, k_c = jax.random.split(root, 5)

    params = init_params(k_p)
    packed = pack_params(params)

    states = jax.random.normal(k_s, (BATCH, SEQ_LEN, STATE_DIM), jnp.float32)
    actions = MAX_ACTION * jnp.tanh(
        jax.random.normal(k_a, (BATCH, SEQ_LEN, ACTION_DIM), jnp.float32))
    returns_to_go = jax.random.normal(k_r, (BATCH, SEQ_LEN), jnp.float32)
    costs_to_go = jax.random.normal(k_c, (BATCH, SEQ_LEN), jnp.float32)
    time_steps = jnp.broadcast_to(jnp.arange(SEQ_LEN, dtype=jnp.int32),
                                  (BATCH, SEQ_LEN))

    action_preds, cost_preds, state_preds, return_preds = cdt_forward(
        packed["slab_d"], packed["slab_w"],
        states, actions, returns_to_go, costs_to_go, time_steps)

    jax.block_until_ready(action_preds)
    jax.block_until_ready(state_preds)

    assert action_preds.shape == (BATCH, SEQ_LEN, ACTION_DIM)
    assert state_preds.shape == (BATCH, SEQ_LEN, STATE_DIM)
    assert cost_preds is None and return_preds is None
    assert bool(jnp.all(jnp.isfinite(action_preds)))
    assert bool(jnp.all(jnp.isfinite(state_preds)))

    print("KERNEL_OK")
</pallas_src>

<mosaic_0001>
module attributes {stable_mosaic.version = 11 : i64} {
  func.func @kernel(%arg0: memref<16x13xf32, #tpu.memory_space<vmem>>, %arg1: memref<384x32xf32, #tpu.memory_space<vmem>>, %arg2: memref<184x128xf32, #tpu.memory_space<vmem>>, %arg3: memref<32x128xf32, #tpu.memory_space<vmem>>) attributes {dimension_semantics = [], scalar_prefetch = 0 : i64, scratch_operands = 0 : i64, tpu.core_type = #tpu.core_type<tc>} {
    %c0 = arith.constant 0 : index
    %c0_0 = arith.constant 0 : index
    %0 = vector.load %arg0[%c0, %c0_0] : memref<16x13xf32, #tpu.memory_space<vmem>>, vector<16x13xf32>
    %1 = vector.extract_strided_slice %0 {offsets = [0, 0], sizes = [16, 8], strides = [1, 1]} : vector<16x13xf32> to vector<16x8xf32>
    %2 = vector.extract_strided_slice %0 {offsets = [0, 8], sizes = [16, 4], strides = [1, 1]} : vector<16x13xf32> to vector<16x4xf32>
    %3 = vector.extract_strided_slice %0 {offsets = [0, 12], sizes = [16, 1], strides = [1, 1]} : vector<16x13xf32> to vector<16x1xf32>
    %4 = arith.fptosi %3 : vector<16x1xf32> to vector<16x1xi32>
    %5 = tpu.iota {dimensions = array<i32: 1>} : vector<16x24xi32>
    %6 = vector.broadcast %4 : vector<16x1xi32> to vector<16x24xi32>
    %7 = arith.cmpi eq, %5, %6 : vector<16x24xi32>
    %8 = arith.extui %7 : vector<16x24xi1> to vector<16x24xi32>
    %9 = arith.sitofp %8 : vector<16x24xi32> to vector<16x24xf32>
    %c16 = arith.constant 16 : index
    %c0_1 = arith.constant 0 : index
    %10 = vector.load %arg1[%c16, %c0_1] : memref<384x32xf32, #tpu.memory_space<vmem>>, vector<24x32xf32>
    %cst = arith.constant dense<0.000000e+00> : vector<16x32xf32>
    %11 = tpu.matmul %9, %10, %cst {dimension_numbers = #tpu.dot_dimension_numbers<[1], [0], [0], [1], [0, 0, 1, 1], [], []>} : vector<16x24xf32>, vector<24x32xf32>, vector<16x32xf32> -> vector<16x32xf32>
    %c0_2 = arith.constant 0 : index
    %c0_3 = arith.constant 0 : index
    %12 = vector.load %arg1[%c0_2, %c0_3] : memref<384x32xf32, #tpu.memory_space<vmem>>, vector<8x32xf32>
    %cst_4 = arith.constant dense<0.000000e+00> : vector<16x32xf32>
    %13 = tpu.matmul %1, %12, %cst_4 {dimension_numbers = #tpu.dot_dimension_numbers<[1], [0], [0], [1], [0, 0, 1, 1], [], []>} : vector<16x8xf32>, vector<8x32xf32>, vector<16x32xf32> -> vector<16x32xf32>
    %c40 = arith.constant 40 : index
    %c0_5 = arith.constant 0 : index
    %14 = vector.load %arg1[%c40, %c0_5] : memref<384x32xf32, #tpu.memory_space<vmem>>, vector<1x32xf32>
    %15 = vector.broadcast %14 : vector<1x32xf32> to vector<16x32xf32>
    %16 = arith.addf %13, %15 : vector<16x32xf32>
    %17 = arith.addf %16, %11 : vector<16x32xf32>
    %c8 = arith.constant 8 : index
    %c0_6 = arith.constant 0 : index
    %18 = vector.load %arg1[%c8, %c0_6] : memref<384x32xf32, #tpu.memory_space<vmem>>, vector<4x32xf32>
    %cst_7 = arith.constant dense<0.000000e+00> : vector<16x32xf32>
    %19 = tpu.matmul %2, %18, %cst_7 {dimension_numbers = #tpu.dot_dimension_numbers<[1], [0], [0], [1], [0, 0, 1, 1], [], []>} : vector<16x4xf32>, vector<4x32xf32>, vector<16x32xf32> -> vector<16x32xf32>
    %c41 = arith.constant 41 : index
    %c0_8 = arith.constant 0 : index
    %20 = vector.load %arg1[%c41, %c0_8] : memref<384x32xf32, #tpu.memory_space<vmem>>, vector<1x32xf32>
    %21 = vector.broadcast %20 : vector<1x32xf32> to vector<16x32xf32>
    %22 = arith.addf %19, %21 : vector<16x32xf32>
    %23 = arith.addf %22, %11 : vector<16x32xf32>
    %24 = tpu.concatenate %17, %23 in 0 : vector<16x32xf32>, vector<16x32xf32> -> vector<32x32xf32>
    %c42 = arith.constant 42 : index
    %c0_9 = arith.constant 0 : index
    %25 = vector.load %arg1[%c42, %c0_9] : memref<384x32xf32, #tpu.memory_space<vmem>>, vector<1x32xf32>
    %c43 = arith.constant 43 : index
    %c0_10 = arith.constant 0 : index
    %26 = vector.load %arg1[%c43, %c0_10] : memref<384x32xf32, #tpu.memory_space<vmem>>, vector<1x32xf32>
    %cst_11 = arith.constant dense<0.000000e+00> : vector<32xf32>
    %27 = vector.multi_reduction <add>, %24, %cst_11 [1] : vector<32x32xf32> to vector<32xf32>
    %28 = vector.shape_cast %27 : vector<32xf32> to vector<32x1xf32>
    %cst_12 = arith.constant 3.200000e+01 : f32
    %29 = vector.broadcast %cst_12 : f32 to vector<32x1xf32>
    %30 = arith.divf %28, %29 : vector<32x1xf32>
    %31 = arith.mulf %24, %24 : vector<32x32xf32>
    %cst_13 = arith.constant dense<0.000000e+00> : vector<32xf32>
    %32 = vector.multi_reduction <add>, %31, %cst_13 [1] : vector<32x32xf32> to vector<32xf32>
    %33 = vector.shape_cast %32 : vector<32xf32> to vector<32x1xf32>
    %cst_14 = arith.constant 3.200000e+01 : f32
    %34 = vector.broadcast %cst_14 : f32 to vector<32x1xf32>
    %35 = arith.divf %33, %34 : vector<32x1xf32>
    %36 = arith.mulf %30, %30 : vector<32x1xf32>
    %37 = arith.subf %35, %36 : vector<32x1xf32>
    %38 = vector.broadcast %30 : vector<32x1xf32> to vector<32x32xf32>
    %39 = arith.subf %24, %38 : vector<32x32xf32>
    %cst_15 = arith.constant 9.99999974E-6 : f32
    %40 = vector.broadcast %cst_15 : f32 to vector<32x1xf32>
    %41 = arith.addf %37, %40 : vector<32x1xf32>
    %42 = math.rsqrt %41 : vector<32x1xf32>
    %43 = vector.broadcast %42 : vector<32x1xf32> to vector<32x32xf32>
    %44 = arith.mulf %39, %43 : vector<32x32xf32>
    %45 = vector.broadcast %25 : vector<1x32xf32> to vector<32x32xf32>
    %46 = arith.mulf %44, %45 : vector<32x32xf32>
    %47 = vector.broadcast %26 : vector<1x32xf32> to vector<32x32xf32>
    %48 = arith.addf %46, %47 : vector<32x32xf32>
    %49 = tpu.iota {dimensions = array<i32: 0>} : vector<32x1xi32>
    %50 = tpu.iota {dimensions = array<i32: 1>} : vector<1x32xi32>
    %c4_i32 = arith.constant 4 : i32
    %51 = vector.broadcast %c4_i32 : i32 to vector<32x1xi32>
    %52 = arith.shrsi %49, %51 : vector<32x1xi32>
    %c15_i32 = arith.constant 15 : i32
    %53 = vector.broadcast %c15_i32 : i32 to vector<32x1xi32>
    %54 = arith.andi %49, %53 : vector<32x1xi32>
    %c3_i32 = arith.constant 3 : i32
    %55 = vector.broadcast %c3_i32 : i32 to vector<32x1xi32>
    %56 = arith.shrsi %54, %55 : vector<32x1xi32>
    %c7_i32 = arith.constant 7 : i32
    %57 = vector.broadcast %c7_i32 : i32 to vector<32x1xi32>
    %58 = arith.andi %54, %57 : vector<32x1xi32>
    %c2_i32 = arith.constant 2 : i32
    %59 = vector.broadcast %c2_i32 : i32 to vector<32x1xi32>
    %60 = arith.muli %59, %58 : vector<32x1xi32>
    %61 = arith.addi %60, %52 : vector<32x1xi32>
    %c4_i32_16 = arith.constant 4 : i32
    %62 = vector.broadcast %c4_i32_16 : i32 to vector<1x32xi32>
    %63 = arith.shrsi %50, %62 : vector<1x32xi32>
    %c15_i32_17 = arith.constant 15 : i32
    %64 = vector.broadcast %c15_i32_17 : i32 to vector<1x32xi32>
    %65 = arith.andi %50, %64 : vector<1x32xi32>
    %c3_i32_18 = arith.constant 3 : i32
    %66 = vector.broadcast %c3_i32_18 : i32 to vector<1x32xi32>
    %67 = arith.shrsi %65, %66 : vector<1x32xi32>
    %c7_i32_19 = arith.constant 7 : i32
    %68 = vector.broadcast %c7_i32_19 : i32 to vector<1x32xi32>
    %69 = arith.andi %65, %68 : vector<1x32xi32>
    %c2_i32_20 = arith.constant 2 : i32
    %70 = vector.broadcast %c2_i32_20 : i32 to vector<1x32xi32>
    %71 = arith.muli %70, %69 : vector<1x32xi32>
    %72 = arith.addi %71, %63 : vector<1x32xi32>
    %73 = vector.broadcast %56 : vector<32x1xi32> to vector<32x32xi32>
    %74 = vector.broadcast %67 : vector<1x32xi32> to vector<32x32xi32>
    %75 = arith.cmpi eq, %73, %74 : vector<32x32xi32>
    %76 = vector.broadcast %61 : vector<32x1xi32> to vector<32x32xi32>
    %77 = vector.broadcast %72 : vector<1x32xi32> to vector<32x32xi32>
    %78 = arith.cmpi sge, %76, %77 : vector<32x32xi32>
    %79 = arith.andi %75, %78 : vector<32x32xi1>
    %cst_21 = arith.constant 0.000000e+00 : f32
    %cst_22 = arith.constant -1.000000e+30 : f32
    %80 = vector.broadcast %cst_21 : f32 to vector<32x32xf32>
    %81 = vector.broadcast %cst_22 : f32 to vector<32x32xf32>
    %82 = arith.select %79, %80, %81 : vector<32x32xi1>, vector<32x32xf32>
    %c48 = arith.constant 48 : index
    %c0_23 = arith.constant 0 : index
    %83 = vector.load %arg1[%c48, %c0_23] : memref<384x32xf32, #tpu.memory_space<vmem>>, vector<1x32xf32>
    %c49 = arith.constant 49 : index
    %c0_24 = arith.constant 0 : index
    %84 = vector.load %arg1[%c49, %c0_24] : memref<384x32xf32, #tpu.memory_space<vmem>>, vector<1x32xf32>
    %cst_25 = arith.constant dense<0.000000e+00> : vector<32xf32>
    %85 = vector.multi_reduction <add>, %48, %cst_25 [1] : vector<32x32xf32> to vector<32xf32>
    %86 = vector.shape_cast %85 : vector<32xf32> to vector<32x1xf32>
    %cst_26 = arith.constant 3.200000e+01 : f32
    %87 = vector.broadcast %cst_26 : f32 to vector<32x1xf32>
    %88 = arith.divf %86, %87 : vector<32x1xf32>
    %89 = arith.mulf %48, %48 : vector<32x32xf32>
    %cst_27 = arith.constant dense<0.000000e+00> : vector<32xf32>
    %90 = vector.multi_reduction <add>, %89, %cst_27 [1] : vector<32x32xf32> to vector<32xf32>
    %91 = vector.shape_cast %90 : vector<32xf32> to vector<32x1xf32>
    %cst_28 = arith.constant 3.200000e+01 : f32
    %92 = vector.broadcast %cst_28 : f32 to vector<32x1xf32>
    %93 = arith.divf %91, %92 : vector<32x1xf32>
    %94 = arith.mulf %88, %88 : vector<32x1xf32>
    %95 = arith.subf %93, %94 : vector<32x1xf32>
    %96 = vector.broadcast %88 : vector<32x1xf32> to vector<32x32xf32>
    %97 = arith.subf %48, %96 : vector<32x32xf32>
    %cst_29 = arith.constant 9.99999974E-6 : f32
    %98 = vector.broadcast %cst_29 : f32 to vector<32x1xf32>
    %99 = arith.addf %95, %98 : vector<32x1xf32>
    %100 = math.rsqrt %99 : vector<32x1xf32>
    %101 = vector.broadcast %100 : vector<32x1xf32> to vector<32x32xf32>
    %102 = arith.mulf %97, %101 : vector<32x32xf32>
    %103 = vector.broadcast %83 : vector<1x32xf32> to vector<32x32xf32>
    %104 = arith.mulf %102, %103 : vector<32x32xf32>
    %105 = vector.broadcast %84 : vector<1x32xf32> to vector<32x32xf32>
    %106 = arith.addf %104, %105 : vector<32x32xf32>
    %c0_30 = arith.constant 0 : index
    %c0_31 = arith.constant 0 : index
    %107 = vector.load %arg2[%c0_30, %c0_31] : memref<184x128xf32, #tpu.memory_space<vmem>>, vector<32x128xf32>
    %cst_32 = arith.constant dense<0.000000e+00> : vector<32x128xf32>
    %108 = tpu.matmul %106, %107, %cst_32 {dimension_numbers = #tpu.dot_dimension_numbers<[1], [0], [0], [1], [0, 0, 1, 1], [], []>} : vector<32x32xf32>, vector<32x128xf32>, vector<32x128xf32> -> vector<32x128xf32>
    %c64 = arith.constant 64 : index
    %c0_33 = arith.constant 0 : index
    %109 = vector.load %arg2[%c64, %c0_33] : memref<184x128xf32, #tpu.memory_space<vmem>>, vector<1x128xf32>
    %110 = vector.broadcast %109 : vector<1x128xf32> to vector<32x128xf32>
    %111 = arith.addf %108, %110 : vector<32x128xf32>
    %112 = vector.extract_strided_slice %111 {offsets = [0, 0], sizes = [32, 16], strides = [1, 1]} : vector<32x128xf32> to vector<32x16xf32>
    %113 = vector.extract_strided_slice %111 {offsets = [0, 32], sizes = [32, 16], strides = [1, 1]} : vector<32x128xf32> to vector<32x16xf32>
    %114 = vector.extract_strided_slice %111 {offsets = [0, 64], sizes = [32, 16], strides = [1, 1]} : vector<32x128xf32> to vector<32x16xf32>
    %cst_34 = arith.constant dense<0.000000e+00> : vector<32x32xf32>
    %115 = tpu.matmul %112, %113, %cst_34 {dimension_numbers = #tpu.dot_dimension_numbers<[1], [1], [0], [0], [0, 0, 1, 0], [], []>} : vector<32x16xf32>, vector<32x16xf32>, vector<32x32xf32> -> vector<32x32xf32>
    %cst_35 = arith.constant 2.500000e-01 : f32
    %116 = vector.broadcast %cst_35 : f32 to vector<32x32xf32>
    %117 = arith.mulf %115, %116 : vector<32x32xf32>
    %118 = arith.addf %117, %82 : vector<32x32xf32>
    %cst_36 = arith.constant dense<0xFF800000> : vector<32xf32>
    %119 = vector.multi_reduction <maximumf>, %118, %cst_36 [1] : vector<32x32xf32> to vector<32xf32>
    %120 = vector.shape_cast %119 : vector<32xf32> to vector<32x1xf32>
    %121 = vector.broadcast %120 : vector<32x1xf32> to vector<32x32xf32>
    %122 = arith.subf %118, %121 : vector<32x32xf32>
    %123 = math.exp %122 : vector<32x32xf32>
    %cst_37 = arith.constant dense<0.000000e+00> : vector<32xf32>
    %124 = vector.multi_reduction <add>, %123, %cst_37 [1] : vector<32x32xf32> to vector<32xf32>
    %125 = vector.shape_cast %124 : vector<32xf32> to vector<32x1xf32>
    %126 = tpu.reciprocal %125 {approx = true} : vector<32x1xf32> -> vector<32x1xf32>
    %127 = vector.broadcast %126 : vector<32x1xf32> to vector<32x32xf32>
    %128 = arith.mulf %123, %127 : vector<32x32xf32>
    %cst_38 = arith.constant dense<0.000000e+00> : vector<32x16xf32>
    %129 = tpu.matmul %128, %114, %cst_38 {dimension_numbers = #tpu.dot_dimension_numbers<[1], [0], [0], [1], [0, 0, 1, 1], [], []>} : vector<32x32xf32>, vector<32x16xf32>, vector<32x16xf32> -> vector<32x16xf32>
    %130 = vector.extract_strided_slice %111 {offsets = [0, 16], sizes = [32, 16], strides = [1, 1]} : vector<32x128xf32> to vector<32x16xf32>
    %131 = vector.extract_strided_slice %111 {offsets = [0, 48], sizes = [32, 16], strides = [1, 1]} : vector<32x128xf32> to vector<32x16xf32>
    %132 = vector.extract_strided_slice %111 {offsets = [0, 80], sizes = [32, 16], strides = [1, 1]} : vector<32x128xf32> to vector<32x16xf32>
    %cst_39 = arith.constant dense<0.000000e+00> : vector<32x32xf32>
    %133 = tpu.matmul %130, %131, %cst_39 {dimension_numbers = #tpu.dot_dimension_numbers<[1], [1], [0], [0], [0, 0, 1, 0], [], []>} : vector<32x16xf32>, vector<32x16xf32>, vector<32x32xf32> -> vector<32x32xf32>
    %cst_40 = arith.constant 2.500000e-01 : f32
    %134 = vector.broadcast %cst_40 : f32 to vector<32x32xf32>
    %135 = arith.mulf %133, %134 : vector<32x32xf32>
    %136 = arith.addf %135, %82 : vector<32x32xf32>
    %cst_41 = arith.constant dense<0xFF800000> : vector<32xf32>
    %137 = vector.multi_reduction <maximumf>, %136, %cst_41 [1] : vector<32x32xf32> to vector<32xf32>
    %138 = vector.shape_cast %137 : vector<32xf32> to vector<32x1xf32>
    %139 = vector.broadcast %138 : vector<32x1xf32> to vector<32x32xf32>
    %140 = arith.subf %136, %139 : vector<32x32xf32>
    %141 = math.exp %140 : vector<32x32xf32>
    %cst_42 = arith.constant dense<0.000000e+00> : vector<32xf32>
    %142 = vector.multi_reduction <add>, %141, %cst_42 [1] : vector<32x32xf32> to vector<32xf32>
    %143 = vector.shape_cast %142 : vector<32xf32> to vector<32x1xf32>
    %144 = tpu.reciprocal %143 {approx = true} : vector<32x1xf32> -> vector<32x1xf32>
    %145 = vector.broadcast %144 : vector<32x1xf32> to vector<32x32xf32>
    %146 = arith.mulf %141, %145 : vector<32x32xf32>
    %cst_43 = arith.constant dense<0.000000e+00> : vector<32x16xf32>
    %147 = tpu.matmul %146, %132, %cst_43 {dimension_numbers = #tpu.dot_dimension_numbers<[1], [0], [0], [1], [0, 0, 1, 1], [], []>} : vector<32x32xf32>, vector<32x16xf32>, vector<32x16xf32> -> vector<32x16xf32>
    %148 = tpu.concatenate %129, %147 in 1 : vector<32x16xf32>, vector<32x16xf32> -> vector<32x32xf32>
    %c56 = arith.constant 56 : index
    %c0_44 = arith.constant 0 : index
    %149 = vector.load %arg1[%c56, %c0_44] : memref<384x32xf32, #tpu.memory_space<vmem>>, vector<32x32xf32>
    %cst_45 = arith.constant dense<0.000000e+00> : vector<32x32xf32>
    %150 = tpu.matmul %148, %149, %cst_45 {dimension_numbers = #tpu.dot_dimension_numbers<[1], [0], [0], [1], [0, 0, 1, 1], [], []>} : vector<32x32xf32>, vector<32x32xf32>, vector<32x32xf32> -> vector<32x32xf32>
    %151 = arith.addf %48, %150 : vector<32x32xf32>
    %c52 = arith.constant 52 : index
    %c0_46 = arith.constant 0 : index
    %152 = vector.load %arg1[%c52, %c0_46] : memref<384x32xf32, #tpu.memory_space<vmem>>, vector<1x32xf32>
    %153 = vector.broadcast %152 : vector<1x32xf32> to vector<32x32xf32>
    %154 = arith.addf %151, %153 : vector<32x32xf32>
    %c50 = arith.constant 50 : index
    %c0_47 = arith.constant 0 : index
    %155 = vector.load %arg1[%c50, %c0_47] : memref<384x32xf32, #tpu.memory_space<vmem>>, vector<1x32xf32>
    %c51 = arith.constant 51 : index
    %c0_48 = arith.constant 0 : index
    %156 = vector.load %arg1[%c51, %c0_48] : memref<384x32xf32, #tpu.memory_space<vmem>>, vector<1x32xf32>
    %cst_49 = arith.constant dense<0.000000e+00> : vector<32xf32>
    %157 = vector.multi_reduction <add>, %154, %cst_49 [1] : vector<32x32xf32> to vector<32xf32>
    %158 = vector.shape_cast %157 : vector<32xf32> to vector<32x1xf32>
    %cst_50 = arith.constant 3.200000e+01 : f32
    %159 = vector.broadcast %cst_50 : f32 to vector<32x1xf32>
    %160 = arith.divf %158, %159 : vector<32x1xf32>
    %161 = arith.mulf %154, %154 : vector<32x32xf32>
    %cst_51 = arith.constant dense<0.000000e+00> : vector<32xf32>
    %162 = vector.multi_reduction <add>, %161, %cst_51 [1] : vector<32x32xf32> to vector<32xf32>
    %163 = vector.shape_cast %162 : vector<32xf32> to vector<32x1xf32>
    %cst_52 = arith.constant 3.200000e+01 : f32
    %164 = vector.broadcast %cst_52 : f32 to vector<32x1xf32>
    %165 = arith.divf %163, %164 : vector<32x1xf32>
    %166 = arith.mulf %160, %160 : vector<32x1xf32>
    %167 = arith.subf %165, %166 : vector<32x1xf32>
    %168 = vector.broadcast %160 : vector<32x1xf32> to vector<32x32xf32>
    %169 = arith.subf %154, %168 : vector<32x32xf32>
    %cst_53 = arith.constant 9.99999974E-6 : f32
    %170 = vector.broadcast %cst_53 : f32 to vector<32x1xf32>
    %171 = arith.addf %167, %170 : vector<32x1xf32>
    %172 = math.rsqrt %171 : vector<32x1xf32>
    %173 = vector.broadcast %172 : vector<32x1xf32> to vector<32x32xf32>
    %174 = arith.mulf %169, %173 : vector<32x32xf32>
    %175 = vector.broadcast %155 : vector<1x32xf32> to vector<32x32xf32>
    %176 = arith.mulf %174, %175 : vector<32x32xf32>
    %177 = vector.broadcast %156 : vector<1x32xf32> to vector<32x32xf32>
    %178 = arith.addf %176, %177 : vector<32x32xf32>
    %c32 = arith.constant 32 : index
    %c0_54 = arith.constant 0 : index
    %179 = vector.load %arg2[%c32, %c0_54] : memref<184x128xf32, #tpu.memory_space<vmem>>, vector<32x128xf32>
    %cst_55 = arith.constant dense<0.000000e+00> : vector<32x128xf32>
    %180 = tpu.matmul %178, %179, %cst_55 {dimension_numbers = #tpu.dot_dimension_numbers<[1], [0], [0], [1], [0, 0, 1, 1], [], []>} : vector<32x32xf32>, vector<32x128xf32>, vector<32x128xf32> -> vector<32x128xf32>
    %c65 = arith.constant 65 : index
    %c0_56 = arith.constant 0 : index
    %181 = vector.load %arg2[%c65, %c0_56] : memref<184x128xf32, #tpu.memory_space<vmem>>, vector<1x128xf32>
    %182 = vector.broadcast %181 : vector<1x128xf32> to vector<32x128xf32>
    %183 = arith.addf %180, %182 : vector<32x128xf32>
    %cst_57 = arith.constant 5.000000e-01 : f32
    %184 = vector.broadcast %cst_57 : f32 to vector<32x128xf32>
    %185 = arith.mulf %184, %183 : vector<32x128xf32>
    %cst_58 = arith.constant 0.707106769 : f32
    %186 = vector.broadcast %cst_58 : f32 to vector<32x128xf32>
    %187 = arith.mulf %183, %186 : vector<32x128xf32>
    %188 = math.absf %187 : vector<32x128xf32>
    %cst_59 = arith.constant 0.327591091 : f32
    %189 = vector.broadcast %cst_59 : f32 to vector<32x128xf32>
    %190 = arith.mulf %189, %188 : vector<32x128xf32>
    %cst_60 = arith.constant 1.000000e+00 : f32
    %191 = vector.broadcast %cst_60 : f32 to vector<32x128xf32>
    %192 = arith.addf %191, %190 : vector<32x128xf32>
    %193 = tpu.reciprocal %192 {approx = true} : vector<32x128xf32> -> vector<32x128xf32>
    %cst_61 = arith.constant 1.06140542 : f32
    %194 = vector.broadcast %cst_61 : f32 to vector<32x128xf32>
    %195 = arith.mulf %194, %193 : vector<32x128xf32>
    %cst_62 = arith.constant -1.45315206 : f32
    %196 = vector.broadcast %cst_62 : f32 to vector<32x128xf32>
    %197 = arith.addf %195, %196 : vector<32x128xf32>
    %198 = arith.mulf %197, %193 : vector<32x128xf32>
    %cst_63 = arith.constant 1.42141378 : f32
    %199 = vector.broadcast %cst_63 : f32 to vector<32x128xf32>
    %200 = arith.addf %198, %199 : vector<32x128xf32>
    %201 = arith.mulf %200, %193 : vector<32x128xf32>
    %cst_64 = arith.constant -0.284496725 : f32
    %202 = vector.broadcast %cst_64 : f32 to vector<32x128xf32>
    %203 = arith.addf %201, %202 : vector<32x128xf32>
    %204 = arith.mulf %203, %193 : vector<32x128xf32>
    %cst_65 = arith.constant 0.254829586 : f32
    %205 = vector.broadcast %cst_65 : f32 to vector<32x128xf32>
    %206 = arith.addf %204, %205 : vector<32x128xf32>
    %207 = arith.mulf %206, %193 : vector<32x128xf32>
    %cst_66 = arith.constant 0.000000e+00 : f32
    %208 = vector.broadcast %cst_66 : f32 to vector<32x128xf32>
    %209 = arith.subf %208, %188 : vector<32x128xf32>
    %210 = arith.mulf %209, %188 : vector<32x128xf32>
    %211 = math.exp %210 : vector<32x128xf32>
    %212 = arith.mulf %207, %211 : vector<32x128xf32>
    %cst_67 = arith.constant 1.000000e+00 : f32
    %213 = vector.broadcast %cst_67 : f32 to vector<32x128xf32>
    %214 = arith.subf %213, %212 : vector<32x128xf32>
    %cst_68 = arith.constant 0.000000e+00 : f32
    %215 = vector.broadcast %cst_68 : f32 to vector<32x128xf32>
    %216 = arith.cmpf oge, %187, %215 : vector<32x128xf32>
    %cst_69 = arith.constant 0.000000e+00 : f32
    %217 = vector.broadcast %cst_69 : f32 to vector<32x128xf32>
    %218 = arith.subf %217, %214 : vector<32x128xf32>
    %219 = arith.select %216, %214, %218 : vector<32x128xi1>, vector<32x128xf32>
    %cst_70 = arith.constant 1.000000e+00 : f32
    %220 = vector.broadcast %cst_70 : f32 to vector<32x128xf32>
    %221 = arith.addf %220, %219 : vector<32x128xf32>
    %222 = arith.mulf %185, %221 : vector<32x128xf32>
    %c88 = arith.constant 88 : index
    %c0_71 = arith.constant 0 : index
    %223 = vector.load %arg1[%c88, %c0_71] : memref<384x32xf32, #tpu.memory_space<vmem>>, vector<128x32xf32>
    %cst_72 = arith.constant dense<0.000000e+00> : vector<32x32xf32>
    %224 = tpu.matmul %222, %223, %cst_72 {dimension_numbers = #tpu.dot_dimension_numbers<[1], [0], [0], [1], [0, 0, 1, 1], [], []>} : vector<32x128xf32>, vector<128x32xf32>, vector<32x32xf32> -> vector<32x32xf32>
    %225 = arith.addf %154, %224 : vector<32x32xf32>
    %c53 = arith.constant 53 : index
    %c0_73 = arith.constant 0 : index
    %226 = vector.load %arg1[%c53, %c0_73] : memref<384x32xf32, #tpu.memory_space<vmem>>, vector<1x32xf32>
    %227 = vector.broadcast %226 : vector<1x32xf32> to vector<32x32xf32>
    %228 = arith.addf %225, %227 : vector<32x32xf32>
    %c216 = arith.constant 216 : index
    %c0_74 = arith.constant 0 : index
    %229 = vector.load %arg1[%c216, %c0_74] : memref<384x32xf32, #tpu.memory_space<vmem>>, vector<1x32xf32>
    %c217 = arith.constant 217 : index
    %c0_75 = arith.constant 0 : index
    %230 = vector.load %arg1[%c217, %c0_75] : memref<384x32xf32, #tpu.memory_space<vmem>>, vector<1x32xf32>
    %cst_76 = arith.constant dense<0.000000e+00> : vector<32xf32>
    %231 = vector.multi_reduction <add>, %228, %cst_76 [1] : vector<32x32xf32> to vector<32xf32>
    %232 = vector.shape_cast %231 : vector<32xf32> to vector<32x1xf32>
    %cst_77 = arith.constant 3.200000e+01 : f32
    %233 = vector.broadcast %cst_77 : f32 to vector<32x1xf32>
    %234 = arith.divf %232, %233 : vector<32x1xf32>
    %235 = arith.mulf %228, %228 : vector<32x32xf32>
    %cst_78 = arith.constant dense<0.000000e+00> : vector<32xf32>
    %236 = vector.multi_reduction <add>, %235, %cst_78 [1] : vector<32x32xf32> to vector<32xf32>
    %237 = vector.shape_cast %236 : vector<32xf32> to vector<32x1xf32>
    %cst_79 = arith.constant 3.200000e+01 : f32
    %238 = vector.broadcast %cst_79 : f32 to vector<32x1xf32>
    %239 = arith.divf %237, %238 : vector<32x1xf32>
    %240 = arith.mulf %234, %234 : vector<32x1xf32>
    %241 = arith.subf %239, %240 : vector<32x1xf32>
    %242 = vector.broadcast %234 : vector<32x1xf32> to vector<32x32xf32>
    %243 = arith.subf %228, %242 : vector<32x32xf32>
    %cst_80 = arith.constant 9.99999974E-6 : f32
    %244 = vector.broadcast %cst_80 : f32 to vector<32x1xf32>
    %245 = arith.addf %241, %244 : vector<32x1xf32>
    %246 = math.rsqrt %245 : vector<32x1xf32>
    %247 = vector.broadcast %246 : vector<32x1xf32> to vector<32x32xf32>
    %248 = arith.mulf %243, %247 : vector<32x32xf32>
    %249 = vector.broadcast %229 : vector<1x32xf32> to vector<32x32xf32>
    %250 = arith.mulf %248, %249 : vector<32x32xf32>
    %251 = vector.broadcast %230 : vector<1x32xf32> to vector<32x32xf32>
    %252 = arith.addf %250, %251 : vector<32x32xf32>
    %c72 = arith.constant 72 : index
    %c0_81 = arith.constant 0 : index
    %253 = vector.load %arg2[%c72, %c0_81] : memref<184x128xf32, #tpu.memory_space<vmem>>, vector<32x128xf32>
    %cst_82 = arith.constant dense<0.000000e+00> : vector<32x128xf32>
    %254 = tpu.matmul %252, %253, %cst_82 {dimension_numbers = #tpu.dot_dimension_numbers<[1], [0], [0], [1], [0, 0, 1, 1], [], []>} : vector<32x32xf32>, vector<32x128xf32>, vector<32x128xf32> -> vector<32x128xf32>
    %c136 = arith.constant 136 : index
    %c0_83 = arith.constant 0 : index
    %255 = vector.load %arg2[%c136, %c0_83] : memref<184x128xf32, #tpu.memory_space<vmem>>, vector<1x128xf32>
    %256 = vector.broadcast %255 : vector<1x128xf32> to vector<32x128xf32>
    %257 = arith.addf %254, %256 : vector<32x128xf32>
    %258 = vector.extract_strided_slice %257 {offsets = [0, 0], sizes = [32, 16], strides = [1, 1]} : vector<32x128xf32> to vector<32x16xf32>
    %259 = vector.extract_strided_slice %257 {offsets = [0, 32], sizes = [32, 16], strides = [1, 1]} : vector<32x128xf32> to vector<32x16xf32>
    %260 = vector.extract_strided_slice %257 {offsets = [0, 64], sizes = [32, 16], strides = [1, 1]} : vector<32x128xf32> to vector<32x16xf32>
    %cst_84 = arith.constant dense<0.000000e+00> : vector<32x32xf32>
    %261 = tpu.matmul %258, %259, %cst_84 {dimension_numbers = #tpu.dot_dimension_numbers<[1], [1], [0], [0], [0, 0, 1, 0], [], []>} : vector<32x16xf32>, vector<32x16xf32>, vector<32x32xf32> -> vector<32x32xf32>
    %cst_85 = arith.constant 2.500000e-01 : f32
    %262 = vector.broadcast %cst_85 : f32 to vector<32x32xf32>
    %263 = arith.mulf %261, %262 : vector<32x32xf32>
    %264 = arith.addf %263, %82 : vector<32x32xf32>
    %cst_86 = arith.constant dense<0xFF800000> : vector<32xf32>
    %265 = vector.multi_reduction <maximumf>, %264, %cst_86 [1] : vector<32x32xf32> to vector<32xf32>
    %266 = vector.shape_cast %265 : vector<32xf32> to vector<32x1xf32>
    %267 = vector.broadcast %266 : vector<32x1xf32> to vector<32x32xf32>
    %268 = arith.subf %264, %267 : vector<32x32xf32>
    %269 = math.exp %268 : vector<32x32xf32>
    %cst_87 = arith.constant dense<0.000000e+00> : vector<32xf32>
    %270 = vector.multi_reduction <add>, %269, %cst_87 [1] : vector<32x32xf32> to vector<32xf32>
    %271 = vector.shape_cast %270 : vector<32xf32> to vector<32x1xf32>
    %272 = tpu.reciprocal %271 {approx = true} : vector<32x1xf32> -> vector<32x1xf32>
    %273 = vector.broadcast %272 : vector<32x1xf32> to vector<32x32xf32>
    %274 = arith.mulf %269, %273 : vector<32x32xf32>
    %cst_88 = arith.constant dense<0.000000e+00> : vector<32x16xf32>
    %275 = tpu.matmul %274, %260, %cst_88 {dimension_numbers = #tpu.dot_dimension_numbers<[1], [0], [0], [1], [0, 0, 1, 1], [], []>} : vector<32x32xf32>, vector<32x16xf32>, vector<32x16xf32> -> vector<32x16xf32>
    %276 = vector.extract_strided_slice %257 {offsets = [0, 16], sizes = [32, 16], strides = [1, 1]} : vector<32x128xf32> to vector<32x16xf32>
    %277 = vector.extract_strided_slice %257 {offsets = [0, 48], sizes = [32, 16], strides = [1, 1]} : vector<32x128xf32> to vector<32x16xf32>
    %278 = vector.extract_strided_slice %257 {offsets = [0, 80], sizes = [32, 16], strides = [1, 1]} : vector<32x128xf32> to vector<32x16xf32>
    %cst_89 = arith.constant dense<0.000000e+00> : vector<32x32xf32>
    %279 = tpu.matmul %276, %277, %cst_89 {dimension_numbers = #tpu.dot_dimension_numbers<[1], [1], [0], [0], [0, 0, 1, 0], [], []>} : vector<32x16xf32>, vector<32x16xf32>, vector<32x32xf32> -> vector<32x32xf32>
    %cst_90 = arith.constant 2.500000e-01 : f32
    %280 = vector.broadcast %cst_90 : f32 to vector<32x32xf32>
    %281 = arith.mulf %279, %280 : vector<32x32xf32>
    %282 = arith.addf %281, %82 : vector<32x32xf32>
    %cst_91 = arith.constant dense<0xFF800000> : vector<32xf32>
    %283 = vector.multi_reduction <maximumf>, %282, %cst_91 [1] : vector<32x32xf32> to vector<32xf32>
    %284 = vector.shape_cast %283 : vector<32xf32> to vector<32x1xf32>
    %285 = vector.broadcast %284 : vector<32x1xf32> to vector<32x32xf32>
    %286 = arith.subf %282, %285 : vector<32x32xf32>
    %287 = math.exp %286 : vector<32x32xf32>
    %cst_92 = arith.constant dense<0.000000e+00> : vector<32xf32>
    %288 = vector.multi_reduction <add>, %287, %cst_92 [1] : vector<32x32xf32> to vector<32xf32>
    %289 = vector.shape_cast %288 : vector<32xf32> to vector<32x1xf32>
    %290 = tpu.reciprocal %289 {approx = true} : vector<32x1xf32> -> vector<32x1xf32>
    %291 = vector.broadcast %290 : vector<32x1xf32> to vector<32x32xf32>
    %292 = arith.mulf %287, %291 : vector<32x32xf32>
    %cst_93 = arith.constant dense<0.000000e+00> : vector<32x16xf32>
    %293 = tpu.matmul %292, %278, %cst_93 {dimension_numbers = #tpu.dot_dimension_numbers<[1], [0], [0], [1], [0, 0, 1, 1], [], []>} : vector<32x32xf32>, vector<32x16xf32>, vector<32x16xf32> -> vector<32x16xf32>
    %294 = tpu.concatenate %275, %293 in 1 : vector<32x16xf32>, vector<32x16xf32> -> vector<32x32xf32>
    %c224 = arith.constant 224 : index
    %c0_94 = arith.constant 0 : index
    %295 = vector.load %arg1[%c224, %c0_94] : memref<384x32xf32, #tpu.memory_space<vmem>>, vector<32x32xf32>
    %cst_95 = arith.constant dense<0.000000e+00> : vector<32x32xf32>
    %296 = tpu.matmul %294, %295, %cst_95 {dimension_numbers = #tpu.dot_dimension_numbers<[1], [0], [0], [1], [0, 0, 1, 1], [], []>} : vector<32x32xf32>, vector<32x32xf32>, vector<32x32xf32> -> vector<32x32xf32>
    %297 = arith.addf %228, %296 : vector<32x32xf32>
    %c220 = arith.constant 220 : index
    %c0_96 = arith.constant 0 : index
    %298 = vector.load %arg1[%c220, %c0_96] : memref<384x32xf32, #tpu.memory_space<vmem>>, vector<1x32xf32>
    %299 = vector.broadcast %298 : vector<1x32xf32> to vector<32x32xf32>
    %300 = arith.addf %297, %299 : vector<32x32xf32>
    %c218 = arith.constant 218 : index
    %c0_97 = arith.constant 0 : index
    %301 = vector.load %arg1[%c218, %c0_97] : memref<384x32xf32, #tpu.memory_space<vmem>>, vector<1x32xf32>
    %c219 = arith.constant 219 : index
    %c0_98 = arith.constant 0 : index
    %302 = vector.load %arg1[%c219, %c0_98] : memref<384x32xf32, #tpu.memory_space<vmem>>, vector<1x32xf32>
    %cst_99 = arith.constant dense<0.000000e+00> : vector<32xf32>
    %303 = vector.multi_reduction <add>, %300, %cst_99 [1] : vector<32x32xf32> to vector<32xf32>
    %304 = vector.shape_cast %303 : vector<32xf32> to vector<32x1xf32>
    %cst_100 = arith.constant 3.200000e+01 : f32
    %305 = vector.broadcast %cst_100 : f32 to vector<32x1xf32>
    %306 = arith.divf %304, %305 : vector<32x1xf32>
    %307 = arith.mulf %300, %300 : vector<32x32xf32>
    %cst_101 = arith.constant dense<0.000000e+00> : vector<32xf32>
    %308 = vector.multi_reduction <add>, %307, %cst_101 [1] : vector<32x32xf32> to vector<32xf32>
    %309 = vector.shape_cast %308 : vector<32xf32> to vector<32x1xf32>
    %cst_102 = arith.constant 3.200000e+01 : f32
    %310 = vector.broadcast %cst_102 : f32 to vector<32x1xf32>
    %311 = arith.divf %309, %310 : vector<32x1xf32>
    %312 = arith.mulf %306, %306 : vector<32x1xf32>
    %313 = arith.subf %311, %312 : vector<32x1xf32>
    %314 = vector.broadcast %306 : vector<32x1xf32> to vector<32x32xf32>
    %315 = arith.subf %300, %314 : vector<32x32xf32>
    %cst_103 = arith.constant 9.99999974E-6 : f32
    %316 = vector.broadcast %cst_103 : f32 to vector<32x1xf32>
    %317 = arith.addf %313, %316 : vector<32x1xf32>
    %318 = math.rsqrt %317 : vector<32x1xf32>
    %319 = vector.broadcast %318 : vector<32x1xf32> to vector<32x32xf32>
    %320 = arith.mulf %315, %319 : vector<32x32xf32>
    %321 = vector.broadcast %301 : vector<1x32xf32> to vector<32x32xf32>
    %322 = arith.mulf %320, %321 : vector<32x32xf32>
    %323 = vector.broadcast %302 : vector<1x32xf32> to vector<32x32xf32>
    %324 = arith.addf %322, %323 : vector<32x32xf32>
    %c104 = arith.constant 104 : index
    %c0_104 = arith.constant 0 : index
    %325 = vector.load %arg2[%c104, %c0_104] : memref<184x128xf32, #tpu.memory_space<vmem>>, vector<32x128xf32>
    %cst_105 = arith.constant dense<0.000000e+00> : vector<32x128xf32>
    %326 = tpu.matmul %324, %325, %cst_105 {dimension_numbers = #tpu.dot_dimension_numbers<[1], [0], [0], [1], [0, 0, 1, 1], [], []>} : vector<32x32xf32>, vector<32x128xf32>, vector<32x128xf32> -> vector<32x128xf32>
    %c137 = arith.constant 137 : index
    %c0_106 = arith.constant 0 : index
    %327 = vector.load %arg2[%c137, %c0_106] : memref<184x128xf32, #tpu.memory_space<vmem>>, vector<1x128xf32>
    %328 = vector.broadcast %327 : vector<1x128xf32> to vector<32x128xf32>
    %329 = arith.addf %326, %328 : vector<32x128xf32>
    %cst_107 = arith.constant 5.000000e-01 : f32
    %330 = vector.broadcast %cst_107 : f32 to vector<32x128xf32>
    %331 = arith.mulf %330, %329 : vector<32x128xf32>
    %cst_108 = arith.constant 0.707106769 : f32
    %332 = vector.broadcast %cst_108 : f32 to vector<32x128xf32>
    %333 = arith.mulf %329, %332 : vector<32x128xf32>
    %334 = math.absf %333 : vector<32x128xf32>
    %cst_109 = arith.constant 0.327591091 : f32
    %335 = vector.broadcast %cst_109 : f32 to vector<32x128xf32>
    %336 = arith.mulf %335, %334 : vector<32x128xf32>
    %cst_110 = arith.constant 1.000000e+00 : f32
    %337 = vector.broadcast %cst_110 : f32 to vector<32x128xf32>
    %338 = arith.addf %337, %336 : vector<32x128xf32>
    %339 = tpu.reciprocal %338 {approx = true} : vector<32x128xf32> -> vector<32x128xf32>
    %cst_111 = arith.constant 1.06140542 : f32
    %340 = vector.broadcast %cst_111 : f32 to vector<32x128xf32>
    %341 = arith.mulf %340, %339 : vector<32x128xf32>
    %cst_112 = arith.constant -1.45315206 : f32
    %342 = vector.broadcast %cst_112 : f32 to vector<32x128xf32>
    %343 = arith.addf %341, %342 : vector<32x128xf32>
    %344 = arith.mulf %343, %339 : vector<32x128xf32>
    %cst_113 = arith.constant 1.42141378 : f32
    %345 = vector.broadcast %cst_113 : f32 to vector<32x128xf32>
    %346 = arith.addf %344, %345 : vector<32x128xf32>
    %347 = arith.mulf %346, %339 : vector<32x128xf32>
    %cst_114 = arith.constant -0.284496725 : f32
    %348 = vector.broadcast %cst_114 : f32 to vector<32x128xf32>
    %349 = arith.addf %347, %348 : vector<32x128xf32>
    %350 = arith.mulf %349, %339 : vector<32x128xf32>
    %cst_115 = arith.constant 0.254829586 : f32
    %351 = vector.broadcast %cst_115 : f32 to vector<32x128xf32>
    %352 = arith.addf %350, %351 : vector<32x128xf32>
    %353 = arith.mulf %352, %339 : vector<32x128xf32>
    %cst_116 = arith.constant 0.000000e+00 : f32
    %354 = vector.broadcast %cst_116 : f32 to vector<32x128xf32>
    %355 = arith.subf %354, %334 : vector<32x128xf32>
    %356 = arith.mulf %355, %334 : vector<32x128xf32>
    %357 = math.exp %356 : vector<32x128xf32>
    %358 = arith.mulf %353, %357 : vector<32x128xf32>
    %cst_117 = arith.constant 1.000000e+00 : f32
    %359 = vector.broadcast %cst_117 : f32 to vector<32x128xf32>
    %360 = arith.subf %359, %358 : vector<32x128xf32>
    %cst_118 = arith.constant 0.000000e+00 : f32
    %361 = vector.broadcast %cst_118 : f32 to vector<32x128xf32>
    %362 = arith.cmpf oge, %333, %361 : vector<32x128xf32>
    %cst_119 = arith.constant 0.000000e+00 : f32
    %363 = vector.broadcast %cst_119 : f32 to vector<32x128xf32>
    %364 = arith.subf %363, %360 : vector<32x128xf32>
    %365 = arith.select %362, %360, %364 : vector<32x128xi1>, vector<32x128xf32>
    %cst_120 = arith.constant 1.000000e+00 : f32
    %366 = vector.broadcast %cst_120 : f32 to vector<32x128xf32>
    %367 = arith.addf %366, %365 : vector<32x128xf32>
    %368 = arith.mulf %331, %367 : vector<32x128xf32>
    %c256 = arith.constant 256 : index
    %c0_121 = arith.constant 0 : index
    %369 = vector.load %arg1[%c256, %c0_121] : memref<384x32xf32, #tpu.memory_space<vmem>>, vector<128x32xf32>
    %cst_122 = arith.constant dense<0.000000e+00> : vector<32x32xf32>
    %370 = tpu.matmul %368, %369, %cst_122 {dimension_numbers = #tpu.dot_dimension_numbers<[1], [0], [0], [1], [0, 0, 1, 1], [], []>} : vector<32x128xf32>, vector<128x32xf32>, vector<32x32xf32> -> vector<32x32xf32>
    %371 = arith.addf %300, %370 : vector<32x32xf32>
    %c221 = arith.constant 221 : index
    %c0_123 = arith.constant 0 : index
    %372 = vector.load %arg1[%c221, %c0_123] : memref<384x32xf32, #tpu.memory_space<vmem>>, vector<1x32xf32>
    %373 = vector.broadcast %372 : vector<1x32xf32> to vector<32x32xf32>
    %374 = arith.addf %371, %373 : vector<32x32xf32>
    %c44 = arith.constant 44 : index
    %c0_124 = arith.constant 0 : index
    %375 = vector.load %arg1[%c44, %c0_124] : memref<384x32xf32, #tpu.memory_space<vmem>>, vector<1x32xf32>
    %c45 = arith.constant 45 : index
    %c0_125 = arith.constant 0 : index
    %376 = vector.load %arg1[%c45, %c0_125] : memref<384x32xf32, #tpu.memory_space<vmem>>, vector<1x32xf32>
    %cst_126 = arith.constant dense<0.000000e+00> : vector<32xf32>
    %377 = vector.multi_reduction <add>, %374, %cst_126 [1] : vector<32x32xf32> to vector<32xf32>
    %378 = vector.shape_cast %377 : vector<32xf32> to vector<32x1xf32>
    %cst_127 = arith.constant 3.200000e+01 : f32
    %379 = vector.broadcast %cst_127 : f32 to vector<32x1xf32>
    %380 = arith.divf %378, %379 : vector<32x1xf32>
    %381 = arith.mulf %374, %374 : vector<32x32xf32>
    %cst_128 = arith.constant dense<0.000000e+00> : vector<32xf32>
    %382 = vector.multi_reduction <add>, %381, %cst_128 [1] : vector<32x32xf32> to vector<32xf32>
    %383 = vector.shape_cast %382 : vector<32xf32> to vector<32x1xf32>
    %cst_129 = arith.constant 3.200000e+01 : f32
    %384 = vector.broadcast %cst_129 : f32 to vector<32x1xf32>
    %385 = arith.divf %383, %384 : vector<32x1xf32>
    %386 = arith.mulf %380, %380 : vector<32x1xf32>
    %387 = arith.subf %385, %386 : vector<32x1xf32>
    %388 = vector.broadcast %380 : vector<32x1xf32> to vector<32x32xf32>
    %389 = arith.subf %374, %388 : vector<32x32xf32>
    %cst_130 = arith.constant 9.99999974E-6 : f32
    %390 = vector.broadcast %cst_130 : f32 to vector<32x1xf32>
    %391 = arith.addf %387, %390 : vector<32x1xf32>
    %392 = math.rsqrt %391 : vector<32x1xf32>
    %393 = vector.broadcast %392 : vector<32x1xf32> to vector<32x32xf32>
    %394 = arith.mulf %389, %393 : vector<32x32xf32>
    %395 = vector.broadcast %375 : vector<1x32xf32> to vector<32x32xf32>
    %396 = arith.mulf %394, %395 : vector<32x32xf32>
    %397 = vector.broadcast %376 : vector<1x32xf32> to vector<32x32xf32>
    %398 = arith.addf %396, %397 : vector<32x32xf32>
    %c144 = arith.constant 144 : index
    %c0_131 = arith.constant 0 : index
    %399 = vector.load %arg2[%c144, %c0_131] : memref<184x128xf32, #tpu.memory_space<vmem>>, vector<32x128xf32>
    %cst_132 = arith.constant dense<0.000000e+00> : vector<32x128xf32>
    %400 = tpu.matmul %398, %399, %cst_132 {dimension_numbers = #tpu.dot_dimension_numbers<[1], [0], [0], [1], [0, 0, 1, 1], [], []>} : vector<32x32xf32>, vector<32x128xf32>, vector<32x128xf32> -> vector<32x128xf32>
    %c176 = arith.constant 176 : index
    %c0_133 = arith.constant 0 : index
    %401 = vector.load %arg2[%c176, %c0_133] : memref<184x128xf32, #tpu.memory_space<vmem>>, vector<1x128xf32>
    %402 = vector.broadcast %401 : vector<1x128xf32> to vector<32x128xf32>
    %403 = arith.addf %400, %402 : vector<32x128xf32>
    %c0_134 = arith.constant 0 : index
    %c0_135 = arith.constant 0 : index
    %404 = vector.load %arg3[%c0_134, %c0_135] : memref<32x128xf32, #tpu.memory_space<vmem>>, vector<32x128xf32>
    tpu.vector_store %arg3[%c0_134, %c0_135], %403 {strides = array<i32>} : memref<32x128xf32, #tpu.memory_space<vmem>>, vector<32x128xf32>,
    return
  }
}

</mosaic_0001>

<llo_original>
// kernel: cdt_forward.1
$region0: #{cdt_forward.1}
  #allocation0 [shape = 'u32[]', space=smem, size = 0x4, offset = 0x4, fixed_abs, tag = 'smem constant byte address 0x4 - core index']
  #allocation1 [shape = 'u32[144,128]{1,0:T(1,128)}', space=vmem, size = 0x12000, scoped, tag = 'internal scratch']
  %s0 = inlined_call_operand.vmem [shape: f32[16,13], index: 0, kind: input, shape index: {}]
  %s1 = inlined_call_operand.vmem [shape: f32[384,32], index: 1, kind: input, shape index: {}]
  %s2 = inlined_call_operand.vmem [shape: f32[184,128], index: 2, kind: input, shape index: {}]
  %s3 = inlined_call_operand.vmem [shape: f32[32,128], index: 3, kind: output, shape index: {}]
  %s4 = sld [smem:[#allocation0]]
  $region22: #{cdt_forward.1} parent=0
    _
  %s6 = ssub.s32 1, %s4
  %s7 = scalar_select 0, %s6, %s4
  // Predicated region
  $region2: #{cdt_forward.1} parent=0 // pred_check
    _
  $region3: #{cdt_forward.1} parent=0 // pred_check_branch
    %9 = sbr.rel (0) target = $region5
  $region4: #{cdt_forward.1} parent=0 // pred_region
    _
  $region5: #{cdt_forward.1} parent=0 // pred_fallthru
    _
  // Predicated region
  $region6: #{cdt_forward.1} parent=0 // pred_check
    _
  $region7: #{cdt_forward.1} parent=0 // pred_check_branch
    %11 = sbr.rel (0) target = $region9
  $region8: #{cdt_forward.1} parent=0 // pred_region
    _
  $region9: #{cdt_forward.1} parent=0 // pred_fallthru
    _
  // Predicated region
  $region10: #{cdt_forward.1} parent=0 // pred_check
    _
  $region11: #{cdt_forward.1} parent=0 // pred_check_branch
    %13 = sbr.rel (0) target = $region13
  $region12: #{cdt_forward.1} parent=0 // pred_region
    _
  $region13: #{cdt_forward.1} parent=0 // pred_fallthru
    _
  %v14 = vld [vmem:[%s0] sm:$0xff]
  %v15 = vld [vmem:[%s0 + $0x8] sm:$0xff]
  %v16 = vcvt.f32.s32.to.zero.pseudo %v14
  %v17 = vcvt.f32.s32.to.zero.pseudo %v15
  %v18 = vlaneseq
  %v19 = vand.u32 %v18, 127
  %20 = vset.pattern.permute.xlu0 12
  %21 = vperm.xlu0 %20, %v16
  %v22 = vpop.permute.xlu0 %21
  %23 = vset.pattern.permute.xlu0 12
  %24 = vperm.xlu0 %23, %v17
  %v25 = vpop.permute.xlu0 %24
  %vm26 = vcmp.eq.s32.totalorder %v19, %v22
  %vm27 = vcmp.eq.s32.totalorder %v19, %v25
  %v28 = vsel %vm26, 1, 0
  %v29 = vsel %vm27, 1, 0
  %v30 = vcvt.s32.f32 %v28
  %v31 = vcvt.s32.f32 %v29
  %v32 = vld [vmem:[%s1 + $0x10] sm:$0xff]
  %v33 = vld [vmem:[%s1 + $0x18] sm:$0xff]
  %v34 = vld [vmem:[%s1 + $0x20] sm:$0xff]
  %vm35 = vcmask 195584
  %v37 = vsel %vm35, %v30, 0
  %v40 = vsel %vm35, %v31, 0
  %42 = vmatprep.subr.mxu0 0.0
  %43 = vmatpush1.msra.mxu0 0.0
  %44 = vmatprep.subr.mxu0 0.0
  %45 = vmatpush1.msra.mxu0 0.0
  %46 = vmatprep.subr.mxu0 0.0
  %47 = vmatpush1.msra.mxu0 0.0
  %48 = vmatprep.subr.mxu0 0.0
  %49 = vmatpush1.msra.mxu0 0.0
  %50 = vmatprep.subr.mxu0 0.0
  %51 = vmatpush1.msra.mxu0 0.0
  %52 = vmatprep.subr.mxu0 0.0
  %53 = vmatpush1.msra.mxu0 0.0
  %54 = vmatprep.subr.mxu0 0.0
  %55 = vmatpush1.msra.mxu0 0.0
  %56 = vmatprep.subr.mxu0 0.0
  %57 = vmatpush1.msra.mxu0 0.0
  %58 = vmatprep.subr.mxu0 0.0
  %59 = vmatpush1.msra.mxu0 0.0
  %60 = vmatprep.subr.mxu0 0.0
  %61 = vmatpush1.msra.mxu0 0.0
  %62 = vmatprep.subr.mxu0 0.0
  %63 = vmatpush1.msra.mxu0 0.0
  %64 = vmatprep.subr.mxu0 0.0
  %65 = vmatpush1.msra.mxu0 0.0
  %66 = vmatprep.subr.mxu0 0.0
  %67 = vmatpush1.msra.mxu0 0.0
  %68 = vmatprep.subr.mxu0 0.0
  %69 = vmatpush1.msra.mxu0 %v34
  %70 = vmatprep.subr.mxu0 0.0
  %71 = vmatpush1.msra.mxu0 %v33
  %72 = vmatprep.subr.mxu0 0.0
  %73 = vmatpush1.msra.mxu0 %v32
  %74 = vmatprep.subr.mxu0 0.0
  %75 = vmatpush2.msra.mxu0 0.0
  %76 = vmatprep.subr.mxu0 0.0
  %77 = vmatpush2.msra.mxu0 0.0
  %78 = vmatprep.subr.mxu0 0.0
  %79 = vmatpush2.msra.mxu0 0.0
  %80 = vmatprep.subr.mxu0 0.0
  %81 = vmatpush2.msra.mxu0 0.0
  %82 = vmatprep.subr.mxu0 0.0
  %83 = vmatpush2.msra.mxu0 0.0
  %84 = vmatprep.subr.mxu0 0.0
  %85 = vmatpush2.msra.mxu0 0.0
  %86 = vmatprep.subr.mxu0 0.0
  %87 = vmatpush2.msra.mxu0 0.0
  %88 = vmatprep.subr.mxu0 0.0
  %89 = vmatpush2.msra.mxu0 0.0
  %90 = vmatprep.subr.mxu0 0.0
  %91 = vmatpush2.msra.mxu0 0.0
  %92 = vmatprep.subr.mxu0 0.0
  %93 = vmatpush2.msra.mxu0 0.0
  %94 = vmatprep.subr.mxu0 0.0
  %95 = vmatpush2.msra.mxu0 0.0
  %96 = vmatprep.subr.mxu0 0.0
  %97 = vmatpush2.msra.mxu0 0.0
  %98 = vmatprep.subr.mxu0 0.0
  %99 = vmatpush2.msra.mxu0 0.0
  %100 = vmatprep.subr.mxu0 0.0
  %101 = vmatpush2.msra.mxu0 0.0
  %102 = vmatprep.subr.mxu0 0.0
  %103 = vmatpush2.msra.mxu0 0.0
  %104 = vmatprep.subr.mxu0 0.0
  %105 = vmatpush2.msra.mxu0 0.0
  %106 = vmatprep.mubr.f32.mxu0 0.0
  %107 = vmatmul.mubr.f32.gmra.mxu0 %v37
  %v108 = vpop.f32.mrf.mxu0
  %v109 = vadd.f32 0.0, %v108
  %v110 = vpop.f32.mrf.mxu0
  %111 = vmatprep.mubr.f32.mxu0 0.0
  %112 = vmatmul.mubr.f32.gmra.mxu0 %v40
  %v113 = vpop.f32.mrf.mxu0
  %v114 = vadd.f32 0.0, %v113
  %v115 = vpop.f32.mrf.mxu0
  %116 = vdwg.mxu0
  %v117 = vld [vmem:[%s1] sm:$0xff]
  %v118 = vld [vmem:[%s1 + $0x28] sm:$0x1]
  %v119 = vlaneseq
  %v120 = vshrl.u32 %v119, 7
  %v121 = vsub.s32 0, %v120
  %v122 = vrot.slane %v118, %v121
  %vm123 = vcmask 64512
  %v125 = vsel %vm123, %v14, 0
  %v128 = vsel %vm123, %v15, 0
  %130 = vmatprep.subr.mxu0 0.0
  %131 = vmatpush1.msra.mxu0 0.0
  %132 = vmatprep.subr.mxu0 0.0
  %133 = vmatpush1.msra.mxu0 0.0
  %134 = vmatprep.subr.mxu0 0.0
  %135 = vmatpush1.msra.mxu0 0.0
  %136 = vmatprep.subr.mxu0 0.0
  %137 = vmatpush1.msra.mxu0 0.0
  %138 = vmatprep.subr.mxu0 0.0
  %139 = vmatpush1.msra.mxu0 0.0
  %140 = vmatprep.subr.mxu0 0.0
  %141 = vmatpush1.msra.mxu0 0.0
  %142 = vmatprep.subr.mxu0 0.0
  %143 = vmatpush1.msra.mxu0 0.0
  %144 = vmatprep.subr.mxu0 0.0
  %145 = vmatpush1.msra.mxu0 0.0
  %146 = vmatprep.subr.mxu0 0.0
  %147 = vmatpush1.msra.mxu0 0.0
  %148 = vmatprep.subr.mxu0 0.0
  %149 = vmatpush1.msra.mxu0 0.0
  %150 = vmatprep.subr.mxu0 0.0
  %151 = vmatpush1.msra.mxu0 0.0
  %152 = vmatprep.subr.mxu0 0.0
  %153 = vmatpush1.msra.mxu0 0.0
  %154 = vmatprep.subr.mxu0 0.0
  %155 = vmatpush1.msra.mxu0 0.0
  %156 = vmatprep.subr.mxu0 0.0
  %157 = vmatpush1.msra.mxu0 0.0
  %158 = vmatprep.subr.mxu0 0.0
  %159 = vmatpush1.msra.mxu0 0.0
  %160 = vmatprep.subr.mxu0 0.0
  %161 = vmatpush1.msra.mxu0 %v117
  %162 = vmatprep.subr.mxu0 0.0
  %163 = vmatpush2.msra.mxu0 0.0
  %164 = vmatprep.subr.mxu0 0.0
  %165 = vmatpush2.msra.mxu0 0.0
  %166 = vmatprep.subr.mxu0 0.0
  %167 = vmatpush2.msra.mxu0 0.0
  %168 = vmatprep.subr.mxu0 0.0
  %169 = vmatpush2.msra.mxu0 0.0
  %170 = vmatprep.subr.mxu0 0.0
  %171 = vmatpush2.msra.mxu0 0.0
  %172 = vmatprep.subr.mxu0 0.0
  %173 = vmatpush2.msra.mxu0 0.0
  %174 = vmatprep.subr.mxu0 0.0
  %175 = vmatpush2.msra.mxu0 0.0
  %176 = vmatprep.subr.mxu0 0.0
  %177 = vmatpush2.msra.mxu0 0.0
  %178 = vmatprep.subr.mxu0 0.0
  %179 = vmatpush2.msra.mxu0 0.0
  %180 = vmatprep.subr.mxu0 0.0
  %181 = vmatpush2.msra.mxu0 0.0
  %182 = vmatprep.subr.mxu0 0.0
  %183 = vmatpush2.msra.mxu0 0.0
  %184 = vmatprep.subr.mxu0 0.0
  %185 = vmatpush2.msra.mxu0 0.0
  %186 = vmatprep.subr.mxu0 0.0
  %187 = vmatpush2.msra.mxu0 0.0
  %188 = vmatprep.subr.mxu0 0.0
  %189 = vmatpush2.msra.mxu0 0.0
  %190 = vmatprep.subr.mxu0 0.0
  %191 = vmatpush2.msra.mxu0 0.0
  %192 = vmatprep.subr.mxu0 0.0
  %193 = vmatpush2.msra.mxu0 0.0
  %194 = vmatprep.mubr.f32.mxu0 0.0
  %195 = vmatmul.mubr.f32.gmra.mxu0 %v125
  %v196 = vpop.f32.mrf.mxu0
  %v197 = vadd.f32 %v122, %v196
  %v198 = vpop.f32.mrf.mxu0
  %199 = vmatprep.mubr.f32.mxu0 0.0
  %200 = vmatmul.mubr.f32.gmra.mxu0 %v128
  %v201 = vpop.f32.mrf.mxu0
  %v202 = vadd.f32 %v122, %v201
  %v203 = vpop.f32.mrf.mxu0
  %204 = vdwg.mxu0
  %v205 = vadd.f32 %v197, %v109
  %v206 = vadd.f32 %v202, %v114
  %v207 = vld [vmem:[%s1 + $0x8] sm:$0xf]
  %v208 = vld [vmem:[%s1 + $0x29] sm:$0x1]
  %v209 = vlaneseq
  %v210 = vshrl.u32 %v209, 7
  %v211 = vsub.s32 0, %v210
  %v212 = vrot.slane %v208, %v211
  %213 = vrot.lane.b32.xlu0 %v14, 120
  %v214 = vpop.permute.xlu0 %213
  %215 = vrot.lane.b32.xlu0 %v15, 120
  %v216 = vpop.permute.xlu0 %215
  %vm217 = vcmask 31744
  %v218 = vsel %vm217, %v214, 0
  %v220 = vsel %vm217, %v216, 0
  %vm222 = vcmask 1043456
  %v224 = vsel %vm222, %v207, 0
  %226 = vmatprep.subr.mxu0 0.0
  %227 = vmatpush1.msra.mxu0 0.0
  %228 = vmatprep.subr.mxu0 0.0
  %229 = vmatpush1.msra.mxu0 0.0
  %230 = vmatprep.subr.mxu0 0.0
  %231 = vmatpush1.msra.mxu0 0.0
  %232 = vmatprep.subr.mxu0 0.0
  %233 = vmatpush1.msra.mxu0 0.0
  %234 = vmatprep.subr.mxu0 0.0
  %235 = vmatpush1.msra.mxu0 0.0
  %236 = vmatprep.subr.mxu0 0.0
  %237 = vmatpush1.msra.mxu0 0.0
  %238 = vmatprep.subr.mxu0 0.0
  %239 = vmatpush1.msra.mxu0 0.0
  %240 = vmatprep.subr.mxu0 0.0
  %241 = vmatpush1.msra.mxu0 0.0
  %242 = vmatprep.subr.mxu0 0.0
  %243 = vmatpush1.msra.mxu0 0.0
  %244 = vmatprep.subr.mxu0 0.0
  %245 = vmatpush1.msra.mxu0 0.0
  %246 = vmatprep.subr.mxu0 0.0
  %247 = vmatpush1.msra.mxu0 0.0
  %248 = vmatprep.subr.mxu0 0.0
  %249 = vmatpush1.msra.mxu0 0.0
  %250 = vmatprep.subr.mxu0 0.0
  %251 = vmatpush1.msra.mxu0 0.0
  %252 = vmatprep.subr.mxu0 0.0
  %253 = vmatpush1.msra.mxu0 0.0
  %254 = vmatprep.subr.mxu0 0.0
  %255 = vmatpush1.msra.mxu0 0.0
  %256 = vmatprep.subr.mxu0 0.0
  %257 = vmatpush1.msra.mxu0 %v224
  %258 = vmatprep.subr.mxu0 0.0
  %259 = vmatpush2.msra.mxu0 0.0
  %260 = vmatprep.subr.mxu0 0.0
  %261 = vmatpush2.msra.mxu0 0.0
  %262 = vmatprep.subr.mxu0 0.0
  %263 = vmatpush2.msra.mxu0 0.0
  %264 = vmatprep.subr.mxu0 0.0
  %265 = vmatpush2.msra.mxu0 0.0
  %266 = vmatprep.subr.mxu0 0.0
  %267 = vmatpush2.msra.mxu0 0.0
  %268 = vmatprep.subr.mxu0 0.0
  %269 = vmatpush2.msra.mxu0 0.0
  %270 = vmatprep.subr.mxu0 0.0
  %271 = vmatpush2.msra.mxu0 0.0
  %272 = vmatprep.subr.mxu0 0.0
  %273 = vmatpush2.msra.mxu0 0.0
  %274 = vmatprep.subr.mxu0 0.0
  %275 = vmatpush2.msra.mxu0 0.0
  %276 = vmatprep.subr.mxu0 0.0
  %277 = vmatpush2.msra.mxu0 0.0
  %278 = vmatprep.subr.mxu0 0.0
  %279 = vmatpush2.msra.mxu0 0.0
  %280 = vmatprep.subr.mxu0 0.0
  %281 = vmatpush2.msra.mxu0 0.0
  %282 = vmatprep.subr.mxu0 0.0
  %283 = vmatpush2.msra.mxu0 0.0
  %284 = vmatprep.subr.mxu0 0.0
  %285 = vmatpush2.msra.mxu0 0.0
  %286 = vmatprep.subr.mxu0 0.0
  %287 = vmatpush2.msra.mxu0 0.0
  %288 = vmatprep.subr.mxu0 0.0
  %289 = vmatpush2.msra.mxu0 0.0
  %290 = vmatprep.mubr.f32.mxu0 0.0
  %291 = vmatmul.mubr.f32.gmra.mxu0 %v218
  %v292 = vpop.f32.mrf.mxu0
  %v293 = vadd.f32 %v212, %v292
  %v294 = vpop.f32.mrf.mxu0
  %295 = vmatprep.mubr.f32.mxu0 0.0
  %296 = vmatmul.mubr.f32.gmra.mxu0 %v220
  %v297 = vpop.f32.mrf.mxu0
  %v298 = vadd.f32 %v212, %v297
  %v299 = vpop.f32.mrf.mxu0
  %300 = vdwg.mxu0
  %v301 = vadd.f32 %v293, %v109
  %v302 = vadd.f32 %v298, %v114
  %v303 = vld [vmem:[%s1 + $0x2a] sm:$0x1]
  %v304 = vld [vmem:[%s1 + $0x2b] sm:$0x1]
  %vm305 = vcmask 261120
  %v306 = vsel %vm305, %v205, 0.0
  %307 = vadd.xlane.f32.xlu0 %v306
  %v308 = vpop.xlane.xlu0 %307
  %v309 = vsel %vm305, %v206, 0.0
  %310 = vadd.xlane.f32.xlu0 %v309
  %v311 = vpop.xlane.xlu0 %310
  %v312 = vsel %vm305, %v301, 0.0
  %313 = vadd.xlane.f32.xlu0 %v312
  %v314 = vpop.xlane.xlu0 %313
  %v315 = vsel %vm305, %v302, 0.0
  %316 = vadd.xlane.f32.xlu0 %v315
  %v317 = vpop.xlane.xlu0 %316
  %v318 = vrcp.pop 32.0
  %v319 = vmul.f32 %v308, %v318
  %v320 = vmul.f32 %v311, %v318
  %v321 = vmul.f32 %v314, %v318
  %v322 = vmul.f32 %v317, %v318
  %v323 = vmul.f32 %v205, %v205
  %v324 = vmul.f32 %v206, %v206
  %v325 = vmul.f32 %v301, %v301
  %v326 = vmul.f32 %v302, %v302
  %v327 = vsel %vm305, %v323, 0.0
  %328 = vadd.xlane.f32.xlu0 %v327
  %v329 = vpop.xlane.xlu0 %328
  %v330 = vsel %vm305, %v324, 0.0
  %331 = vadd.xlane.f32.xlu0 %v330
  %v332 = vpop.xlane.xlu0 %331
  %v333 = vsel %vm305, %v325, 0.0
  %334 = vadd.xlane.f32.xlu0 %v333
  %v335 = vpop.xlane.xlu0 %334
  %v336 = vsel %vm305, %v326, 0.0
  %337 = vadd.xlane.f32.xlu0 %v336
  %v338 = vpop.xlane.xlu0 %337
  %v339 = vmul.f32 %v329, %v318
  %v340 = vmul.f32 %v332, %v318
  %v341 = vmul.f32 %v335, %v318
  %v342 = vmul.f32 %v338, %v318
  %v343 = vmul.f32 %v319, %v319
  %v344 = vmul.f32 %v320, %v320
  %v345 = vmul.f32 %v321, %v321
  %v346 = vmul.f32 %v322, %v322
  %v347 = vsub.f32 %v339, %v343
  %v348 = vsub.f32 %v340, %v344
  %v349 = vsub.f32 %v341, %v345
  %v350 = vsub.f32 %v342, %v346
  %v351 = vsub.f32 %v205, %v319
  %v352 = vsub.f32 %v206, %v320
  %v353 = vsub.f32 %v301, %v321
  %v354 = vsub.f32 %v302, %v322
  %v355 = vadd.f32 %v347, 1e-05
  %v356 = vadd.f32 %v348, 1e-05
  %v357 = vadd.f32 %v349, 1e-05
  %v358 = vadd.f32 %v350, 1e-05
  %v359 = vrsqrt.pop %v355
  %v360 = vrsqrt.pop %v356
  %v361 = vrsqrt.pop %v357
  %v362 = vrsqrt.pop %v358
  %v363 = vmul.f32 %v351, %v359
  %v364 = vmul.f32 %v352, %v360
  %v365 = vmul.f32 %v353, %v361
  %v366 = vmul.f32 %v354, %v362
  %v367 = vlaneseq
  %v368 = vshrl.u32 %v367, 7
  %v369 = vsub.s32 0, %v368
  %v370 = vrot.slane %v303, %v369
  %v371 = vmul.f32 %v363, %v370
  %v372 = vmul.f32 %v364, %v370
  %v373 = vmul.f32 %v365, %v370
  %v374 = vmul.f32 %v366, %v370
  %v375 = vlaneseq
  %v376 = vshrl.u32 %v375, 7
  %v377 = vsub.s32 0, %v376
  %v378 = vrot.slane %v304, %v377
  %v379 = vadd.f32 %v371, %v378
  %v380 = vadd.f32 %v372, %v378
  %v381 = vadd.f32 %v373, %v378
  %v382 = vadd.f32 %v374, %v378
  %v383 = vlaneseq
  %v384 = vshrl.u32 %v383, 7
  %v385 = vadd.s32 %v384, 8
  %v386 = vadd.s32 %v384, 16
  %v387 = vadd.s32 %v384, 24
  %v388 = vshra.s32 %v384, 4
  %v389 = vshra.s32 %v385, 4
  %v390 = vshra.s32 %v386, 4
  %v391 = vshra.s32 %v387, 4
  %v392 = vand.u32 %v384, 15
  %v393 = vand.u32 %v385, 15
  %v394 = vand.u32 %v386, 15
  %v395 = vand.u32 %v387, 15
  %v396 = vshra.s32 %v392, 3
  %v397 = vshra.s32 %v393, 3
  %v398 = vshra.s32 %v394, 3
  %v399 = vshra.s32 %v395, 3
  %v400 = vand.u32 %v392, 7
  %v401 = vand.u32 %v393, 7
  %v402 = vand.u32 %v394, 7
  %v403 = vand.u32 %v395, 7
  %v404 = vmul.u32 %v400, 2
  %v405 = vmul.u32 %v401, 2
  %v406 = vmul.u32 %v402, 2
  %v407 = vmul.u32 %v403, 2
  %v408 = vadd.s32 %v404, %v388
  %v409 = vadd.s32 %v405, %v389
  %v410 = vadd.s32 %v406, %v390
  %v411 = vadd.s32 %v407, %v391
  %v412 = vshra.s32 %v19, 4
  %v413 = vand.u32 %v19, 15
  %v414 = vshra.s32 %v413, 3
  %v415 = vand.u32 %v413, 7
  %v416 = vmul.u32 %v415, 2
  %v417 = vadd.s32 %v416, %v412
  %vm418 = vcmp.eq.s32.totalorder %v396, %v414
  %vm419 = vcmp.eq.s32.totalorder %v397, %v414
  %vm420 = vcmp.eq.s32.totalorder %v398, %v414
  %vm421 = vcmp.eq.s32.totalorder %v399, %v414
  %vm422 = vcmp.ge.s32.totalorder %v408, %v417
  %vm423 = vcmp.ge.s32.totalorder %v409, %v417
  %vm424 = vcmp.ge.s32.totalorder %v410, %v417
  %vm425 = vcmp.ge.s32.totalorder %v411, %v417
  %vm426 = vmand %vm418, %vm422
  %vm427 = vmand %vm419, %vm423
  %vm428 = vmand %vm420, %vm424
  %vm429 = vmand %vm421, %vm425
  %v430 = vsel %vm426, 0.0, -1e+30
  %v431 = vsel %vm427, 0.0, -1e+30
  %v432 = vsel %vm428, 0.0, -1e+30
  %v433 = vsel %vm429, 0.0, -1e+30
  %v434 = vld [vmem:[%s1 + $0x30] sm:$0x1]
  %v435 = vld [vmem:[%s1 + $0x31] sm:$0x1]
  %v436 = vsel %vm305, %v379, 0.0
  %437 = vadd.xlane.f32.xlu0 %v436
  %v438 = vpop.xlane.xlu0 %437
  %v439 = vsel %vm305, %v380, 0.0
  %440 = vadd.xlane.f32.xlu0 %v439
  %v441 = vpop.xlane.xlu0 %440
  %v442 = vsel %vm305, %v381, 0.0
  %443 = vadd.xlane.f32.xlu0 %v442
  %v444 = vpop.xlane.xlu0 %443
  %v445 = vsel %vm305, %v382, 0.0
  %446 = vadd.xlane.f32.xlu0 %v445
  %v447 = vpop.xlane.xlu0 %446
  %v448 = vmul.f32 %v438, %v318
  %v449 = vmul.f32 %v441, %v318
  %v450 = vmul.f32 %v444, %v318
  %v451 = vmul.f32 %v447, %v318
  %v452 = vmul.f32 %v379, %v379
  %v453 = vmul.f32 %v380, %v380
  %v454 = vmul.f32 %v381, %v381
  %v455 = vmul.f32 %v382, %v382
  %v456 = vsel %vm305, %v452, 0.0
  %457 = vadd.xlane.f32.xlu0 %v456
  %v458 = vpop.xlane.xlu0 %457
  %v459 = vsel %vm305, %v453, 0.0
  %460 = vadd.xlane.f32.xlu0 %v459
  %v461 = vpop.xlane.xlu0 %460
  %v462 = vsel %vm305, %v454, 0.0
  %463 = vadd.xlane.f32.xlu0 %v462
  %v464 = vpop.xlane.xlu0 %463
  %v465 = vsel %vm305, %v455, 0.0
  %466 = vadd.xlane.f32.xlu0 %v465
  %v467 = vpop.xlane.xlu0 %466
  %v468 = vmul.f32 %v458, %v318
  %v469 = vmul.f32 %v461, %v318
  %v470 = vmul.f32 %v464, %v318
  %v471 = vmul.f32 %v467, %v318
  %v472 = vmul.f32 %v448, %v448
  %v473 = vmul.f32 %v449, %v449
  %v474 = vmul.f32 %v450, %v450
  %v475 = vmul.f32 %v451, %v451
  %v476 = vsub.f32 %v468, %v472
  %v477 = vsub.f32 %v469, %v473
  %v478 = vsub.f32 %v470, %v474
  %v479 = vsub.f32 %v471, %v475
  %v480 = vsub.f32 %v379, %v448
  %v481 = vsub.f32 %v380, %v449
  %v482 = vsub.f32 %v381, %v450
  %v483 = vsub.f32 %v382, %v451
  %v484 = vadd.f32 %v476, 1e-05
  %v485 = vadd.f32 %v477, 1e-05
  %v486 = vadd.f32 %v478, 1e-05
  %v487 = vadd.f32 %v479, 1e-05
  %v488 = vrsqrt.pop %v484
  %v489 = vrsqrt.pop %v485
  %v490 = vrsqrt.pop %v486
  %v491 = vrsqrt.pop %v487
  %v492 = vmul.f32 %v480, %v488
  %v493 = vmul.f32 %v481, %v489
  %v494 = vmul.f32 %v482, %v490
  %v495 = vmul.f32 %v483, %v491
  %v496 = vlaneseq
  %v497 = vshrl.u32 %v496, 7
  %v498 = vsub.s32 0, %v497
  %v499 = vrot.slane %v434, %v498
  %v500 = vmul.f32 %v492, %v499
  %v501 = vmul.f32 %v493, %v499
  %v502 = vmul.f32 %v494, %v499
  %v503 = vmul.f32 %v495, %v499
  %v504 = vlaneseq
  %v505 = vshrl.u32 %v504, 7
  %v506 = vsub.s32 0, %v505
  %v507 = vrot.slane %v435, %v506
  %v508 = vadd.f32 %v500, %v507
  %v509 = vadd.f32 %v501, %v507
  %v510 = vadd.f32 %v502, %v507
  %v511 = vadd.f32 %v503, %v507
  %v512 = vld [vmem:[%s2] sm:$0xff]
  %v513 = vld [vmem:[%s2 + $0x8] sm:$0xff]
  %v514 = vld [vmem:[%s2 + $0x10] sm:$0xff]
  %v515 = vld [vmem:[%s2 + $0x18] sm:$0xff]
  %v516 = vld [vmem:[%s2 + $0x40] sm:$0x1]
  %v517 = vlaneseq
  %v518 = vshrl.u32 %v517, 7
  %v519 = vsub.s32 0, %v518
  %v520 = vrot.slane %v516, %v519
  %v522 = vsel %vm305, %v508, 0
  %v525 = vsel %vm305, %v509, 0
  %v528 = vsel %vm305, %v510, 0
  %v531 = vsel %vm305, %v511, 0
  %533 = vmatprep.subr.mxu0 0.0
  %534 = vmatpush1.msra.mxu0 0.0
  %535 = vmatprep.subr.mxu0 0.0
  %536 = vmatpush1.msra.mxu0 0.0
  %537 = vmatprep.subr.mxu0 0.0
  %538 = vmatpush1.msra.mxu0 0.0
  %539 = vmatprep.subr.mxu0 0.0
  %540 = vmatpush1.msra.mxu0 0.0
  %541 = vmatprep.subr.mxu0 0.0
  %542 = vmatpush1.msra.mxu0 0.0
  %543 = vmatprep.subr.mxu0 0.0
  %544 = vmatpush1.msra.mxu0 0.0
  %545 = vmatprep.subr.mxu0 0.0
  %546 = vmatpush1.msra.mxu0 0.0
  %547 = vmatprep.subr.mxu0 0.0
  %548 = vmatpush1.msra.mxu0 0.0
  %549 = vmatprep.subr.mxu0 0.0
  %550 = vmatpush1.msra.mxu0 0.0
  %551 = vmatprep.subr.mxu0 0.0
  %552 = vmatpush1.msra.mxu0 0.0
  %553 = vmatprep.subr.mxu0 0.0
  %554 = vmatpush1.msra.mxu0 0.0
  %555 = vmatprep.subr.mxu0 0.0
  %556 = vmatpush1.msra.mxu0 0.0
  %557 = vmatprep.subr.mxu0 0.0
  %558 = vmatpush1.msra.mxu0 %v515
  %559 = vmatprep.subr.mxu0 0.0
  %560 = vmatpush1.msra.mxu0 %v514
  %561 = vmatprep.subr.mxu0 0.0
  %562 = vmatpush1.msra.mxu0 %v513
  %563 = vmatprep.subr.mxu0 0.0
  %564 = vmatpush1.msra.mxu0 %v512
  %565 = vmatprep.subr.mxu0 0.0
  %566 = vmatpush2.msra.mxu0 0.0
  %567 = vmatprep.subr.mxu0 0.0
  %568 = vmatpush2.msra.mxu0 0.0
  %569 = vmatprep.subr.mxu0 0.0
  %570 = vmatpush2.msra.mxu0 0.0
  %571 = vmatprep.subr.mxu0 0.0
  %572 = vmatpush2.msra.mxu0 0.0
  %573 = vmatprep.subr.mxu0 0.0
  %574 = vmatpush2.msra.mxu0 0.0
  %575 = vmatprep.subr.mxu0 0.0
  %576 = vmatpush2.msra.mxu0 0.0
  %577 = vmatprep.subr.mxu0 0.0
  %578 = vmatpush2.msra.mxu0 0.0
  %579 = vmatprep.subr.mxu0 0.0
  %580 = vmatpush2.msra.mxu0 0.0
  %581 = vmatprep.subr.mxu0 0.0
  %582 = vmatpush2.msra.mxu0 0.0
  %583 = vmatprep.subr.mxu0 0.0
  %584 = vmatpush2.msra.mxu0 0.0
  %585 = vmatprep.subr.mxu0 0.0
  %586 = vmatpush2.msra.mxu0 0.0
  %587 = vmatprep.subr.mxu0 0.0
  %588 = vmatpush2.msra.mxu0 0.0
  %589 = vmatprep.subr.mxu0 0.0
  %590 = vmatpush2.msra.mxu0 0.0
  %591 = vmatprep.subr.mxu0 0.0
  %592 = vmatpush2.msra.mxu0 0.0
  %593 = vmatprep.subr.mxu0 0.0
  %594 = vmatpush2.msra.mxu0 0.0
  %595 = vmatprep.subr.mxu0 0.0
  %596 = vmatpush2.msra.mxu0 0.0
  %597 = vmatprep.mubr.f32.mxu0 0.0
  %598 = vmatmul.mubr.f32.gmra.mxu0 %v522
  %v599 = vpop.f32.mrf.mxu0
  %v600 = vadd.f32 %v520, %v599
  %v601 = vpop.f32.mrf.mxu0
  %602 = vmatprep.mubr.f32.mxu0 0.0
  %603 = vmatmul.mubr.f32.gmra.mxu0 %v525
  %v604 = vpop.f32.mrf.mxu0
  %v605 = vadd.f32 %v520, %v604
  %v606 = vpop.f32.mrf.mxu0
  %607 = vmatprep.mubr.f32.mxu0 0.0
  %608 = vmatmul.mubr.f32.gmra.mxu0 %v528
  %v609 = vpop.f32.mrf.mxu0
  %v610 = vadd.f32 %v520, %v609
  %v611 = vpop.f32.mrf.mxu0
  %612 = vmatprep.mubr.f32.mxu0 0.0
  %613 = vmatmul.mubr.f32.gmra.mxu0 %v531
  %v614 = vpop.f32.mrf.mxu0
  %v615 = vadd.f32 %v520, %v614
  %v616 = vpop.f32.mrf.mxu0
  %617 = vdwg.mxu0
  %622 = vrot.lane.b32.xlu0 %v600, 96
  %v623 = vpop.permute.xlu0 %622
  %624 = vrot.lane.b32.xlu0 %v605, 96
  %v625 = vpop.permute.xlu0 %624
  %626 = vrot.lane.b32.xlu0 %v610, 96
  %v627 = vpop.permute.xlu0 %626
  %628 = vrot.lane.b32.xlu0 %v615, 96
  %v629 = vpop.permute.xlu0 %628
  %vm630 = vcmask 130048
  %v631 = vsel %vm630, %v600, 0
  %v633 = vsel %vm630, %v605, 0
  %v635 = vsel %vm630, %v610, 0
  %v637 = vsel %vm630, %v615, 0
  %v639 = vsel %vm630, %v623, 0
  %v641 = vsel %vm630, %v625, 0
  %v643 = vsel %vm630, %v627, 0
  %v645 = vsel %vm630, %v629, 0
  %647 = vmatprep.subr.mxu0 0.0
  %648 = vmatpush1.xpose.msra.mxu0 0.0
  %649 = vmatprep.subr.mxu0 0.0
  %650 = vmatpush1.xpose.msra.mxu0 0.0
  %651 = vmatprep.subr.mxu0 0.0
  %652 = vmatpush1.xpose.msra.mxu0 0.0
  %653 = vmatprep.subr.mxu0 0.0
  %654 = vmatpush1.xpose.msra.mxu0 0.0
  %655 = vmatprep.subr.mxu0 0.0
  %656 = vmatpush1.xpose.msra.mxu0 0.0
  %657 = vmatprep.subr.mxu0 0.0
  %658 = vmatpush1.xpose.msra.mxu0 0.0
  %659 = vmatprep.subr.mxu0 0.0
  %660 = vmatpush1.xpose.msra.mxu0 0.0
  %661 = vmatprep.subr.mxu0 0.0
  %662 = vmatpush1.xpose.msra.mxu0 0.0
  %663 = vmatprep.subr.mxu0 0.0
  %664 = vmatpush1.xpose.msra.mxu0 0.0
  %665 = vmatprep.subr.mxu0 0.0
  %666 = vmatpush1.xpose.msra.mxu0 0.0
  %667 = vmatprep.subr.mxu0 0.0
  %668 = vmatpush1.xpose.msra.mxu0 0.0
  %669 = vmatprep.subr.mxu0 0.0
  %670 = vmatpush1.xpose.msra.mxu0 0.0
  %671 = vmatprep.subr.mxu0 0.0
  %672 = vmatpush1.xpose.msra.mxu0 %v645
  %673 = vmatprep.subr.mxu0 0.0
  %674 = vmatpush1.xpose.msra.mxu0 %v643
  %675 = vmatprep.subr.mxu0 0.0
  %676 = vmatpush1.xpose.msra.mxu0 %v641
  %677 = vmatprep.subr.mxu0 0.0
  %678 = vmatpush1.xpose.msra.mxu0 %v639
  %679 = vmatprep.subr.mxu0 0.0
  %680 = vmatpush2.xpose.msra.mxu0 0.0
  %681 = vmatprep.subr.mxu0 0.0
  %682 = vmatpush2.xpose.msra.mxu0 0.0
  %683 = vmatprep.subr.mxu0 0.0
  %684 = vmatpush2.xpose.msra.mxu0 0.0
  %685 = vmatprep.subr.mxu0 0.0
  %686 = vmatpush2.xpose.msra.mxu0 0.0
  %687 = vmatprep.subr.mxu0 0.0
  %688 = vmatpush2.xpose.msra.mxu0 0.0
  %689 = vmatprep.subr.mxu0 0.0
  %690 = vmatpush2.xpose.msra.mxu0 0.0
  %691 = vmatprep.subr.mxu0 0.0
  %692 = vmatpush2.xpose.msra.mxu0 0.0
  %693 = vmatprep.subr.mxu0 0.0
  %694 = vmatpush2.xpose.msra.mxu0 0.0
  %695 = vmatprep.subr.mxu0 0.0
  %696 = vmatpush2.xpose.msra.mxu0 0.0
  %697 = vmatprep.subr.mxu0 0.0
  %698 = vmatpush2.xpose.msra.mxu0 0.0
  %699 = vmatprep.subr.mxu0 0.0
  %700 = vmatpush2.xpose.msra.mxu0 0.0
  %701 = vmatprep.subr.mxu0 0.0
  %702 = vmatpush2.xpose.msra.mxu0 0.0
  %703 = vmatprep.subr.mxu0 0.0
  %704 = vmatpush2.xpose.msra.mxu0 0.0
  %705 = vmatprep.subr.mxu0 0.0
  %706 = vmatpush2.xpose.msra.mxu0 0.0
  %707 = vmatprep.subr.mxu0 0.0
  %708 = vmatpush2.xpose.msra.mxu0 0.0
  %709 = vmatprep.subr.mxu0 0.0
  %710 = vmatpush2.xpose.msra.mxu0 0.0
  %711 = vmatprep.mubr.f32.mxu0 0.0
  %712 = vmatmul.mubr.f32.gmra.mxu0 %v631
  %v713 = vpop.f32.mrf.mxu0
  %v714 = vadd.f32 0.0, %v713
  %v715 = vpop.f32.mrf.mxu0
  %716 = vmatprep.mubr.f32.mxu0 0.0
  %717 = vmatmul.mubr.f32.gmra.mxu0 %v633
  %v718 = vpop.f32.mrf.mxu0
  %v719 = vadd.f32 0.0, %v718
  %v720 = vpop.f32.mrf.mxu0
  %721 = vmatprep.mubr.f32.mxu0 0.0
  %722 = vmatmul.mubr.f32.gmra.mxu0 %v635
  %v723 = vpop.f32.mrf.mxu0
  %v724 = vadd.f32 0.0, %v723
  %v725 = vpop.f32.mrf.mxu0
  %726 = vmatprep.mubr.f32.mxu0 0.0
  %727 = vmatmul.mubr.f32.gmra.mxu0 %v637
  %v728 = vpop.f32.mrf.mxu0
  %v729 = vadd.f32 0.0, %v728
  %v730 = vpop.f32.mrf.mxu0
  %731 = vdwg.mxu0
  %v732 = vmul.f32 %v714, 0.25
  %v733 = vmul.f32 %v719, 0.25
  %v734 = vmul.f32 %v724, 0.25
  %v735 = vmul.f32 %v729, 0.25
  %v736 = vadd.f32 %v732, %v430
  %v737 = vadd.f32 %v733, %v431
  %v738 = vadd.f32 %v734, %v432
  %v739 = vadd.f32 %v735, %v433
  %v740 = vsel %vm305, %v736, -inf
  %741 = vmax.xlane.f32.xlu0 %v740
  %v742 = vpop.xlane.xlu0 %741
  %v743 = vsel %vm305, %v737, -inf
  %744 = vmax.xlane.f32.xlu0 %v743
  %v745 = vpop.xlane.xlu0 %744
  %v746 = vsel %vm305, %v738, -inf
  %747 = vmax.xlane.f32.xlu0 %v746
  %v748 = vpop.xlane.xlu0 %747
  %v749 = vsel %vm305, %v739, -inf
  %750 = vmax.xlane.f32.xlu0 %v749
  %v751 = vpop.xlane.xlu0 %750
  %v752 = vsub.f32 %v736, %v742
  %v753 = vsub.f32 %v737, %v745
  %v754 = vsub.f32 %v738, %v748
  %v755 = vsub.f32 %v739, %v751
  %v756 = vmul.f32 %v752, 1.442695
  %v757 = vpow.pop %v756
  %v758 = vmul.f32 %v753, 1.442695
  %v759 = vpow.pop %v758
  %v760 = vmul.f32 %v754, 1.442695
  %v761 = vpow.pop %v760
  %v762 = vmul.f32 %v755, 1.442695
  %v763 = vpow.pop %v762
  %v764 = vsel %vm305, %v757, 0.0
  %765 = vadd.xlane.f32.xlu0 %v764
  %v766 = vpop.xlane.xlu0 %765
  %v767 = vsel %vm305, %v759, 0.0
  %768 = vadd.xlane.f32.xlu0 %v767
  %v769 = vpop.xlane.xlu0 %768
  %v770 = vsel %vm305, %v761, 0.0
  %771 = vadd.xlane.f32.xlu0 %v770
  %v772 = vpop.xlane.xlu0 %771
  %v773 = vsel %vm305, %v763, 0.0
  %774 = vadd.xlane.f32.xlu0 %v773
  %v775 = vpop.xlane.xlu0 %774
  %v776 = vrcp.pop %v766
  %v777 = vrcp.pop %v769
  %v778 = vrcp.pop %v772
  %v779 = vrcp.pop %v775
  %v780 = vmul.f32 %v757, %v776
  %v781 = vmul.f32 %v759, %v777
  %v782 = vmul.f32 %v761, %v778
  %v783 = vmul.f32 %v763, %v779
  %784 = vrot.lane.b32.xlu0 %v600, 64
  %v785 = vpop.permute.xlu0 %784
  %786 = vrot.lane.b32.xlu0 %v605, 64
  %v787 = vpop.permute.xlu0 %786
  %788 = vrot.lane.b32.xlu0 %v610, 64
  %v789 = vpop.permute.xlu0 %788
  %790 = vrot.lane.b32.xlu0 %v615, 64
  %v791 = vpop.permute.xlu0 %790
  %v797 = vsel %vm305, %v780, 0
  %v800 = vsel %vm305, %v781, 0
  %v803 = vsel %vm305, %v782, 0
  %v806 = vsel %vm305, %v783, 0
  %808 = vmatprep.subr.mxu0 0.0
  %809 = vmatpush1.msra.mxu0 0.0
  %810 = vmatprep.subr.mxu0 0.0
  %811 = vmatpush1.msra.mxu0 0.0
  %812 = vmatprep.subr.mxu0 0.0
  %813 = vmatpush1.msra.mxu0 0.0
  %814 = vmatprep.subr.mxu0 0.0
  %815 = vmatpush1.msra.mxu0 0.0
  %816 = vmatprep.subr.mxu0 0.0
  %817 = vmatpush1.msra.mxu0 0.0
  %818 = vmatprep.subr.mxu0 0.0
  %819 = vmatpush1.msra.mxu0 0.0
  %820 = vmatprep.subr.mxu0 0.0
  %821 = vmatpush1.msra.mxu0 0.0
  %822 = vmatprep.subr.mxu0 0.0
  %823 = vmatpush1.msra.mxu0 0.0
  %824 = vmatprep.subr.mxu0 0.0
  %825 = vmatpush1.msra.mxu0 0.0
  %826 = vmatprep.subr.mxu0 0.0
  %827 = vmatpush1.msra.mxu0 0.0
  %828 = vmatprep.subr.mxu0 0.0
  %829 = vmatpush1.msra.mxu0 0.0
  %830 = vmatprep.subr.mxu0 0.0
  %831 = vmatpush1.msra.mxu0 0.0
  %832 = vmatprep.subr.mxu0 0.0
  %833 = vmatpush1.msra.mxu0 %v791
  %834 = vmatprep.subr.mxu0 0.0
  %835 = vmatpush1.msra.mxu0 %v789
  %836 = vmatprep.subr.mxu0 0.0
  %837 = vmatpush1.msra.mxu0 %v787
  %838 = vmatprep.subr.mxu0 0.0
  %839 = vmatpush1.msra.mxu0 %v785
  %840 = vmatprep.subr.mxu0 0.0
  %841 = vmatpush2.msra.mxu0 0.0
  %842 = vmatprep.subr.mxu0 0.0
  %843 = vmatpush2.msra.mxu0 0.0
  %844 = vmatprep.subr.mxu0 0.0
  %845 = vmatpush2.msra.mxu0 0.0
  %846 = vmatprep.subr.mxu0 0.0
  %847 = vmatpush2.msra.mxu0 0.0
  %848 = vmatprep.subr.mxu0 0.0
  %849 = vmatpush2.msra.mxu0 0.0
  %850 = vmatprep.subr.mxu0 0.0
  %851 = vmatpush2.msra.mxu0 0.0
  %852 = vmatprep.subr.mxu0 0.0
  %853 = vmatpush2.msra.mxu0 0.0
  %854 = vmatprep.subr.mxu0 0.0
  %855 = vmatpush2.msra.mxu0 0.0
  %856 = vmatprep.subr.mxu0 0.0
  %857 = vmatpush2.msra.mxu0 0.0
  %858 = vmatprep.subr.mxu0 0.0
  %859 = vmatpush2.msra.mxu0 0.0
  %860 = vmatprep.subr.mxu0 0.0
  %861 = vmatpush2.msra.mxu0 0.0
  %862 = vmatprep.subr.mxu0 0.0
  %863 = vmatpush2.msra.mxu0 0.0
  %864 = vmatprep.subr.mxu0 0.0
  %865 = vmatpush2.msra.mxu0 0.0
  %866 = vmatprep.subr.mxu0 0.0
  %867 = vmatpush2.msra.mxu0 0.0
  %868 = vmatprep.subr.mxu0 0.0
  %869 = vmatpush2.msra.mxu0 0.0
  %870 = vmatprep.subr.mxu0 0.0
  %871 = vmatpush2.msra.mxu0 0.0
  %872 = vmatprep.mubr.f32.mxu0 0.0
  %873 = vmatmul.mubr.f32.gmra.mxu0 %v797
  %v874 = vpop.f32.mrf.mxu0
  %v875 = vadd.f32 0.0, %v874
  %v876 = vpop.f32.mrf.mxu0
  %877 = vmatprep.mubr.f32.mxu0 0.0
  %878 = vmatmul.mubr.f32.gmra.mxu0 %v800
  %v879 = vpop.f32.mrf.mxu0
  %v880 = vadd.f32 0.0, %v879
  %v881 = vpop.f32.mrf.mxu0
  %882 = vmatprep.mubr.f32.mxu0 0.0
  %883 = vmatmul.mubr.f32.gmra.mxu0 %v803
  %v884 = vpop.f32.mrf.mxu0
  %v885 = vadd.f32 0.0, %v884
  %v886 = vpop.f32.mrf.mxu0
  %887 = vmatprep.mubr.f32.mxu0 0.0
  %888 = vmatmul.mubr.f32.gmra.mxu0 %v806
  %v889 = vpop.f32.mrf.mxu0
  %v890 = vadd.f32 0.0, %v889
  %v891 = vpop.f32.mrf.mxu0
  %892 = vdwg.mxu0
  %893 = vrot.lane.b32.xlu0 %v600, 112
  %v894 = vpop.permute.xlu0 %893
  %895 = vrot.lane.b32.xlu0 %v605, 112
  %v896 = vpop.permute.xlu0 %895
  %897 = vrot.lane.b32.xlu0 %v610, 112
  %v898 = vpop.permute.xlu0 %897
  %899 = vrot.lane.b32.xlu0 %v615, 112
  %v900 = vpop.permute.xlu0 %899
  %901 = vrot.lane.b32.xlu0 %v600, 80
  %v902 = vpop.permute.xlu0 %901
  %903 = vrot.lane.b32.xlu0 %v605, 80
  %v904 = vpop.permute.xlu0 %903
  %905 = vrot.lane.b32.xlu0 %v610, 80
  %v906 = vpop.permute.xlu0 %905
  %907 = vrot.lane.b32.xlu0 %v615, 80
  %v908 = vpop.permute.xlu0 %907
  %v909 = vsel %vm630, %v894, 0
  %v911 = vsel %vm630, %v896, 0
  %v913 = vsel %vm630, %v898, 0
  %v915 = vsel %vm630, %v900, 0
  %v917 = vsel %vm630, %v902, 0
  %v919 = vsel %vm630, %v904, 0
  %v921 = vsel %vm630, %v906, 0
  %v923 = vsel %vm630, %v908, 0
  %925 = vmatprep.subr.mxu0 0.0
  %926 = vmatpush1.xpose.msra.mxu0 0.0
  %927 = vmatprep.subr.mxu0 0.0
  %928 = vmatpush1.xpose.msra.mxu0 0.0
  %929 = vmatprep.subr.mxu0 0.0
  %930 = vmatpush1.xpose.msra.mxu0 0.0
  %931 = vmatprep.subr.mxu0 0.0
  %932 = vmatpush1.xpose.msra.mxu0 0.0
  %933 = vmatprep.subr.mxu0 0.0
  %934 = vmatpush1.xpose.msra.mxu0 0.0
  %935 = vmatprep.subr.mxu0 0.0
  %936 = vmatpush1.xpose.msra.mxu0 0.0
  %937 = vmatprep.subr.mxu0 0.0
  %938 = vmatpush1.xpose.msra.mxu0 0.0
  %939 = vmatprep.subr.mxu0 0.0
  %940 = vmatpush1.xpose.msra.mxu0 0.0
  %941 = vmatprep.subr.mxu0 0.0
  %942 = vmatpush1.xpose.msra.mxu0 0.0
  %943 = vmatprep.subr.mxu0 0.0
  %944 = vmatpush1.xpose.msra.mxu0 0.0
  %945 = vmatprep.subr.mxu0 0.0
  %946 = vmatpush1.xpose.msra.mxu0 0.0
  %947 = vmatprep.subr.mxu0 0.0
  %948 = vmatpush1.xpose.msra.mxu0 0.0
  %949 = vmatprep.subr.mxu0 0.0
  %950 = vmatpush1.xpose.msra.mxu0 %v923
  %951 = vmatprep.subr.mxu0 0.0
  %952 = vmatpush1.xpose.msra.mxu0 %v921
  %953 = vmatprep.subr.mxu0 0.0
  %954 = vmatpush1.xpose.msra.mxu0 %v919
  %955 = vmatprep.subr.mxu0 0.0
  %956 = vmatpush1.xpose.msra.mxu0 %v917
  %957 = vmatprep.subr.mxu0 0.0
  %958 = vmatpush2.xpose.msra.mxu0 0.0
  %959 = vmatprep.subr.mxu0 0.0
  %960 = vmatpush2.xpose.msra.mxu0 0.0
  %961 = vmatprep.subr.mxu0 0.0
  %962 = vmatpush2.xpose.msra.mxu0 0.0
  %963 = vmatprep.subr.mxu0 0.0
  %964 = vmatpush2.xpose.msra.mxu0 0.0
  %965 = vmatprep.subr.mxu0 0.0
  %966 = vmatpush2.xpose.msra.mxu0 0.0
  %967 = vmatprep.subr.mxu0 0.0
  %968 = vmatpush2.xpose.msra.mxu0 0.0
  %969 = vmatprep.subr.mxu0 0.0
  %970 = vmatpush2.xpose.msra.mxu0 0.0
  %971 = vmatprep.subr.mxu0 0.0
  %972 = vmatpush2.xpose.msra.mxu0 0.0
  %973 = vmatprep.subr.mxu0 0.0
  %974 = vmatpush2.xpose.msra.mxu0 0.0
  %975 = vmatprep.subr.mxu0 0.0
  %976 = vmatpush2.xpose.msra.mxu0 0.0
  %977 = vmatprep.subr.mxu0 0.0
  %978 = vmatpush2.xpose.msra.mxu0 0.0
  %979 = vmatprep.subr.mxu0 0.0
  %980 = vmatpush2.xpose.msra.mxu0 0.0
  %981 = vmatprep.subr.mxu0 0.0
  %982 = vmatpush2.xpose.msra.mxu0 0.0
  %983 = vmatprep.subr.mxu0 0.0
  %984 = vmatpush2.xpose.msra.mxu0 0.0
  %985 = vmatprep.subr.mxu0 0.0
  %986 = vmatpush2.xpose.msra.mxu0 0.0
  %987 = vmatprep.subr.mxu0 0.0
  %988 = vmatpush2.xpose.msra.mxu0 0.0
  %989 = vmatprep.mubr.f32.mxu0 0.0
  %990 = vmatmul.mubr.f32.gmra.mxu0 %v909
  %v991 = vpop.f32.mrf.mxu0
  %v992 = vadd.f32 0.0, %v991
  %v993 = vpop.f32.mrf.mxu0
  %994 = vmatprep.mubr.f32.mxu0 0.0
  %995 = vmatmul.mubr.f32.gmra.mxu0 %v911
  %v996 = vpop.f32.mrf.mxu0
  %v997 = vadd.f32 0.0, %v996
  %v998 = vpop.f32.mrf.mxu0
  %999 = vmatprep.mubr.f32.mxu0 0.0
  %1000 = vmatmul.mubr.f32.gmra.mxu0 %v913
  %v1001 = vpop.f32.mrf.mxu0
  %v1002 = vadd.f32 0.0, %v1001
  %v1003 = vpop.f32.mrf.mxu0
  %1004 = vmatprep.mubr.f32.mxu0 0.0
  %1005 = vmatmul.mubr.f32.gmra.mxu0 %v915
  %v1006 = vpop.f32.mrf.mxu0
  %v1007 = vadd.f32 0.0, %v1006
  %v1008 = vpop.f32.mrf.mxu0
  %1009 = vdwg.mxu0
  %v1010 = vmul.f32 %v992, 0.25
  %v1011 = vmul.f32 %v997, 0.25
  %v1012 = vmul.f32 %v1002, 0.25
  %v1013 = vmul.f32 %v1007, 0.25
  %v1014 = vadd.f32 %v1010, %v430
  %v1015 = vadd.f32 %v1011, %v431
  %v1016 = vadd.f32 %v1012, %v432
  %v1017 = vadd.f32 %v1013, %v433
  %v1018 = vsel %vm305, %v1014, -inf
  %1019 = vmax.xlane.f32.xlu0 %v1018
  %v1020 = vpop.xlane.xlu0 %1019
  %v1021 = vsel %vm305, %v1015, -inf
  %1022 = vmax.xlane.f32.xlu0 %v1021
  %v1023 = vpop.xlane.xlu0 %1022
  %v1024 = vsel %vm305, %v1016, -inf
  %1025 = vmax.xlane.f32.xlu0 %v1024
  %v1026 = vpop.xlane.xlu0 %1025
  %v1027 = vsel %vm305, %v1017, -inf
  %1028 = vmax.xlane.f32.xlu0 %v1027
  %v1029 = vpop.xlane.xlu0 %1028
  %v1030 = vsub.f32 %v1014, %v1020
  %v1031 = vsub.f32 %v1015, %v1023
  %v1032 = vsub.f32 %v1016, %v1026
  %v1033 = vsub.f32 %v1017, %v1029
  %v1034 = vmul.f32 %v1030, 1.442695
  %v1035 = vpow.pop %v1034
  %v1036 = vmul.f32 %v1031, 1.442695
  %v1037 = vpow.pop %v1036
  %v1038 = vmul.f32 %v1032, 1.442695
  %v1039 = vpow.pop %v1038
  %v1040 = vmul.f32 %v1033, 1.442695
  %v1041 = vpow.pop %v1040
  %v1042 = vsel %vm305, %v1035, 0.0
  %1043 = vadd.xlane.f32.xlu0 %v1042
  %v1044 = vpop.xlane.xlu0 %1043
  %v1045 = vsel %vm305, %v1037, 0.0
  %1046 = vadd.xlane.f32.xlu0 %v1045
  %v1047 = vpop.xlane.xlu0 %1046
  %v1048 = vsel %vm305, %v1039, 0.0
  %1049 = vadd.xlane.f32.xlu0 %v1048
  %v1050 = vpop.xlane.xlu0 %1049
  %v1051 = vsel %vm305, %v1041, 0.0
  %1052 = vadd.xlane.f32.xlu0 %v1051
  %v1053 = vpop.xlane.xlu0 %1052
  %v1054 = vrcp.pop %v1044
  %v1055 = vrcp.pop %v1047
  %v1056 = vrcp.pop %v1050
  %v1057 = vrcp.pop %v1053
  %v1058 = vmul.f32 %v1035, %v1054
  %v1059 = vmul.f32 %v1037, %v1055
  %v1060 = vmul.f32 %v1039, %v1056
  %v1061 = vmul.f32 %v1041, %v1057
  %1062 = vrot.lane.b32.xlu0 %v600, 48
  %v1063 = vpop.permute.xlu0 %1062
  %1064 = vrot.lane.b32.xlu0 %v605, 48
  %v1065 = vpop.permute.xlu0 %1064
  %1066 = vrot.lane.b32.xlu0 %v610, 48
  %v1067 = vpop.permute.xlu0 %1066
  %1068 = vrot.lane.b32.xlu0 %v615, 48
  %v1069 = vpop.permute.xlu0 %1068
  %v1075 = vsel %vm305, %v1058, 0
  %v1078 = vsel %vm305, %v1059, 0
  %v1081 = vsel %vm305, %v1060, 0
  %v1084 = vsel %vm305, %v1061, 0
  %1086 = vmatprep.subr.mxu0 0.0
  %1087 = vmatpush1.msra.mxu0 0.0
  %1088 = vmatprep.subr.mxu0 0.0
  %1089 = vmatpush1.msra.mxu0 0.0
  %1090 = vmatprep.subr.mxu0 0.0
  %1091 = vmatpush1.msra.mxu0 0.0
  %1092 = vmatprep.subr.mxu0 0.0
  %1093 = vmatpush1.msra.mxu0 0.0
  %1094 = vmatprep.subr.mxu0 0.0
  %1095 = vmatpush1.msra.mxu0 0.0
  %1096 = vmatprep.subr.mxu0 0.0
  %1097 = vmatpush1.msra.mxu0 0.0
  %1098 = vmatprep.subr.mxu0 0.0
  %1099 = vmatpush1.msra.mxu0 0.0
  %1100 = vmatprep.subr.mxu0 0.0
  %1101 = vmatpush1.msra.mxu0 0.0
  %1102 = vmatprep.subr.mxu0 0.0
  %1103 = vmatpush1.msra.mxu0 0.0
  %1104 = vmatprep.subr.mxu0 0.0
  %1105 = vmatpush1.msra.mxu0 0.0
  %1106 = vmatprep.subr.mxu0 0.0
  %1107 = vmatpush1.msra.mxu0 0.0
  %1108 = vmatprep.subr.mxu0 0.0
  %1109 = vmatpush1.msra.mxu0 0.0
  %1110 = vmatprep.subr.mxu0 0.0
  %1111 = vmatpush1.msra.mxu0 %v1069
  %1112 = vmatprep.subr.mxu0 0.0
  %1113 = vmatpush1.msra.mxu0 %v1067
  %1114 = vmatprep.subr.mxu0 0.0
  %1115 = vmatpush1.msra.mxu0 %v1065
  %1116 = vmatprep.subr.mxu0 0.0
  %1117 = vmatpush1.msra.mxu0 %v1063
  %1118 = vmatprep.subr.mxu0 0.0
  %1119 = vmatpush2.msra.mxu0 0.0
  %1120 = vmatprep.subr.mxu0 0.0
  %1121 = vmatpush2.msra.mxu0 0.0
  %1122 = vmatprep.subr.mxu0 0.0
  %1123 = vmatpush2.msra.mxu0 0.0
  %1124 = vmatprep.subr.mxu0 0.0
  %1125 = vmatpush2.msra.mxu0 0.0
  %1126 = vmatprep.subr.mxu0 0.0
  %1127 = vmatpush2.msra.mxu0 0.0
  %1128 = vmatprep.subr.mxu0 0.0
  %1129 = vmatpush2.msra.mxu0 0.0
  %1130 = vmatprep.subr.mxu0 0.0
  %1131 = vmatpush2.msra.mxu0 0.0
  %1132 = vmatprep.subr.mxu0 0.0
  %1133 = vmatpush2.msra.mxu0 0.0
  %1134 = vmatprep.subr.mxu0 0.0
  %1135 = vmatpush2.msra.mxu0 0.0
  %1136 = vmatprep.subr.mxu0 0.0
  %1137 = vmatpush2.msra.mxu0 0.0
  %1138 = vmatprep.subr.mxu0 0.0
  %1139 = vmatpush2.msra.mxu0 0.0
  %1140 = vmatprep.subr.mxu0 0.0
  %1141 = vmatpush2.msra.mxu0 0.0
  %1142 = vmatprep.subr.mxu0 0.0
  %1143 = vmatpush2.msra.mxu0 0.0
  %1144 = vmatprep.subr.mxu0 0.0
  %1145 = vmatpush2.msra.mxu0 0.0
  %1146 = vmatprep.subr.mxu0 0.0
  %1147 = vmatpush2.msra.mxu0 0.0
  %1148 = vmatprep.subr.mxu0 0.0
  %1149 = vmatpush2.msra.mxu0 0.0
  %1150 = vmatprep.mubr.f32.mxu0 0.0
  %1151 = vmatmul.mubr.f32.gmra.mxu0 %v1075
  %v1152 = vpop.f32.mrf.mxu0
  %v1153 = vadd.f32 0.0, %v1152
  %v1154 = vpop.f32.mrf.mxu0
  %1155 = vmatprep.mubr.f32.mxu0 0.0
  %1156 = vmatmul.mubr.f32.gmra.mxu0 %v1078
  %v1157 = vpop.f32.mrf.mxu0
  %v1158 = vadd.f32 0.0, %v1157
  %v1159 = vpop.f32.mrf.mxu0
  %1160 = vmatprep.mubr.f32.mxu0 0.0
  %1161 = vmatmul.mubr.f32.gmra.mxu0 %v1081
  %v1162 = vpop.f32.mrf.mxu0
  %v1163 = vadd.f32 0.0, %v1162
  %v1164 = vpop.f32.mrf.mxu0
  %1165 = vmatprep.mubr.f32.mxu0 0.0
  %1166 = vmatmul.mubr.f32.gmra.mxu0 %v1084
  %v1167 = vpop.f32.mrf.mxu0
  %v1168 = vadd.f32 0.0, %v1167
  %v1169 = vpop.f32.mrf.mxu0
  %1170 = vdwg.mxu0
  %1175 = vrot.lane.b32.xlu0 %v1153, 16
  %v1176 = vpop.permute.xlu0 %1175
  %1177 = vrot.lane.b32.xlu0 %v1158, 16
  %v1178 = vpop.permute.xlu0 %1177
  %1179 = vrot.lane.b32.xlu0 %v1163, 16
  %v1180 = vpop.permute.xlu0 %1179
  %1181 = vrot.lane.b32.xlu0 %v1168, 16
  %v1182 = vpop.permute.xlu0 %1181
  %v1187 = vsel %vm630, %v875, %v1176
  %v1188 = vsel %vm630, %v880, %v1178
  %v1189 = vsel %vm630, %v885, %v1180
  %v1190 = vsel %vm630, %v890, %v1182
  %v1191 = vld [vmem:[%s1 + $0x38] sm:$0xff]
  %v1192 = vld [vmem:[%s1 + $0x40] sm:$0xff]
  %v1193 = vld [vmem:[%s1 + $0x48] sm:$0xff]
  %v1194 = vld [vmem:[%s1 + $0x50] sm:$0xff]
  %v1196 = vsel %vm305, %v1187, 0
  %v1199 = vsel %vm305, %v1188, 0
  %v1202 = vsel %vm305, %v1189, 0
  %v1205 = vsel %vm305, %v1190, 0
  %1207 = vmatprep.subr.mxu0 0.0
  %1208 = vmatpush1.msra.mxu0 0.0
  %1209 = vmatprep.subr.mxu0 0.0
  %1210 = vmatpush1.msra.mxu0 0.0
  %1211 = vmatprep.subr.mxu0 0.0
  %1212 = vmatpush1.msra.mxu0 0.0
  %1213 = vmatprep.subr.mxu0 0.0
  %1214 = vmatpush1.msra.mxu0 0.0
  %1215 = vmatprep.subr.mxu0 0.0
  %1216 = vmatpush1.msra.mxu0 0.0
  %1217 = vmatprep.subr.mxu0 0.0
  %1218 = vmatpush1.msra.mxu0 0.0
  %1219 = vmatprep.subr.mxu0 0.0
  %1220 = vmatpush1.msra.mxu0 0.0
  %1221 = vmatprep.subr.mxu0 0.0
  %1222 = vmatpush1.msra.mxu0 0.0
  %1223 = vmatprep.subr.mxu0 0.0
  %1224 = vmatpush1.msra.mxu0 0.0
  %1225 = vmatprep.subr.mxu0 0.0
  %1226 = vmatpush1.msra.mxu0 0.0
  %1227 = vmatprep.subr.mxu0 0.0
  %1228 = vmatpush1.msra.mxu0 0.0
  %1229 = vmatprep.subr.mxu0 0.0
  %1230 = vmatpush1.msra.mxu0 0.0
  %1231 = vmatprep.subr.mxu0 0.0
  %1232 = vmatpush1.msra.mxu0 %v1194
  %1233 = vmatprep.subr.mxu0 0.0
  %1234 = vmatpush1.msra.mxu0 %v1193
  %1235 = vmatprep.subr.mxu0 0.0
  %1236 = vmatpush1.msra.mxu0 %v1192
  %1237 = vmatprep.subr.mxu0 0.0
  %1238 = vmatpush1.msra.mxu0 %v1191
  %1239 = vmatprep.subr.mxu0 0.0
  %1240 = vmatpush2.msra.mxu0 0.0
  %1241 = vmatprep.subr.mxu0 0.0
  %1242 = vmatpush2.msra.mxu0 0.0
  %1243 = vmatprep.subr.mxu0 0.0
  %1244 = vmatpush2.msra.mxu0 0.0
  %1245 = vmatprep.subr.mxu0 0.0
  %1246 = vmatpush2.msra.mxu0 0.0
  %1247 = vmatprep.subr.mxu0 0.0
  %1248 = vmatpush2.msra.mxu0 0.0
  %1249 = vmatprep.subr.mxu0 0.0
  %1250 = vmatpush2.msra.mxu0 0.0
  %1251 = vmatprep.subr.mxu0 0.0
  %1252 = vmatpush2.msra.mxu0 0.0
  %1253 = vmatprep.subr.mxu0 0.0
  %1254 = vmatpush2.msra.mxu0 0.0
  %1255 = vmatprep.subr.mxu0 0.0
  %1256 = vmatpush2.msra.mxu0 0.0
  %1257 = vmatprep.subr.mxu0 0.0
  %1258 = vmatpush2.msra.mxu0 0.0
  %1259 = vmatprep.subr.mxu0 0.0
  %1260 = vmatpush2.msra.mxu0 0.0
  %1261 = vmatprep.subr.mxu0 0.0
  %1262 = vmatpush2.msra.mxu0 0.0
  %1263 = vmatprep.subr.mxu0 0.0
  %1264 = vmatpush2.msra.mxu0 0.0
  %1265 = vmatprep.subr.mxu0 0.0
  %1266 = vmatpush2.msra.mxu0 0.0
  %1267 = vmatprep.subr.mxu0 0.0
  %1268 = vmatpush2.msra.mxu0 0.0
  %1269 = vmatprep.subr.mxu0 0.0
  %1270 = vmatpush2.msra.mxu0 0.0
  %1271 = vmatprep.mubr.f32.mxu0 0.0
  %1272 = vmatmul.mubr.f32.gmra.mxu0 %v1196
  %v1273 = vpop.f32.mrf.mxu0
  %v1274 = vadd.f32 0.0, %v1273
  %v1275 = vpop.f32.mrf.mxu0
  %1276 = vmatprep.mubr.f32.mxu0 0.0
  %1277 = vmatmul.mubr.f32.gmra.mxu0 %v1199
  %v1278 = vpop.f32.mrf.mxu0
  %v1279 = vadd.f32 0.0, %v1278
  %v1280 = vpop.f32.mrf.mxu0
  %1281 = vmatprep.mubr.f32.mxu0 0.0
  %1282 = vmatmul.mubr.f32.gmra.mxu0 %v1202
  %v1283 = vpop.f32.mrf.mxu0
  %v1284 = vadd.f32 0.0, %v1283
  %v1285 = vpop.f32.mrf.mxu0
  %1286 = vmatprep.mubr.f32.mxu0 0.0
  %1287 = vmatmul.mubr.f32.gmra.mxu0 %v1205
  %v1288 = vpop.f32.mrf.mxu0
  %v1289 = vadd.f32 0.0, %v1288
  %v1290 = vpop.f32.mrf.mxu0
  %1291 = vdwg.mxu0
  %v1292 = vadd.f32 %v379, %v1274
  %v1293 = vadd.f32 %v380, %v1279
  %v1294 = vadd.f32 %v381, %v1284
  %v1295 = vadd.f32 %v382, %v1289
  %v1296 = vld [vmem:[%s1 + $0x34] sm:$0x1]
  %v1297 = vlaneseq
  %v1298 = vshrl.u32 %v1297, 7
  %v1299 = vsub.s32 0, %v1298
  %v1300 = vrot.slane %v1296, %v1299
  %v1301 = vadd.f32 %v1292, %v1300
  %v1302 = vadd.f32 %v1293, %v1300
  %v1303 = vadd.f32 %v1294, %v1300
  %v1304 = vadd.f32 %v1295, %v1300
  %v1305 = vld [vmem:[%s1 + $0x32] sm:$0x1]
  %v1306 = vld [vmem:[%s1 + $0x33] sm:$0x1]
  %v1307 = vsel %vm305, %v1301, 0.0
  %1308 = vadd.xlane.f32.xlu0 %v1307
  %v1309 = vpop.xlane.xlu0 %1308
  %v1310 = vsel %vm305, %v1302, 0.0
  %1311 = vadd.xlane.f32.xlu0 %v1310
  %v1312 = vpop.xlane.xlu0 %1311
  %v1313 = vsel %vm305, %v1303, 0.0
  %1314 = vadd.xlane.f32.xlu0 %v1313
  %v1315 = vpop.xlane.xlu0 %1314
  %v1316 = vsel %vm305, %v1304, 0.0
  %1317 = vadd.xlane.f32.xlu0 %v1316
  %v1318 = vpop.xlane.xlu0 %1317
  %v1319 = vmul.f32 %v1309, %v318
  %v1320 = vmul.f32 %v1312, %v318
  %v1321 = vmul.f32 %v1315, %v318
  %v1322 = vmul.f32 %v1318, %v318
  %v1323 = vmul.f32 %v1301, %v1301
  %v1324 = vmul.f32 %v1302, %v1302
  %v1325 = vmul.f32 %v1303, %v1303
  %v1326 = vmul.f32 %v1304, %v1304
  %v1327 = vsel %vm305, %v1323, 0.0
  %1328 = vadd.xlane.f32.xlu0 %v1327
  %v1329 = vpop.xlane.xlu0 %1328
  %v1330 = vsel %vm305, %v1324, 0.0
  %1331 = vadd.xlane.f32.xlu0 %v1330
  %v1332 = vpop.xlane.xlu0 %1331
  %v1333 = vsel %vm305, %v1325, 0.0
  %1334 = vadd.xlane.f32.xlu0 %v1333
  %v1335 = vpop.xlane.xlu0 %1334
  %v1336 = vsel %vm305, %v1326, 0.0
  %1337 = vadd.xlane.f32.xlu0 %v1336
  %v1338 = vpop.xlane.xlu0 %1337
  %v1339 = vmul.f32 %v1329, %v318
  %v1340 = vmul.f32 %v1332, %v318
  %v1341 = vmul.f32 %v1335, %v318
  %v1342 = vmul.f32 %v1338, %v318
  %v1343 = vmul.f32 %v1319, %v1319
  %v1344 = vmul.f32 %v1320, %v1320
  %v1345 = vmul.f32 %v1321, %v1321
  %v1346 = vmul.f32 %v1322, %v1322
  %v1347 = vsub.f32 %v1339, %v1343
  %v1348 = vsub.f32 %v1340, %v1344
  %v1349 = vsub.f32 %v1341, %v1345
  %v1350 = vsub.f32 %v1342, %v1346
  %v1351 = vsub.f32 %v1301, %v1319
  %v1352 = vsub.f32 %v1302, %v1320
  %v1353 = vsub.f32 %v1303, %v1321
  %v1354 = vsub.f32 %v1304, %v1322
  %v1355 = vadd.f32 %v1347, 1e-05
  %v1356 = vadd.f32 %v1348, 1e-05
  %v1357 = vadd.f32 %v1349, 1e-05
  %v1358 = vadd.f32 %v1350, 1e-05
  %v1359 = vrsqrt.pop %v1355
  %v1360 = vrsqrt.pop %v1356
  %v1361 = vrsqrt.pop %v1357
  %v1362 = vrsqrt.pop %v1358
  %v1363 = vmul.f32 %v1351, %v1359
  %v1364 = vmul.f32 %v1352, %v1360
  %v1365 = vmul.f32 %v1353, %v1361
  %v1366 = vmul.f32 %v1354, %v1362
  %v1367 = vlaneseq
  %v1368 = vshrl.u32 %v1367, 7
  %v1369 = vsub.s32 0, %v1368
  %v1370 = vrot.slane %v1305, %v1369
  %v1371 = vmul.f32 %v1363, %v1370
  %v1372 = vmul.f32 %v1364, %v1370
  %v1373 = vmul.f32 %v1365, %v1370
  %v1374 = vmul.f32 %v1366, %v1370
  %v1375 = vlaneseq
  %v1376 = vshrl.u32 %v1375, 7
  %v1377 = vsub.s32 0, %v1376
  %v1378 = vrot.slane %v1306, %v1377
  %v1379 = vadd.f32 %v1371, %v1378
  %v1380 = vadd.f32 %v1372, %v1378
  %v1381 = vadd.f32 %v1373, %v1378
  %v1382 = vadd.f32 %v1374, %v1378
  %v1383 = vld [vmem:[%s2 + $0x20] sm:$0xff]
  %v1384 = vld [vmem:[%s2 + $0x28] sm:$0xff]
  %v1385 = vld [vmem:[%s2 + $0x30] sm:$0xff]
  %v1386 = vld [vmem:[%s2 + $0x38] sm:$0xff]
  %v1387 = vld [vmem:[%s2 + $0x41] sm:$0x1]
  %v1388 = vlaneseq
  %v1389 = vshrl.u32 %v1388, 7
  %v1390 = vsub.s32 0, %v1389
  %v1391 = vrot.slane %v1387, %v1390
  %v1393 = vsel %vm305, %v1379, 0
  %v1396 = vsel %vm305, %v1380, 0
  %v1399 = vsel %vm305, %v1381, 0
  %v1402 = vsel %vm305, %v1382, 0
  %1404 = vmatprep.subr.mxu0 0.0
  %1405 = vmatpush1.msra.mxu0 0.0
  %1406 = vmatprep.subr.mxu0 0.0
  %1407 = vmatpush1.msra.mxu0 0.0
  %1408 = vmatprep.subr.mxu0 0.0
  %1409 = vmatpush1.msra.mxu0 0.0
  %1410 = vmatprep.subr.mxu0 0.0
  %1411 = vmatpush1.msra.mxu0 0.0
  %1412 = vmatprep.subr.mxu0 0.0
  %1413 = vmatpush1.msra.mxu0 0.0
  %1414 = vmatprep.subr.mxu0 0.0
  %1415 = vmatpush1.msra.mxu0 0.0
  %1416 = vmatprep.subr.mxu0 0.0
  %1417 = vmatpush1.msra.mxu0 0.0
  %1418 = vmatprep.subr.mxu0 0.0
  %1419 = vmatpush1.msra.mxu0 0.0
  %1420 = vmatprep.subr.mxu0 0.0
  %1421 = vmatpush1.msra.mxu0 0.0
  %1422 = vmatprep.subr.mxu0 0.0
  %1423 = vmatpush1.msra.mxu0 0.0
  %1424 = vmatprep.subr.mxu0 0.0
  %1425 = vmatpush1.msra.mxu0 0.0
  %1426 = vmatprep.subr.mxu0 0.0
  %1427 = vmatpush1.msra.mxu0 0.0
  %1428 = vmatprep.subr.mxu0 0.0
  %1429 = vmatpush1.msra.mxu0 %v1386
  %1430 = vmatprep.subr.mxu0 0.0
  %1431 = vmatpush1.msra.mxu0 %v1385
  %1432 = vmatprep.subr.mxu0 0.0
  %1433 = vmatpush1.msra.mxu0 %v1384
  %1434 = vmatprep.subr.mxu0 0.0
  %1435 = vmatpush1.msra.mxu0 %v1383
  %1436 = vmatprep.subr.mxu0 0.0
  %1437 = vmatpush2.msra.mxu0 0.0
  %1438 = vmatprep.subr.mxu0 0.0
  %1439 = vmatpush2.msra.mxu0 0.0
  %1440 = vmatprep.subr.mxu0 0.0
  %1441 = vmatpush2.msra.mxu0 0.0
  %1442 = vmatprep.subr.mxu0 0.0
  %1443 = vmatpush2.msra.mxu0 0.0
  %1444 = vmatprep.subr.mxu0 0.0
  %1445 = vmatpush2.msra.mxu0 0.0
  %1446 = vmatprep.subr.mxu0 0.0
  %1447 = vmatpush2.msra.mxu0 0.0
  %1448 = vmatprep.subr.mxu0 0.0
  %1449 = vmatpush2.msra.mxu0 0.0
  %1450 = vmatprep.subr.mxu0 0.0
  %1451 = vmatpush2.msra.mxu0 0.0
  %1452 = vmatprep.subr.mxu0 0.0
  %1453 = vmatpush2.msra.mxu0 0.0
  %1454 = vmatprep.subr.mxu0 0.0
  %1455 = vmatpush2.msra.mxu0 0.0
  %1456 = vmatprep.subr.mxu0 0.0
  %1457 = vmatpush2.msra.mxu0 0.0
  %1458 = vmatprep.subr.mxu0 0.0
  %1459 = vmatpush2.msra.mxu0 0.0
  %1460 = vmatprep.subr.mxu0 0.0
  %1461 = vmatpush2.msra.mxu0 0.0
  %1462 = vmatprep.subr.mxu0 0.0
  %1463 = vmatpush2.msra.mxu0 0.0
  %1464 = vmatprep.subr.mxu0 0.0
  %1465 = vmatpush2.msra.mxu0 0.0
  %1466 = vmatprep.subr.mxu0 0.0
  %1467 = vmatpush2.msra.mxu0 0.0
  %1468 = vmatprep.mubr.f32.mxu0 0.0
  %1469 = vmatmul.mubr.f32.gmra.mxu0 %v1393
  %v1470 = vpop.f32.mrf.mxu0
  %v1471 = vadd.f32 %v1391, %v1470
  %v1472 = vpop.f32.mrf.mxu0
  %1473 = vmatprep.mubr.f32.mxu0 0.0
  %1474 = vmatmul.mubr.f32.gmra.mxu0 %v1396
  %v1475 = vpop.f32.mrf.mxu0
  %v1476 = vadd.f32 %v1391, %v1475
  %v1477 = vpop.f32.mrf.mxu0
  %1478 = vmatprep.mubr.f32.mxu0 0.0
  %1479 = vmatmul.mubr.f32.gmra.mxu0 %v1399
  %v1480 = vpop.f32.mrf.mxu0
  %v1481 = vadd.f32 %v1391, %v1480
  %v1482 = vpop.f32.mrf.mxu0
  %1483 = vmatprep.mubr.f32.mxu0 0.0
  %1484 = vmatmul.mubr.f32.gmra.mxu0 %v1402
  %v1485 = vpop.f32.mrf.mxu0
  %v1486 = vadd.f32 %v1391, %v1485
  %v1487 = vpop.f32.mrf.mxu0
  %1488 = vdwg.mxu0
  %v1489 = vmul.f32 %v1471, 0.5
  %v1490 = vmul.f32 %v1476, 0.5
  %v1491 = vmul.f32 %v1481, 0.5
  %v1492 = vmul.f32 %v1486, 0.5
  %v1493 = vmul.f32 %v1471, 0.70710677
  %v1494 = vmul.f32 %v1476, 0.70710677
  %v1495 = vmul.f32 %v1481, 0.70710677
  %v1496 = vmul.f32 %v1486, 0.70710677
  %v1497 = vand.u32 2147483647, %v1493
  %v1498 = vand.u32 2147483647, %v1494
  %v1499 = vand.u32 2147483647, %v1495
  %v1500 = vand.u32 2147483647, %v1496
  %v1501 = vmul.f32 %v1497, 0.3275911
  %v1502 = vmul.f32 %v1498, 0.3275911
  %v1503 = vmul.f32 %v1499, 0.3275911
  %v1504 = vmul.f32 %v1500, 0.3275911
  %v1505 = vadd.f32 %v1501, 1.0
  %v1506 = vadd.f32 %v1502, 1.0
  %v1507 = vadd.f32 %v1503, 1.0
  %v1508 = vadd.f32 %v1504, 1.0
  %v1509 = vrcp.pop %v1505
  %v1510 = vrcp.pop %v1506
  %v1511 = vrcp.pop %v1507
  %v1512 = vrcp.pop %v1508
  %v1513 = vmul.f32 %v1509, 1.0614054
  %v1514 = vmul.f32 %v1510, 1.0614054
  %v1515 = vmul.f32 %v1511, 1.0614054
  %v1516 = vmul.f32 %v1512, 1.0614054
  %v1517 = vadd.f32 %v1513, -1.4531521
  %v1518 = vadd.f32 %v1514, -1.4531521
  %v1519 = vadd.f32 %v1515, -1.4531521
  %v1520 = vadd.f32 %v1516, -1.4531521
  %v1521 = vmul.f32 %v1517, %v1509
  %v1522 = vmul.f32 %v1518, %v1510
  %v1523 = vmul.f32 %v1519, %v1511
  %v1524 = vmul.f32 %v1520, %v1512
  %v1525 = vadd.f32 %v1521, 1.4214138
  %v1526 = vadd.f32 %v1522, 1.4214138
  %v1527 = vadd.f32 %v1523, 1.4214138
  %v1528 = vadd.f32 %v1524, 1.4214138
  %v1529 = vmul.f32 %v1525, %v1509
  %v1530 = vmul.f32 %v1526, %v1510
  %v1531 = vmul.f32 %v1527, %v1511
  %v1532 = vmul.f32 %v1528, %v1512
  %v1533 = vadd.f32 %v1529, -0.28449672
  %v1534 = vadd.f32 %v1530, -0.28449672
  %v1535 = vadd.f32 %v1531, -0.28449672
  %v1536 = vadd.f32 %v1532, -0.28449672
  %v1537 = vmul.f32 %v1533, %v1509
  %v1538 = vmul.f32 %v1534, %v1510
  %v1539 = vmul.f32 %v1535, %v1511
  %v1540 = vmul.f32 %v1536, %v1512
  %v1541 = vadd.f32 %v1537, 0.2548296
  %v1542 = vadd.f32 %v1538, 0.2548296
  %v1543 = vadd.f32 %v1539, 0.2548296
  %v1544 = vadd.f32 %v1540, 0.2548296
  %v1545 = vmul.f32 %v1541, %v1509
  %v1546 = vmul.f32 %v1542, %v1510
  %v1547 = vmul.f32 %v1543, %v1511
  %v1548 = vmul.f32 %v1544, %v1512
  %v1549 = vsub.f32 0.0, %v1497
  %v1550 = vsub.f32 0.0, %v1498
  %v1551 = vsub.f32 0.0, %v1499
  %v1552 = vsub.f32 0.0, %v1500
  %v1553 = vmul.f32 %v1549, %v1497
  %v1554 = vmul.f32 %v1550, %v1498
  %v1555 = vmul.f32 %v1551, %v1499
  %v1556 = vmul.f32 %v1552, %v1500
  %v1557 = vmul.f32 %v1553, 1.442695
  %v1558 = vpow.pop %v1557
  %v1559 = vmul.f32 %v1554, 1.442695
  %v1560 = vpow.pop %v1559
  %v1561 = vmul.f32 %v1555, 1.442695
  %v1562 = vpow.pop %v1561
  %v1563 = vmul.f32 %v1556, 1.442695
  %v1564 = vpow.pop %v1563
  %v1565 = vmul.f32 %v1545, %v1558
  %v1566 = vmul.f32 %v1546, %v1560
  %v1567 = vmul.f32 %v1547, %v1562
  %v1568 = vmul.f32 %v1548, %v1564
  %v1569 = vsub.f32 1.0, %v1565
  %v1570 = vsub.f32 1.0, %v1566
  %v1571 = vsub.f32 1.0, %v1567
  %v1572 = vsub.f32 1.0, %v1568
  %vm1573 = vcmp.ge.f32.partialorder %v1493, 0.0
  %vm1574 = vcmp.ge.f32.partialorder %v1494, 0.0
  %vm1575 = vcmp.ge.f32.partialorder %v1495, 0.0
  %vm1576 = vcmp.ge.f32.partialorder %v1496, 0.0
  %v1577 = vsub.f32 0.0, %v1569
  %v1578 = vsub.f32 0.0, %v1570
  %v1579 = vsub.f32 0.0, %v1571
  %v1580 = vsub.f32 0.0, %v1572
  %v1581 = vsel %vm1573, %v1569, %v1577
  %v1582 = vsel %vm1574, %v1570, %v1578
  %v1583 = vsel %vm1575, %v1571, %v1579
  %v1584 = vsel %vm1576, %v1572, %v1580
  %v1585 = vadd.f32 %v1581, 1.0
  %v1586 = vadd.f32 %v1582, 1.0
  %v1587 = vadd.f32 %v1583, 1.0
  %v1588 = vadd.f32 %v1584, 1.0
  %v1589 = vmul.f32 %v1489, %v1585
  %v1590 = vmul.f32 %v1490, %v1586
  %v1591 = vmul.f32 %v1491, %v1587
  %v1592 = vmul.f32 %v1492, %v1588
  %v1593 = vld [vmem:[%s1 + $0x58] sm:$0xff]
  %v1594 = vld [vmem:[%s1 + $0x60] sm:$0xff]
  %v1595 = vld [vmem:[%s1 + $0x68] sm:$0xff]
  %v1596 = vld [vmem:[%s1 + $0x70] sm:$0xff]
  %v1597 = vld [vmem:[%s1 + $0x78] sm:$0xff]
  %v1598 = vld [vmem:[%s1 + $0x80] sm:$0xff]
  %v1599 = vld [vmem:[%s1 + $0x88] sm:$0xff]
  %v1600 = vld [vmem:[%s1 + $0x90] sm:$0xff]
  %v1601 = vld [vmem:[%s1 + $0x98] sm:$0xff]
  %v1602 = vld [vmem:[%s1 + $0xa0] sm:$0xff]
  %v1603 = vld [vmem:[%s1 + $0xa8] sm:$0xff]
  %v1604 = vld [vmem:[%s1 + $0xb0] sm:$0xff]
  %v1605 = vld [vmem:[%s1 + $0xb8] sm:$0xff]
  %v1606 = vld [vmem:[%s1 + $0xc0] sm:$0xff]
  %v1607 = vld [vmem:[%s1 + $0xc8] sm:$0xff]
  %v1608 = vld [vmem:[%s1 + $0xd0] sm:$0xff]
  %1609 = vmatprep.subr.mxu0 0.0
  %1610 = vmatpush1.msra.mxu0 %v1608
  %1611 = vmatprep.subr.mxu0 0.0
  %1612 = vmatpush1.msra.mxu0 %v1607
  %1613 = vmatprep.subr.mxu0 0.0
  %1614 = vmatpush1.msra.mxu0 %v1606
  %1615 = vmatprep.subr.mxu0 0.0
  %1616 = vmatpush1.msra.mxu0 %v1605
  %1617 = vmatprep.subr.mxu0 0.0
  %1618 = vmatpush1.msra.mxu0 %v1604
  %1619 = vmatprep.subr.mxu0 0.0
  %1620 = vmatpush1.msra.mxu0 %v1603
  %1621 = vmatprep.subr.mxu0 0.0
  %1622 = vmatpush1.msra.mxu0 %v1602
  %1623 = vmatprep.subr.mxu0 0.0
  %1624 = vmatpush1.msra.mxu0 %v1601
  %1625 = vmatprep.subr.mxu0 0.0
  %1626 = vmatpush1.msra.mxu0 %v1600
  %1627 = vmatprep.subr.mxu0 0.0
  %1628 = vmatpush1.msra.mxu0 %v1599
  %1629 = vmatprep.subr.mxu0 0.0
  %1630 = vmatpush1.msra.mxu0 %v1598
  %1631 = vmatprep.subr.mxu0 0.0
  %1632 = vmatpush1.msra.mxu0 %v1597
  %1633 = vmatprep.subr.mxu0 0.0
  %1634 = vmatpush1.msra.mxu0 %v1596
  %1635 = vmatprep.subr.mxu0 0.0
  %1636 = vmatpush1.msra.mxu0 %v1595
  %1637 = vmatprep.subr.mxu0 0.0
  %1638 = vmatpush1.msra.mxu0 %v1594
  %1639 = vmatprep.subr.mxu0 0.0
  %1640 = vmatpush1.msra.mxu0 %v1593
  %1641 = vmatprep.subr.mxu0 0.0
  %1642 = vmatpush2.msra.mxu0 0.0
  %1643 = vmatprep.subr.mxu0 0.0
  %1644 = vmatpush2.msra.mxu0 0.0
  %1645 = vmatprep.subr.mxu0 0.0
  %1646 = vmatpush2.msra.mxu0 0.0
  %1647 = vmatprep.subr.mxu0 0.0
  %1648 = vmatpush2.msra.mxu0 0.0
  %1649 = vmatprep.subr.mxu0 0.0
  %1650 = vmatpush2.msra.mxu0 0.0
  %1651 = vmatprep.subr.mxu0 0.0
  %1652 = vmatpush2.msra.mxu0 0.0
  %1653 = vmatprep.subr.mxu0 0.0
  %1654 = vmatpush2.msra.mxu0 0.0
  %1655 = vmatprep.subr.mxu0 0.0
  %1656 = vmatpush2.msra.mxu0 0.0
  %1657 = vmatprep.subr.mxu0 0.0
  %1658 = vmatpush2.msra.mxu0 0.0
  %1659 = vmatprep.subr.mxu0 0.0
  %1660 = vmatpush2.msra.mxu0 0.0
  %1661 = vmatprep.subr.mxu0 0.0
  %1662 = vmatpush2.msra.mxu0 0.0
  %1663 = vmatprep.subr.mxu0 0.0
  %1664 = vmatpush2.msra.mxu0 0.0
  %1665 = vmatprep.subr.mxu0 0.0
  %1666 = vmatpush2.msra.mxu0 0.0
  %1667 = vmatprep.subr.mxu0 0.0
  %1668 = vmatpush2.msra.mxu0 0.0
  %1669 = vmatprep.subr.mxu0 0.0
  %1670 = vmatpush2.msra.mxu0 0.0
  %1671 = vmatprep.subr.mxu0 0.0
  %1672 = vmatpush2.msra.mxu0 0.0
  %1673 = vmatprep.mubr.f32.mxu0 0.0
  %1674 = vmatmul.mubr.f32.gmra.mxu0 %v1589
  %v1675 = vpop.f32.mrf.mxu0
  %v1676 = vadd.f32 0.0, %v1675
  %v1677 = vpop.f32.mrf.mxu0
  %1678 = vmatprep.mubr.f32.mxu0 0.0
  %1679 = vmatmul.mubr.f32.gmra.mxu0 %v1590
  %v1680 = vpop.f32.mrf.mxu0
  %v1681 = vadd.f32 0.0, %v1680
  %v1682 = vpop.f32.mrf.mxu0
  %1683 = vmatprep.mubr.f32.mxu0 0.0
  %1684 = vmatmul.mubr.f32.gmra.mxu0 %v1591
  %v1685 = vpop.f32.mrf.mxu0
  %v1686 = vadd.f32 0.0, %v1685
  %v1687 = vpop.f32.mrf.mxu0
  %1688 = vmatprep.mubr.f32.mxu0 0.0
  %1689 = vmatmul.mubr.f32.gmra.mxu0 %v1592
  %v1690 = vpop.f32.mrf.mxu0
  %v1691 = vadd.f32 0.0, %v1690
  %v1692 = vpop.f32.mrf.mxu0
  %1693 = vdwg.mxu0
  %v1694 = vadd.f32 %v1301, %v1676
  %v1695 = vadd.f32 %v1302, %v1681
  %v1696 = vadd.f32 %v1303, %v1686
  %v1697 = vadd.f32 %v1304, %v1691
  %v1698 = vld [vmem:[%s1 + $0x35] sm:$0x1]
  %v1699 = vlaneseq
  %v1700 = vshrl.u32 %v1699, 7
  %v1701 = vsub.s32 0, %v1700
  %v1702 = vrot.slane %v1698, %v1701
  %v1703 = vadd.f32 %v1694, %v1702
  %v1704 = vadd.f32 %v1695, %v1702
  %v1705 = vadd.f32 %v1696, %v1702
  %v1706 = vadd.f32 %v1697, %v1702
  %v1707 = vld [vmem:[%s1 + $0xd8] sm:$0x1]
  %v1708 = vld [vmem:[%s1 + $0xd9] sm:$0x1]
  %v1709 = vsel %vm305, %v1703, 0.0
  %1710 = vadd.xlane.f32.xlu0 %v1709
  %v1711 = vpop.xlane.xlu0 %1710
  %v1712 = vsel %vm305, %v1704, 0.0
  %1713 = vadd.xlane.f32.xlu0 %v1712
  %v1714 = vpop.xlane.xlu0 %1713
  %v1715 = vsel %vm305, %v1705, 0.0
  %1716 = vadd.xlane.f32.xlu0 %v1715
  %v1717 = vpop.xlane.xlu0 %1716
  %v1718 = vsel %vm305, %v1706, 0.0
  %1719 = vadd.xlane.f32.xlu0 %v1718
  %v1720 = vpop.xlane.xlu0 %1719
  %v1721 = vmul.f32 %v1711, %v318
  %v1722 = vmul.f32 %v1714, %v318
  %v1723 = vmul.f32 %v1717, %v318
  %v1724 = vmul.f32 %v1720, %v318
  %v1725 = vmul.f32 %v1703, %v1703
  %v1726 = vmul.f32 %v1704, %v1704
  %v1727 = vmul.f32 %v1705, %v1705
  %v1728 = vmul.f32 %v1706, %v1706
  %v1729 = vsel %vm305, %v1725, 0.0
  %1730 = vadd.xlane.f32.xlu0 %v1729
  %v1731 = vpop.xlane.xlu0 %1730
  %v1732 = vsel %vm305, %v1726, 0.0
  %1733 = vadd.xlane.f32.xlu0 %v1732
  %v1734 = vpop.xlane.xlu0 %1733
  %v1735 = vsel %vm305, %v1727, 0.0
  %1736 = vadd.xlane.f32.xlu0 %v1735
  %v1737 = vpop.xlane.xlu0 %1736
  %v1738 = vsel %vm305, %v1728, 0.0
  %1739 = vadd.xlane.f32.xlu0 %v1738
  %v1740 = vpop.xlane.xlu0 %1739
  %v1741 = vmul.f32 %v1731, %v318
  %v1742 = vmul.f32 %v1734, %v318
  %v1743 = vmul.f32 %v1737, %v318
  %v1744 = vmul.f32 %v1740, %v318
  %v1745 = vmul.f32 %v1721, %v1721
  %v1746 = vmul.f32 %v1722, %v1722
  %v1747 = vmul.f32 %v1723, %v1723
  %v1748 = vmul.f32 %v1724, %v1724
  %v1749 = vsub.f32 %v1741, %v1745
  %v1750 = vsub.f32 %v1742, %v1746
  %v1751 = vsub.f32 %v1743, %v1747
  %v1752 = vsub.f32 %v1744, %v1748
  %v1753 = vsub.f32 %v1703, %v1721
  %v1754 = vsub.f32 %v1704, %v1722
  %v1755 = vsub.f32 %v1705, %v1723
  %v1756 = vsub.f32 %v1706, %v1724
  %v1757 = vadd.f32 %v1749, 1e-05
  %v1758 = vadd.f32 %v1750, 1e-05
  %v1759 = vadd.f32 %v1751, 1e-05
  %v1760 = vadd.f32 %v1752, 1e-05
  %v1761 = vrsqrt.pop %v1757
  %v1762 = vrsqrt.pop %v1758
  %v1763 = vrsqrt.pop %v1759
  %v1764 = vrsqrt.pop %v1760
  %v1765 = vmul.f32 %v1753, %v1761
  %v1766 = vmul.f32 %v1754, %v1762
  %v1767 = vmul.f32 %v1755, %v1763
  %v1768 = vmul.f32 %v1756, %v1764
  %v1769 = vlaneseq
  %v1770 = vshrl.u32 %v1769, 7
  %v1771 = vsub.s32 0, %v1770
  %v1772 = vrot.slane %v1707, %v1771
  %v1773 = vmul.f32 %v1765, %v1772
  %v1774 = vmul.f32 %v1766, %v1772
  %v1775 = vmul.f32 %v1767, %v1772
  %v1776 = vmul.f32 %v1768, %v1772
  %v1777 = vlaneseq
  %v1778 = vshrl.u32 %v1777, 7
  %v1779 = vsub.s32 0, %v1778
  %v1780 = vrot.slane %v1708, %v1779
  %v1781 = vadd.f32 %v1773, %v1780
  %v1782 = vadd.f32 %v1774, %v1780
  %v1783 = vadd.f32 %v1775, %v1780
  %v1784 = vadd.f32 %v1776, %v1780
  %v1785 = vld [vmem:[%s2 + $0x48] sm:$0xff]
  %v1786 = vld [vmem:[%s2 + $0x50] sm:$0xff]
  %v1787 = vld [vmem:[%s2 + $0x58] sm:$0xff]
  %v1788 = vld [vmem:[%s2 + $0x60] sm:$0xff]
  %v1789 = vld [vmem:[%s2 + $0x88] sm:$0x1]
  %v1790 = vlaneseq
  %v1791 = vshrl.u32 %v1790, 7
  %v1792 = vsub.s32 0, %v1791
  %v1793 = vrot.slane %v1789, %v1792
  %v1795 = vsel %vm305, %v1781, 0
  %v1798 = vsel %vm305, %v1782, 0
  %v1801 = vsel %vm305, %v1783, 0
  %v1804 = vsel %vm305, %v1784, 0
  %1806 = vmatprep.subr.mxu0 0.0
  %1807 = vmatpush1.msra.mxu0 0.0
  %1808 = vmatprep.subr.mxu0 0.0
  %1809 = vmatpush1.msra.mxu0 0.0
  %1810 = vmatprep.subr.mxu0 0.0
  %1811 = vmatpush1.msra.mxu0 0.0
  %1812 = vmatprep.subr.mxu0 0.0
  %1813 = vmatpush1.msra.mxu0 0.0
  %1814 = vmatprep.subr.mxu0 0.0
  %1815 = vmatpush1.msra.mxu0 0.0
  %1816 = vmatprep.subr.mxu0 0.0
  %1817 = vmatpush1.msra.mxu0 0.0
  %1818 = vmatprep.subr.mxu0 0.0
  %1819 = vmatpush1.msra.mxu0 0.0
  %1820 = vmatprep.subr.mxu0 0.0
  %1821 = vmatpush1.msra.mxu0 0.0
  %1822 = vmatprep.subr.mxu0 0.0
  %1823 = vmatpush1.msra.mxu0 0.0
  %1824 = vmatprep.subr.mxu0 0.0
  %1825 = vmatpush1.msra.mxu0 0.0
  %1826 = vmatprep.subr.mxu0 0.0
  %1827 = vmatpush1.msra.mxu0 0.0
  %1828 = vmatprep.subr.mxu0 0.0
  %1829 = vmatpush1.msra.mxu0 0.0
  %1830 = vmatprep.subr.mxu0 0.0
  %1831 = vmatpush1.msra.mxu0 %v1788
  %1832 = vmatprep.subr.mxu0 0.0
  %1833 = vmatpush1.msra.mxu0 %v1787
  %1834 = vmatprep.subr.mxu0 0.0
  %1835 = vmatpush1.msra.mxu0 %v1786
  %1836 = vmatprep.subr.mxu0 0.0
  %1837 = vmatpush1.msra.mxu0 %v1785
  %1838 = vmatprep.subr.mxu0 0.0
  %1839 = vmatpush2.msra.mxu0 0.0
  %1840 = vmatprep.subr.mxu0 0.0
  %1841 = vmatpush2.msra.mxu0 0.0
  %1842 = vmatprep.subr.mxu0 0.0
  %1843 = vmatpush2.msra.mxu0 0.0
  %1844 = vmatprep.subr.mxu0 0.0
  %1845 = vmatpush2.msra.mxu0 0.0
  %1846 = vmatprep.subr.mxu0 0.0
  %1847 = vmatpush2.msra.mxu0 0.0
  %1848 = vmatprep.subr.mxu0 0.0
  %1849 = vmatpush2.msra.mxu0 0.0
  %1850 = vmatprep.subr.mxu0 0.0
  %1851 = vmatpush2.msra.mxu0 0.0
  %1852 = vmatprep.subr.mxu0 0.0
  %1853 = vmatpush2.msra.mxu0 0.0
  %1854 = vmatprep.subr.mxu0 0.0
  %1855 = vmatpush2.msra.mxu0 0.0
  %1856 = vmatprep.subr.mxu0 0.0
  %1857 = vmatpush2.msra.mxu0 0.0
  %1858 = vmatprep.subr.mxu0 0.0
  %1859 = vmatpush2.msra.mxu0 0.0
  %1860 = vmatprep.subr.mxu0 0.0
  %1861 = vmatpush2.msra.mxu0 0.0
  %1862 = vmatprep.subr.mxu0 0.0
  %1863 = vmatpush2.msra.mxu0 0.0
  %1864 = vmatprep.subr.mxu0 0.0
  %1865 = vmatpush2.msra.mxu0 0.0
  %1866 = vmatprep.subr.mxu0 0.0
  %1867 = vmatpush2.msra.mxu0 0.0
  %1868 = vmatprep.subr.mxu0 0.0
  %1869 = vmatpush2.msra.mxu0 0.0
  %1870 = vmatprep.mubr.f32.mxu0 0.0
  %1871 = vmatmul.mubr.f32.gmra.mxu0 %v1795
  %v1872 = vpop.f32.mrf.mxu0
  %v1873 = vadd.f32 %v1793, %v1872
  %v1874 = vpop.f32.mrf.mxu0
  %1875 = vmatprep.mubr.f32.mxu0 0.0
  %1876 = vmatmul.mubr.f32.gmra.mxu0 %v1798
  %v1877 = vpop.f32.mrf.mxu0
  %v1878 = vadd.f32 %v1793, %v1877
  %v1879 = vpop.f32.mrf.mxu0
  %1880 = vmatprep.mubr.f32.mxu0 0.0
  %1881 = vmatmul.mubr.f32.gmra.mxu0 %v1801
  %v1882 = vpop.f32.mrf.mxu0
  %v1883 = vadd.f32 %v1793, %v1882
  %v1884 = vpop.f32.mrf.mxu0
  %1885 = vmatprep.mubr.f32.mxu0 0.0
  %1886 = vmatmul.mubr.f32.gmra.mxu0 %v1804
  %v1887 = vpop.f32.mrf.mxu0
  %v1888 = vadd.f32 %v1793, %v1887
  %v1889 = vpop.f32.mrf.mxu0
  %1890 = vdwg.mxu0
  %1895 = vrot.lane.b32.xlu0 %v1873, 96
  %v1896 = vpop.permute.xlu0 %1895
  %1897 = vrot.lane.b32.xlu0 %v1878, 96
  %v1898 = vpop.permute.xlu0 %1897
  %1899 = vrot.lane.b32.xlu0 %v1883, 96
  %v1900 = vpop.permute.xlu0 %1899
  %1901 = vrot.lane.b32.xlu0 %v1888, 96
  %v1902 = vpop.permute.xlu0 %1901
  %v1903 = vsel %vm630, %v1873, 0
  %v1905 = vsel %vm630, %v1878, 0
  %v1907 = vsel %vm630, %v1883, 0
  %v1909 = vsel %vm630, %v1888, 0
  %v1911 = vsel %vm630, %v1896, 0
  %v1913 = vsel %vm630, %v1898, 0
  %v1915 = vsel %vm630, %v1900, 0
  %v1917 = vsel %vm630, %v1902, 0
  %1919 = vmatprep.subr.mxu0 0.0
  %1920 = vmatpush1.xpose.msra.mxu0 0.0
  %1921 = vmatprep.subr.mxu0 0.0
  %1922 = vmatpush1.xpose.msra.mxu0 0.0
  %1923 = vmatprep.subr.mxu0 0.0
  %1924 = vmatpush1.xpose.msra.mxu0 0.0
  %1925 = vmatprep.subr.mxu0 0.0
  %1926 = vmatpush1.xpose.msra.mxu0 0.0
  %1927 = vmatprep.subr.mxu0 0.0
  %1928 = vmatpush1.xpose.msra.mxu0 0.0
  %1929 = vmatprep.subr.mxu0 0.0
  %1930 = vmatpush1.xpose.msra.mxu0 0.0
  %1931 = vmatprep.subr.mxu0 0.0
  %1932 = vmatpush1.xpose.msra.mxu0 0.0
  %1933 = vmatprep.subr.mxu0 0.0
  %1934 = vmatpush1.xpose.msra.mxu0 0.0
  %1935 = vmatprep.subr.mxu0 0.0
  %1936 = vmatpush1.xpose.msra.mxu0 0.0
  %1937 = vmatprep.subr.mxu0 0.0
  %1938 = vmatpush1.xpose.msra.mxu0 0.0
  %1939 = vmatprep.subr.mxu0 0.0
  %1940 = vmatpush1.xpose.msra.mxu0 0.0
  %1941 = vmatprep.subr.mxu0 0.0
  %1942 = vmatpush1.xpose.msra.mxu0 0.0
  %1943 = vmatprep.subr.mxu0 0.0
  %1944 = vmatpush1.xpose.msra.mxu0 %v1917
  %1945 = vmatprep.subr.mxu0 0.0
  %1946 = vmatpush1.xpose.msra.mxu0 %v1915
  %1947 = vmatprep.subr.mxu0 0.0
  %1948 = vmatpush1.xpose.msra.mxu0 %v1913
  %1949 = vmatprep.subr.mxu0 0.0
  %1950 = vmatpush1.xpose.msra.mxu0 %v1911
  %1951 = vmatprep.subr.mxu0 0.0
  %1952 = vmatpush2.xpose.msra.mxu0 0.0
  %1953 = vmatprep.subr.mxu0 0.0
  %1954 = vmatpush2.xpose.msra.mxu0 0.0
  %1955 = vmatprep.subr.mxu0 0.0
  %1956 = vmatpush2.xpose.msra.mxu0 0.0
  %1957 = vmatprep.subr.mxu0 0.0
  %1958 = vmatpush2.xpose.msra.mxu0 0.0
  %1959 = vmatprep.subr.mxu0 0.0
  %1960 = vmatpush2.xpose.msra.mxu0 0.0
  %1961 = vmatprep.subr.mxu0 0.0
  %1962 = vmatpush2.xpose.msra.mxu0 0.0
  %1963 = vmatprep.subr.mxu0 0.0
  %1964 = vmatpush2.xpose.msra.mxu0 0.0
  %1965 = vmatprep.subr.mxu0 0.0
  %1966 = vmatpush2.xpose.msra.mxu0 0.0
  %1967 = vmatprep.subr.mxu0 0.0
  %1968 = vmatpush2.xpose.msra.mxu0 0.0
  %1969 = vmatprep.subr.mxu0 0.0
  %1970 = vmatpush2.xpose.msra.mxu0 0.0
  %1971 = vmatprep.subr.mxu0 0.0
  %1972 = vmatpush2.xpose.msra.mxu0 0.0
  %1973 = vmatprep.subr.mxu0 0.0
  %1974 = vmatpush2.xpose.msra.mxu0 0.0
  %1975 = vmatprep.subr.mxu0 0.0
  %1976 = vmatpush2.xpose.msra.mxu0 0.0
  %1977 = vmatprep.subr.mxu0 0.0
  %1978 = vmatpush2.xpose.msra.mxu0 0.0
  %1979 = vmatprep.subr.mxu0 0.0
  %1980 = vmatpush2.xpose.msra.mxu0 0.0
  %1981 = vmatprep.subr.mxu0 0.0
  %1982 = vmatpush2.xpose.msra.mxu0 0.0
  %1983 = vmatprep.mubr.f32.mxu0 0.0
  %1984 = vmatmul.mubr.f32.gmra.mxu0 %v1903
  %v1985 = vpop.f32.mrf.mxu0
  %v1986 = vadd.f32 0.0, %v1985
  %v1987 = vpop.f32.mrf.mxu0
  %1988 = vmatprep.mubr.f32.mxu0 0.0
  %1989 = vmatmul.mubr.f32.gmra.mxu0 %v1905
  %v1990 = vpop.f32.mrf.mxu0
  %v1991 = vadd.f32 0.0, %v1990
  %v1992 = vpop.f32.mrf.mxu0
  %1993 = vmatprep.mubr.f32.mxu0 0.0
  %1994 = vmatmul.mubr.f32.gmra.mxu0 %v1907
  %v1995 = vpop.f32.mrf.mxu0
  %v1996 = vadd.f32 0.0, %v1995
  %v1997 = vpop.f32.mrf.mxu0
  %1998 = vmatprep.mubr.f32.mxu0 0.0
  %1999 = vmatmul.mubr.f32.gmra.mxu0 %v1909
  %v2000 = vpop.f32.mrf.mxu0
  %v2001 = vadd.f32 0.0, %v2000
  %v2002 = vpop.f32.mrf.mxu0
  %2003 = vdwg.mxu0
  %v2004 = vmul.f32 %v1986, 0.25
  %v2005 = vmul.f32 %v1991, 0.25
  %v2006 = vmul.f32 %v1996, 0.25
  %v2007 = vmul.f32 %v2001, 0.25
  %v2008 = vadd.f32 %v2004, %v430
  %v2009 = vadd.f32 %v2005, %v431
  %v2010 = vadd.f32 %v2006, %v432
  %v2011 = vadd.f32 %v2007, %v433
  %v2012 = vsel %vm305, %v2008, -inf
  %2013 = vmax.xlane.f32.xlu0 %v2012
  %v2014 = vpop.xlane.xlu0 %2013
  %v2015 = vsel %vm305, %v2009, -inf
  %2016 = vmax.xlane.f32.xlu0 %v2015
  %v2017 = vpop.xlane.xlu0 %2016
  %v2018 = vsel %vm305, %v2010, -inf
  %2019 = vmax.xlane.f32.xlu0 %v2018
  %v2020 = vpop.xlane.xlu0 %2019
  %v2021 = vsel %vm305, %v2011, -inf
  %2022 = vmax.xlane.f32.xlu0 %v2021
  %v2023 = vpop.xlane.xlu0 %2022
  %v2024 = vsub.f32 %v2008, %v2014
  %v2025 = vsub.f32 %v2009, %v2017
  %v2026 = vsub.f32 %v2010, %v2020
  %v2027 = vsub.f32 %v2011, %v2023
  %v2028 = vmul.f32 %v2024, 1.442695
  %v2029 = vpow.pop %v2028
  %v2030 = vmul.f32 %v2025, 1.442695
  %v2031 = vpow.pop %v2030
  %v2032 = vmul.f32 %v2026, 1.442695
  %v2033 = vpow.pop %v2032
  %v2034 = vmul.f32 %v2027, 1.442695
  %v2035 = vpow.pop %v2034
  %v2036 = vsel %vm305, %v2029, 0.0
  %2037 = vadd.xlane.f32.xlu0 %v2036
  %v2038 = vpop.xlane.xlu0 %2037
  %v2039 = vsel %vm305, %v2031, 0.0
  %2040 = vadd.xlane.f32.xlu0 %v2039
  %v2041 = vpop.xlane.xlu0 %2040
  %v2042 = vsel %vm305, %v2033, 0.0
  %2043 = vadd.xlane.f32.xlu0 %v2042
  %v2044 = vpop.xlane.xlu0 %2043
  %v2045 = vsel %vm305, %v2035, 0.0
  %2046 = vadd.xlane.f32.xlu0 %v2045
  %v2047 = vpop.xlane.xlu0 %2046
  %v2048 = vrcp.pop %v2038
  %v2049 = vrcp.pop %v2041
  %v2050 = vrcp.pop %v2044
  %v2051 = vrcp.pop %v2047
  %v2052 = vmul.f32 %v2029, %v2048
  %v2053 = vmul.f32 %v2031, %v2049
  %v2054 = vmul.f32 %v2033, %v2050
  %v2055 = vmul.f32 %v2035, %v2051
  %2056 = vrot.lane.b32.xlu0 %v1873, 64
  %v2057 = vpop.permute.xlu0 %2056
  %2058 = vrot.lane.b32.xlu0 %v1878, 64
  %v2059 = vpop.permute.xlu0 %2058
  %2060 = vrot.lane.b32.xlu0 %v1883, 64
  %v2061 = vpop.permute.xlu0 %2060
  %2062 = vrot.lane.b32.xlu0 %v1888, 64
  %v2063 = vpop.permute.xlu0 %2062
  %v2069 = vsel %vm305, %v2052, 0
  %v2072 = vsel %vm305, %v2053, 0
  %v2075 = vsel %vm305, %v2054, 0
  %v2078 = vsel %vm305, %v2055, 0
  %2080 = vmatprep.subr.mxu0 0.0
  %2081 = vmatpush1.msra.mxu0 0.0
  %2082 = vmatprep.subr.mxu0 0.0
  %2083 = vmatpush1.msra.mxu0 0.0
  %2084 = vmatprep.subr.mxu0 0.0
  %2085 = vmatpush1.msra.mxu0 0.0
  %2086 = vmatprep.subr.mxu0 0.0
  %2087 = vmatpush1.msra.mxu0 0.0
  %2088 = vmatprep.subr.mxu0 0.0
  %2089 = vmatpush1.msra.mxu0 0.0
  %2090 = vmatprep.subr.mxu0 0.0
  %2091 = vmatpush1.msra.mxu0 0.0
  %2092 = vmatprep.subr.mxu0 0.0
  %2093 = vmatpush1.msra.mxu0 0.0
  %2094 = vmatprep.subr.mxu0 0.0
  %2095 = vmatpush1.msra.mxu0 0.0
  %2096 = vmatprep.subr.mxu0 0.0
  %2097 = vmatpush1.msra.mxu0 0.0
  %2098 = vmatprep.subr.mxu0 0.0
  %2099 = vmatpush1.msra.mxu0 0.0
  %2100 = vmatprep.subr.mxu0 0.0
  %2101 = vmatpush1.msra.mxu0 0.0
  %2102 = vmatprep.subr.mxu0 0.0
  %2103 = vmatpush1.msra.mxu0 0.0
  %2104 = vmatprep.subr.mxu0 0.0
  %2105 = vmatpush1.msra.mxu0 %v2063
  %2106 = vmatprep.subr.mxu0 0.0
  %2107 = vmatpush1.msra.mxu0 %v2061
  %2108 = vmatprep.subr.mxu0 0.0
  %2109 = vmatpush1.msra.mxu0 %v2059
  %2110 = vmatprep.subr.mxu0 0.0
  %2111 = vmatpush1.msra.mxu0 %v2057
  %2112 = vmatprep.subr.mxu0 0.0
  %2113 = vmatpush2.msra.mxu0 0.0
  %2114 = vmatprep.subr.mxu0 0.0
  %2115 = vmatpush2.msra.mxu0 0.0
  %2116 = vmatprep.subr.mxu0 0.0
  %2117 = vmatpush2.msra.mxu0 0.0
  %2118 = vmatprep.subr.mxu0 0.0
  %2119 = vmatpush2.msra.mxu0 0.0
  %2120 = vmatprep.subr.mxu0 0.0
  %2121 = vmatpush2.msra.mxu0 0.0
  %2122 = vmatprep.subr.mxu0 0.0
  %2123 = vmatpush2.msra.mxu0 0.0
  %2124 = vmatprep.subr.mxu0 0.0
  %2125 = vmatpush2.msra.mxu0 0.0
  %2126 = vmatprep.subr.mxu0 0.0
  %2127 = vmatpush2.msra.mxu0 0.0
  %2128 = vmatprep.subr.mxu0 0.0
  %2129 = vmatpush2.msra.mxu0 0.0
  %2130 = vmatprep.subr.mxu0 0.0
  %2131 = vmatpush2.msra.mxu0 0.0
  %2132 = vmatprep.subr.mxu0 0.0
  %2133 = vmatpush2.msra.mxu0 0.0
  %2134 = vmatprep.subr.mxu0 0.0
  %2135 = vmatpush2.msra.mxu0 0.0
  %2136 = vmatprep.subr.mxu0 0.0
  %2137 = vmatpush2.msra.mxu0 0.0
  %2138 = vmatprep.subr.mxu0 0.0
  %2139 = vmatpush2.msra.mxu0 0.0
  %2140 = vmatprep.subr.mxu0 0.0
  %2141 = vmatpush2.msra.mxu0 0.0
  %2142 = vmatprep.subr.mxu0 0.0
  %2143 = vmatpush2.msra.mxu0 0.0
  %2144 = vmatprep.mubr.f32.mxu0 0.0
  %2145 = vmatmul.mubr.f32.gmra.mxu0 %v2069
  %v2146 = vpop.f32.mrf.mxu0
  %v2147 = vadd.f32 0.0, %v2146
  %v2148 = vpop.f32.mrf.mxu0
  %2149 = vmatprep.mubr.f32.mxu0 0.0
  %2150 = vmatmul.mubr.f32.gmra.mxu0 %v2072
  %v2151 = vpop.f32.mrf.mxu0
  %v2152 = vadd.f32 0.0, %v2151
  %v2153 = vpop.f32.mrf.mxu0
  %2154 = vmatprep.mubr.f32.mxu0 0.0
  %2155 = vmatmul.mubr.f32.gmra.mxu0 %v2075
  %v2156 = vpop.f32.mrf.mxu0
  %v2157 = vadd.f32 0.0, %v2156
  %v2158 = vpop.f32.mrf.mxu0
  %2159 = vmatprep.mubr.f32.mxu0 0.0
  %2160 = vmatmul.mubr.f32.gmra.mxu0 %v2078
  %v2161 = vpop.f32.mrf.mxu0
  %v2162 = vadd.f32 0.0, %v2161
  %v2163 = vpop.f32.mrf.mxu0
  %2164 = vdwg.mxu0
  %2165 = vrot.lane.b32.xlu0 %v1873, 112
  %v2166 = vpop.permute.xlu0 %2165
  %2167 = vrot.lane.b32.xlu0 %v1878, 112
  %v2168 = vpop.permute.xlu0 %2167
  %2169 = vrot.lane.b32.xlu0 %v1883, 112
  %v2170 = vpop.permute.xlu0 %2169
  %2171 = vrot.lane.b32.xlu0 %v1888, 112
  %v2172 = vpop.permute.xlu0 %2171
  %2173 = vrot.lane.b32.xlu0 %v1873, 80
  %v2174 = vpop.permute.xlu0 %2173
  %2175 = vrot.lane.b32.xlu0 %v1878, 80
  %v2176 = vpop.permute.xlu0 %2175
  %2177 = vrot.lane.b32.xlu0 %v1883, 80
  %v2178 = vpop.permute.xlu0 %2177
  %2179 = vrot.lane.b32.xlu0 %v1888, 80
  %v2180 = vpop.permute.xlu0 %2179
  %v2181 = vsel %vm630, %v2166, 0
  %v2183 = vsel %vm630, %v2168, 0
  %v2185 = vsel %vm630, %v2170, 0
  %v2187 = vsel %vm630, %v2172, 0
  %v2189 = vsel %vm630, %v2174, 0
  %v2191 = vsel %vm630, %v2176, 0
  %v2193 = vsel %vm630, %v2178, 0
  %v2195 = vsel %vm630, %v2180, 0
  %2197 = vmatprep.subr.mxu0 0.0
  %2198 = vmatpush1.xpose.msra.mxu0 0.0
  %2199 = vmatprep.subr.mxu0 0.0
  %2200 = vmatpush1.xpose.msra.mxu0 0.0
  %2201 = vmatprep.subr.mxu0 0.0
  %2202 = vmatpush1.xpose.msra.mxu0 0.0
  %2203 = vmatprep.subr.mxu0 0.0
  %2204 = vmatpush1.xpose.msra.mxu0 0.0
  %2205 = vmatprep.subr.mxu0 0.0
  %2206 = vmatpush1.xpose.msra.mxu0 0.0
  %2207 = vmatprep.subr.mxu0 0.0
  %2208 = vmatpush1.xpose.msra.mxu0 0.0
  %2209 = vmatprep.subr.mxu0 0.0
  %2210 = vmatpush1.xpose.msra.mxu0 0.0
  %2211 = vmatprep.subr.mxu0 0.0
  %2212 = vmatpush1.xpose.msra.mxu0 0.0
  %2213 = vmatprep.subr.mxu0 0.0
  %2214 = vmatpush1.xpose.msra.mxu0 0.0
  %2215 = vmatprep.subr.mxu0 0.0
  %2216 = vmatpush1.xpose.msra.mxu0 0.0
  %2217 = vmatprep.subr.mxu0 0.0
  %2218 = vmatpush1.xpose.msra.mxu0 0.0
  %2219 = vmatprep.subr.mxu0 0.0
  %2220 = vmatpush1.xpose.msra.mxu0 0.0
  %2221 = vmatprep.subr.mxu0 0.0
  %2222 = vmatpush1.xpose.msra.mxu0 %v2195
  %2223 = vmatprep.subr.mxu0 0.0
  %2224 = vmatpush1.xpose.msra.mxu0 %v2193
  %2225 = vmatprep.subr.mxu0 0.0
  %2226 = vmatpush1.xpose.msra.mxu0 %v2191
  %2227 = vmatprep.subr.mxu0 0.0
  %2228 = vmatpush1.xpose.msra.mxu0 %v2189
  %2229 = vmatprep.subr.mxu0 0.0
  %2230 = vmatpush2.xpose.msra.mxu0 0.0
  %2231 = vmatprep.subr.mxu0 0.0
  %2232 = vmatpush2.xpose.msra.mxu0 0.0
  %2233 = vmatprep.subr.mxu0 0.0
  %2234 = vmatpush2.xpose.msra.mxu0 0.0
  %2235 = vmatprep.subr.mxu0 0.0
  %2236 = vmatpush2.xpose.msra.mxu0 0.0
  %2237 = vmatprep.subr.mxu0 0.0
  %2238 = vmatpush2.xpose.msra.mxu0 0.0
  %2239 = vmatprep.subr.mxu0 0.0
  %2240 = vmatpush2.xpose.msra.mxu0 0.0
  %2241 = vmatprep.subr.mxu0 0.0
  %2242 = vmatpush2.xpose.msra.mxu0 0.0
  %2243 = vmatprep.subr.mxu0 0.0
  %2244 = vmatpush2.xpose.msra.mxu0 0.0
  %2245 = vmatprep.subr.mxu0 0.0
  %2246 = vmatpush2.xpose.msra.mxu0 0.0
  %2247 = vmatprep.subr.mxu0 0.0
  %2248 = vmatpush2.xpose.msra.mxu0 0.0
  %2249 = vmatprep.subr.mxu0 0.0
  %2250 = vmatpush2.xpose.msra.mxu0 0.0
  %2251 = vmatprep.subr.mxu0 0.0
  %2252 = vmatpush2.xpose.msra.mxu0 0.0
  %2253 = vmatprep.subr.mxu0 0.0
  %2254 = vmatpush2.xpose.msra.mxu0 0.0
  %2255 = vmatprep.subr.mxu0 0.0
  %2256 = vmatpush2.xpose.msra.mxu0 0.0
  %2257 = vmatprep.subr.mxu0 0.0
  %2258 = vmatpush2.xpose.msra.mxu0 0.0
  %2259 = vmatprep.subr.mxu0 0.0
  %2260 = vmatpush2.xpose.msra.mxu0 0.0
  %2261 = vmatprep.mubr.f32.mxu0 0.0
  %2262 = vmatmul.mubr.f32.gmra.mxu0 %v2181
  %v2263 = vpop.f32.mrf.mxu0
  %v2264 = vadd.f32 0.0, %v2263
  %v2265 = vpop.f32.mrf.mxu0
  %2266 = vmatprep.mubr.f32.mxu0 0.0
  %2267 = vmatmul.mubr.f32.gmra.mxu0 %v2183
  %v2268 = vpop.f32.mrf.mxu0
  %v2269 = vadd.f32 0.0, %v2268
  %v2270 = vpop.f32.mrf.mxu0
  %2271 = vmatprep.mubr.f32.mxu0 0.0
  %2272 = vmatmul.mubr.f32.gmra.mxu0 %v2185
  %v2273 = vpop.f32.mrf.mxu0
  %v2274 = vadd.f32 0.0, %v2273
  %v2275 = vpop.f32.mrf.mxu0
  %2276 = vmatprep.mubr.f32.mxu0 0.0
  %2277 = vmatmul.mubr.f32.gmra.mxu0 %v2187
  %v2278 = vpop.f32.mrf.mxu0
  %v2279 = vadd.f32 0.0, %v2278
  %v2280 = vpop.f32.mrf.mxu0
  %2281 = vdwg.mxu0
  %v2282 = vmul.f32 %v2264, 0.25
  %v2283 = vmul.f32 %v2269, 0.25
  %v2284 = vmul.f32 %v2274, 0.25
  %v2285 = vmul.f32 %v2279, 0.25
  %v2286 = vadd.f32 %v2282, %v430
  %v2287 = vadd.f32 %v2283, %v431
  %v2288 = vadd.f32 %v2284, %v432
  %v2289 = vadd.f32 %v2285, %v433
  %v2290 = vsel %vm305, %v2286, -inf
  %2291 = vmax.xlane.f32.xlu0 %v2290
  %v2292 = vpop.xlane.xlu0 %2291
  %v2293 = vsel %vm305, %v2287, -inf
  %2294 = vmax.xlane.f32.xlu0 %v2293
  %v2295 = vpop.xlane.xlu0 %2294
  %v2296 = vsel %vm305, %v2288, -inf
  %2297 = vmax.xlane.f32.xlu0 %v2296
  %v2298 = vpop.xlane.xlu0 %2297
  %v2299 = vsel %vm305, %v2289, -inf
  %2300 = vmax.xlane.f32.xlu0 %v2299
  %v2301 = vpop.xlane.xlu0 %2300
  %v2302 = vsub.f32 %v2286, %v2292
  %v2303 = vsub.f32 %v2287, %v2295
  %v2304 = vsub.f32 %v2288, %v2298
  %v2305 = vsub.f32 %v2289, %v2301
  %v2306 = vmul.f32 %v2302, 1.442695
  %v2307 = vpow.pop %v2306
  %v2308 = vmul.f32 %v2303, 1.442695
  %v2309 = vpow.pop %v2308
  %v2310 = vmul.f32 %v2304, 1.442695
  %v2311 = vpow.pop %v2310
  %v2312 = vmul.f32 %v2305, 1.442695
  %v2313 = vpow.pop %v2312
  %v2314 = vsel %vm305, %v2307, 0.0
  %2315 = vadd.xlane.f32.xlu0 %v2314
  %v2316 = vpop.xlane.xlu0 %2315
  %v2317 = vsel %vm305, %v2309, 0.0
  %2318 = vadd.xlane.f32.xlu0 %v2317
  %v2319 = vpop.xlane.xlu0 %2318
  %v2320 = vsel %vm305, %v2311, 0.0
  %2321 = vadd.xlane.f32.xlu0 %v2320
  %v2322 = vpop.xlane.xlu0 %2321
  %v2323 = vsel %vm305, %v2313, 0.0
  %2324 = vadd.xlane.f32.xlu0 %v2323
  %v2325 = vpop.xlane.xlu0 %2324
  %v2326 = vrcp.pop %v2316
  %v2327 = vrcp.pop %v2319
  %v2328 = vrcp.pop %v2322
  %v2329 = vrcp.pop %v2325
  %v2330 = vmul.f32 %v2307, %v2326
  %v2331 = vmul.f32 %v2309, %v2327
  %v2332 = vmul.f32 %v2311, %v2328
  %v2333 = vmul.f32 %v2313, %v2329
  %2334 = vrot.lane.b32.xlu0 %v1873, 48
  %v2335 = vpop.permute.xlu0 %2334
  %2336 = vrot.lane.b32.xlu0 %v1878, 48
  %v2337 = vpop.permute.xlu0 %2336
  %2338 = vrot.lane.b32.xlu0 %v1883, 48
  %v2339 = vpop.permute.xlu0 %2338
  %2340 = vrot.lane.b32.xlu0 %v1888, 48
  %v2341 = vpop.permute.xlu0 %2340
  %v2347 = vsel %vm305, %v2330, 0
  %v2350 = vsel %vm305, %v2331, 0
  %v2353 = vsel %vm305, %v2332, 0
  %v2356 = vsel %vm305, %v2333, 0
  %2358 = vmatprep.subr.mxu0 0.0
  %2359 = vmatpush1.msra.mxu0 0.0
  %2360 = vmatprep.subr.mxu0 0.0
  %2361 = vmatpush1.msra.mxu0 0.0
  %2362 = vmatprep.subr.mxu0 0.0
  %2363 = vmatpush1.msra.mxu0 0.0
  %2364 = vmatprep.subr.mxu0 0.0
  %2365 = vmatpush1.msra.mxu0 0.0
  %2366 = vmatprep.subr.mxu0 0.0
  %2367 = vmatpush1.msra.mxu0 0.0
  %2368 = vmatprep.subr.mxu0 0.0
  %2369 = vmatpush1.msra.mxu0 0.0
  %2370 = vmatprep.subr.mxu0 0.0
  %2371 = vmatpush1.msra.mxu0 0.0
  %2372 = vmatprep.subr.mxu0 0.0
  %2373 = vmatpush1.msra.mxu0 0.0
  %2374 = vmatprep.subr.mxu0 0.0
  %2375 = vmatpush1.msra.mxu0 0.0
  %2376 = vmatprep.subr.mxu0 0.0
  %2377 = vmatpush1.msra.mxu0 0.0
  %2378 = vmatprep.subr.mxu0 0.0
  %2379 = vmatpush1.msra.mxu0 0.0
  %2380 = vmatprep.subr.mxu0 0.0
  %2381 = vmatpush1.msra.mxu0 0.0
  %2382 = vmatprep.subr.mxu0 0.0
  %2383 = vmatpush1.msra.mxu0 %v2341
  %2384 = vmatprep.subr.mxu0 0.0
  %2385 = vmatpush1.msra.mxu0 %v2339
  %2386 = vmatprep.subr.mxu0 0.0
  %2387 = vmatpush1.msra.mxu0 %v2337
  %2388 = vmatprep.subr.mxu0 0.0
  %2389 = vmatpush1.msra.mxu0 %v2335
  %2390 = vmatprep.subr.mxu0 0.0
  %2391 = vmatpush2.msra.mxu0 0.0
  %2392 = vmatprep.subr.mxu0 0.0
  %2393 = vmatpush2.msra.mxu0 0.0
  %2394 = vmatprep.subr.mxu0 0.0
  %2395 = vmatpush2.msra.mxu0 0.0
  %2396 = vmatprep.subr.mxu0 0.0
  %2397 = vmatpush2.msra.mxu0 0.0
  %2398 = vmatprep.subr.mxu0 0.0
  %2399 = vmatpush2.msra.mxu0 0.0
  %2400 = vmatprep.subr.mxu0 0.0
  %2401 = vmatpush2.msra.mxu0 0.0
  %2402 = vmatprep.subr.mxu0 0.0
  %2403 = vmatpush2.msra.mxu0 0.0
  %2404 = vmatprep.subr.mxu0 0.0
  %2405 = vmatpush2.msra.mxu0 0.0
  %2406 = vmatprep.subr.mxu0 0.0
  %2407 = vmatpush2.msra.mxu0 0.0
  %2408 = vmatprep.subr.mxu0 0.0
  %2409 = vmatpush2.msra.mxu0 0.0
  %2410 = vmatprep.subr.mxu0 0.0
  %2411 = vmatpush2.msra.mxu0 0.0
  %2412 = vmatprep.subr.mxu0 0.0
  %2413 = vmatpush2.msra.mxu0 0.0
  %2414 = vmatprep.subr.mxu0 0.0
  %2415 = vmatpush2.msra.mxu0 0.0
  %2416 = vmatprep.subr.mxu0 0.0
  %2417 = vmatpush2.msra.mxu0 0.0
  %2418 = vmatprep.subr.mxu0 0.0
  %2419 = vmatpush2.msra.mxu0 0.0
  %2420 = vmatprep.subr.mxu0 0.0
  %2421 = vmatpush2.msra.mxu0 0.0
  %2422 = vmatprep.mubr.f32.mxu0 0.0
  %2423 = vmatmul.mubr.f32.gmra.mxu0 %v2347
  %v2424 = vpop.f32.mrf.mxu0
  %v2425 = vadd.f32 0.0, %v2424
  %v2426 = vpop.f32.mrf.mxu0
  %2427 = vmatprep.mubr.f32.mxu0 0.0
  %2428 = vmatmul.mubr.f32.gmra.mxu0 %v2350
  %v2429 = vpop.f32.mrf.mxu0
  %v2430 = vadd.f32 0.0, %v2429
  %v2431 = vpop.f32.mrf.mxu0
  %2432 = vmatprep.mubr.f32.mxu0 0.0
  %2433 = vmatmul.mubr.f32.gmra.mxu0 %v2353
  %v2434 = vpop.f32.mrf.mxu0
  %v2435 = vadd.f32 0.0, %v2434
  %v2436 = vpop.f32.mrf.mxu0
  %2437 = vmatprep.mubr.f32.mxu0 0.0
  %2438 = vmatmul.mubr.f32.gmra.mxu0 %v2356
  %v2439 = vpop.f32.mrf.mxu0
  %v2440 = vadd.f32 0.0, %v2439
  %v2441 = vpop.f32.mrf.mxu0
  %2442 = vdwg.mxu0
  %2447 = vrot.lane.b32.xlu0 %v2425, 16
  %v2448 = vpop.permute.xlu0 %2447
  %2449 = vrot.lane.b32.xlu0 %v2430, 16
  %v2450 = vpop.permute.xlu0 %2449
  %2451 = vrot.lane.b32.xlu0 %v2435, 16
  %v2452 = vpop.permute.xlu0 %2451
  %2453 = vrot.lane.b32.xlu0 %v2440, 16
  %v2454 = vpop.permute.xlu0 %2453
  %v2459 = vsel %vm630, %v2147, %v2448
  %v2460 = vsel %vm630, %v2152, %v2450
  %v2461 = vsel %vm630, %v2157, %v2452
  %v2462 = vsel %vm630, %v2162, %v2454
  %v2463 = vld [vmem:[%s1 + $0xe0] sm:$0xff]
  %v2464 = vld [vmem:[%s1 + $0xe8] sm:$0xff]
  %v2465 = vld [vmem:[%s1 + $0xf0] sm:$0xff]
  %v2466 = vld [vmem:[%s1 + $0xf8] sm:$0xff]
  %v2468 = vsel %vm305, %v2459, 0
  %v2471 = vsel %vm305, %v2460, 0
  %v2474 = vsel %vm305, %v2461, 0
  %v2477 = vsel %vm305, %v2462, 0
  %2479 = vmatprep.subr.mxu0 0.0
  %2480 = vmatpush1.msra.mxu0 0.0
  %2481 = vmatprep.subr.mxu0 0.0
  %2482 = vmatpush1.msra.mxu0 0.0
  %2483 = vmatprep.subr.mxu0 0.0
  %2484 = vmatpush1.msra.mxu0 0.0
  %2485 = vmatprep.subr.mxu0 0.0
  %2486 = vmatpush1.msra.mxu0 0.0
  %2487 = vmatprep.subr.mxu0 0.0
  %2488 = vmatpush1.msra.mxu0 0.0
  %2489 = vmatprep.subr.mxu0 0.0
  %2490 = vmatpush1.msra.mxu0 0.0
  %2491 = vmatprep.subr.mxu0 0.0
  %2492 = vmatpush1.msra.mxu0 0.0
  %2493 = vmatprep.subr.mxu0 0.0
  %2494 = vmatpush1.msra.mxu0 0.0
  %2495 = vmatprep.subr.mxu0 0.0
  %2496 = vmatpush1.msra.mxu0 0.0
  %2497 = vmatprep.subr.mxu0 0.0
  %2498 = vmatpush1.msra.mxu0 0.0
  %2499 = vmatprep.subr.mxu0 0.0
  %2500 = vmatpush1.msra.mxu0 0.0
  %2501 = vmatprep.subr.mxu0 0.0
  %2502 = vmatpush1.msra.mxu0 0.0
  %2503 = vmatprep.subr.mxu0 0.0
  %2504 = vmatpush1.msra.mxu0 %v2466
  %2505 = vmatprep.subr.mxu0 0.0
  %2506 = vmatpush1.msra.mxu0 %v2465
  %2507 = vmatprep.subr.mxu0 0.0
  %2508 = vmatpush1.msra.mxu0 %v2464
  %2509 = vmatprep.subr.mxu0 0.0
  %2510 = vmatpush1.msra.mxu0 %v2463
  %2511 = vmatprep.subr.mxu0 0.0
  %2512 = vmatpush2.msra.mxu0 0.0
  %2513 = vmatprep.subr.mxu0 0.0
  %2514 = vmatpush2.msra.mxu0 0.0
  %2515 = vmatprep.subr.mxu0 0.0
  %2516 = vmatpush2.msra.mxu0 0.0
  %2517 = vmatprep.subr.mxu0 0.0
  %2518 = vmatpush2.msra.mxu0 0.0
  %2519 = vmatprep.subr.mxu0 0.0
  %2520 = vmatpush2.msra.mxu0 0.0
  %2521 = vmatprep.subr.mxu0 0.0
  %2522 = vmatpush2.msra.mxu0 0.0
  %2523 = vmatprep.subr.mxu0 0.0
  %2524 = vmatpush2.msra.mxu0 0.0
  %2525 = vmatprep.subr.mxu0 0.0
  %2526 = vmatpush2.msra.mxu0 0.0
  %2527 = vmatprep.subr.mxu0 0.0
  %2528 = vmatpush2.msra.mxu0 0.0
  %2529 = vmatprep.subr.mxu0 0.0
  %2530 = vmatpush2.msra.mxu0 0.0
  %2531 = vmatprep.subr.mxu0 0.0
  %2532 = vmatpush2.msra.mxu0 0.0
  %2533 = vmatprep.subr.mxu0 0.0
  %2534 = vmatpush2.msra.mxu0 0.0
  %2535 = vmatprep.subr.mxu0 0.0
  %2536 = vmatpush2.msra.mxu0 0.0
  %2537 = vmatprep.subr.mxu0 0.0
  %2538 = vmatpush2.msra.mxu0 0.0
  %2539 = vmatprep.subr.mxu0 0.0
  %2540 = vmatpush2.msra.mxu0 0.0
  %2541 = vmatprep.subr.mxu0 0.0
  %2542 = vmatpush2.msra.mxu0 0.0
  %2543 = vmatprep.mubr.f32.mxu0 0.0
  %2544 = vmatmul.mubr.f32.gmra.mxu0 %v2468
  %v2545 = vpop.f32.mrf.mxu0
  %v2546 = vadd.f32 0.0, %v2545
  %v2547 = vpop.f32.mrf.mxu0
  %2548 = vmatprep.mubr.f32.mxu0 0.0
  %2549 = vmatmul.mubr.f32.gmra.mxu0 %v2471
  %v2550 = vpop.f32.mrf.mxu0
  %v2551 = vadd.f32 0.0, %v2550
  %v2552 = vpop.f32.mrf.mxu0
  %2553 = vmatprep.mubr.f32.mxu0 0.0
  %2554 = vmatmul.mubr.f32.gmra.mxu0 %v2474
  %v2555 = vpop.f32.mrf.mxu0
  %v2556 = vadd.f32 0.0, %v2555
  %v2557 = vpop.f32.mrf.mxu0
  %2558 = vmatprep.mubr.f32.mxu0 0.0
  %2559 = vmatmul.mubr.f32.gmra.mxu0 %v2477
  %v2560 = vpop.f32.mrf.mxu0
  %v2561 = vadd.f32 0.0, %v2560
  %v2562 = vpop.f32.mrf.mxu0
  %2563 = vdwg.mxu0
  %v2564 = vadd.f32 %v1703, %v2546
  %v2565 = vadd.f32 %v1704, %v2551
  %v2566 = vadd.f32 %v1705, %v2556
  %v2567 = vadd.f32 %v1706, %v2561
  %v2568 = vld [vmem:[%s1 + $0xdc] sm:$0x1]
  %v2569 = vlaneseq
  %v2570 = vshrl.u32 %v2569, 7
  %v2571 = vsub.s32 0, %v2570
  %v2572 = vrot.slane %v2568, %v2571
  %v2573 = vadd.f32 %v2564, %v2572
  %v2574 = vadd.f32 %v2565, %v2572
  %v2575 = vadd.f32 %v2566, %v2572
  %v2576 = vadd.f32 %v2567, %v2572
  %v2577 = vld [vmem:[%s1 + $0xda] sm:$0x1]
  %v2578 = vld [vmem:[%s1 + $0xdb] sm:$0x1]
  %v2579 = vsel %vm305, %v2573, 0.0
  %2580 = vadd.xlane.f32.xlu0 %v2579
  %v2581 = vpop.xlane.xlu0 %2580
  %v2582 = vsel %vm305, %v2574, 0.0
  %2583 = vadd.xlane.f32.xlu0 %v2582
  %v2584 = vpop.xlane.xlu0 %2583
  %v2585 = vsel %vm305, %v2575, 0.0
  %2586 = vadd.xlane.f32.xlu0 %v2585
  %v2587 = vpop.xlane.xlu0 %2586
  %v2588 = vsel %vm305, %v2576, 0.0
  %2589 = vadd.xlane.f32.xlu0 %v2588
  %v2590 = vpop.xlane.xlu0 %2589
  %v2591 = vmul.f32 %v2581, %v318
  %v2592 = vmul.f32 %v2584, %v318
  %v2593 = vmul.f32 %v2587, %v318
  %v2594 = vmul.f32 %v2590, %v318
  %v2595 = vmul.f32 %v2573, %v2573
  %v2596 = vmul.f32 %v2574, %v2574
  %v2597 = vmul.f32 %v2575, %v2575
  %v2598 = vmul.f32 %v2576, %v2576
  %v2599 = vsel %vm305, %v2595, 0.0
  %2600 = vadd.xlane.f32.xlu0 %v2599
  %v2601 = vpop.xlane.xlu0 %2600
  %v2602 = vsel %vm305, %v2596, 0.0
  %2603 = vadd.xlane.f32.xlu0 %v2602
  %v2604 = vpop.xlane.xlu0 %2603
  %v2605 = vsel %vm305, %v2597, 0.0
  %2606 = vadd.xlane.f32.xlu0 %v2605
  %v2607 = vpop.xlane.xlu0 %2606
  %v2608 = vsel %vm305, %v2598, 0.0
  %2609 = vadd.xlane.f32.xlu0 %v2608
  %v2610 = vpop.xlane.xlu0 %2609
  %v2611 = vmul.f32 %v2601, %v318
  %v2612 = vmul.f32 %v2604, %v318
  %v2613 = vmul.f32 %v2607, %v318
  %v2614 = vmul.f32 %v2610, %v318
  %v2615 = vmul.f32 %v2591, %v2591
  %v2616 = vmul.f32 %v2592, %v2592
  %v2617 = vmul.f32 %v2593, %v2593
  %v2618 = vmul.f32 %v2594, %v2594
  %v2619 = vsub.f32 %v2611, %v2615
  %v2620 = vsub.f32 %v2612, %v2616
  %v2621 = vsub.f32 %v2613, %v2617
  %v2622 = vsub.f32 %v2614, %v2618
  %v2623 = vsub.f32 %v2573, %v2591
  %v2624 = vsub.f32 %v2574, %v2592
  %v2625 = vsub.f32 %v2575, %v2593
  %v2626 = vsub.f32 %v2576, %v2594
  %v2627 = vadd.f32 %v2619, 1e-05
  %v2628 = vadd.f32 %v2620, 1e-05
  %v2629 = vadd.f32 %v2621, 1e-05
  %v2630 = vadd.f32 %v2622, 1e-05
  %v2631 = vrsqrt.pop %v2627
  %v2632 = vrsqrt.pop %v2628
  %v2633 = vrsqrt.pop %v2629
  %v2634 = vrsqrt.pop %v2630
  %v2635 = vmul.f32 %v2623, %v2631
  %v2636 = vmul.f32 %v2624, %v2632
  %v2637 = vmul.f32 %v2625, %v2633
  %v2638 = vmul.f32 %v2626, %v2634
  %v2639 = vlaneseq
  %v2640 = vshrl.u32 %v2639, 7
  %v2641 = vsub.s32 0, %v2640
  %v2642 = vrot.slane %v2577, %v2641
  %v2643 = vmul.f32 %v2635, %v2642
  %v2644 = vmul.f32 %v2636, %v2642
  %v2645 = vmul.f32 %v2637, %v2642
  %v2646 = vmul.f32 %v2638, %v2642
  %v2647 = vlaneseq
  %v2648 = vshrl.u32 %v2647, 7
  %v2649 = vsub.s32 0, %v2648
  %v2650 = vrot.slane %v2578, %v2649
  %v2651 = vadd.f32 %v2643, %v2650
  %v2652 = vadd.f32 %v2644, %v2650
  %v2653 = vadd.f32 %v2645, %v2650
  %v2654 = vadd.f32 %v2646, %v2650
  %v2655 = vld [vmem:[%s2 + $0x68] sm:$0xff]
  %v2656 = vld [vmem:[%s2 + $0x70] sm:$0xff]
  %v2657 = vld [vmem:[%s2 + $0x78] sm:$0xff]
  %v2658 = vld [vmem:[%s2 + $0x80] sm:$0xff]
  %v2659 = vld [vmem:[%s2 + $0x89] sm:$0x1]
  %v2660 = vlaneseq
  %v2661 = vshrl.u32 %v2660, 7
  %v2662 = vsub.s32 0, %v2661
  %v2663 = vrot.slane %v2659, %v2662
  %v2665 = vsel %vm305, %v2651, 0
  %v2668 = vsel %vm305, %v2652, 0
  %v2671 = vsel %vm305, %v2653, 0
  %v2674 = vsel %vm305, %v2654, 0
  %2676 = vmatprep.subr.mxu0 0.0
  %2677 = vmatpush1.msra.mxu0 0.0
  %2678 = vmatprep.subr.mxu0 0.0
  %2679 = vmatpush1.msra.mxu0 0.0
  %2680 = vmatprep.subr.mxu0 0.0
  %2681 = vmatpush1.msra.mxu0 0.0
  %2682 = vmatprep.subr.mxu0 0.0
  %2683 = vmatpush1.msra.mxu0 0.0
  %2684 = vmatprep.subr.mxu0 0.0
  %2685 = vmatpush1.msra.mxu0 0.0
  %2686 = vmatprep.subr.mxu0 0.0
  %2687 = vmatpush1.msra.mxu0 0.0
  %2688 = vmatprep.subr.mxu0 0.0
  %2689 = vmatpush1.msra.mxu0 0.0
  %2690 = vmatprep.subr.mxu0 0.0
  %2691 = vmatpush1.msra.mxu0 0.0
  %2692 = vmatprep.subr.mxu0 0.0
  %2693 = vmatpush1.msra.mxu0 0.0
  %2694 = vmatprep.subr.mxu0 0.0
  %2695 = vmatpush1.msra.mxu0 0.0
  %2696 = vmatprep.subr.mxu0 0.0
  %2697 = vmatpush1.msra.mxu0 0.0
  %2698 = vmatprep.subr.mxu0 0.0
  %2699 = vmatpush1.msra.mxu0 0.0
  %2700 = vmatprep.subr.mxu0 0.0
  %2701 = vmatpush1.msra.mxu0 %v2658
  %2702 = vmatprep.subr.mxu0 0.0
  %2703 = vmatpush1.msra.mxu0 %v2657
  %2704 = vmatprep.subr.mxu0 0.0
  %2705 = vmatpush1.msra.mxu0 %v2656
  %2706 = vmatprep.subr.mxu0 0.0
  %2707 = vmatpush1.msra.mxu0 %v2655
  %2708 = vmatprep.subr.mxu0 0.0
  %2709 = vmatpush2.msra.mxu0 0.0
  %2710 = vmatprep.subr.mxu0 0.0
  %2711 = vmatpush2.msra.mxu0 0.0
  %2712 = vmatprep.subr.mxu0 0.0
  %2713 = vmatpush2.msra.mxu0 0.0
  %2714 = vmatprep.subr.mxu0 0.0
  %2715 = vmatpush2.msra.mxu0 0.0
  %2716 = vmatprep.subr.mxu0 0.0
  %2717 = vmatpush2.msra.mxu0 0.0
  %2718 = vmatprep.subr.mxu0 0.0
  %2719 = vmatpush2.msra.mxu0 0.0
  %2720 = vmatprep.subr.mxu0 0.0
  %2721 = vmatpush2.msra.mxu0 0.0
  %2722 = vmatprep.subr.mxu0 0.0
  %2723 = vmatpush2.msra.mxu0 0.0
  %2724 = vmatprep.subr.mxu0 0.0
  %2725 = vmatpush2.msra.mxu0 0.0
  %2726 = vmatprep.subr.mxu0 0.0
  %2727 = vmatpush2.msra.mxu0 0.0
  %2728 = vmatprep.subr.mxu0 0.0
  %2729 = vmatpush2.msra.mxu0 0.0
  %2730 = vmatprep.subr.mxu0 0.0
  %2731 = vmatpush2.msra.mxu0 0.0
  %2732 = vmatprep.subr.mxu0 0.0
  %2733 = vmatpush2.msra.mxu0 0.0
  %2734 = vmatprep.subr.mxu0 0.0
  %2735 = vmatpush2.msra.mxu0 0.0
  %2736 = vmatprep.subr.mxu0 0.0
  %2737 = vmatpush2.msra.mxu0 0.0
  %2738 = vmatprep.subr.mxu0 0.0
  %2739 = vmatpush2.msra.mxu0 0.0
  %2740 = vmatprep.mubr.f32.mxu0 0.0
  %2741 = vmatmul.mubr.f32.gmra.mxu0 %v2665
  %v2742 = vpop.f32.mrf.mxu0
  %v2743 = vadd.f32 %v2663, %v2742
  %v2744 = vpop.f32.mrf.mxu0
  %2745 = vmatprep.mubr.f32.mxu0 0.0
  %2746 = vmatmul.mubr.f32.gmra.mxu0 %v2668
  %v2747 = vpop.f32.mrf.mxu0
  %v2748 = vadd.f32 %v2663, %v2747
  %v2749 = vpop.f32.mrf.mxu0
  %2750 = vmatprep.mubr.f32.mxu0 0.0
  %2751 = vmatmul.mubr.f32.gmra.mxu0 %v2671
  %v2752 = vpop.f32.mrf.mxu0
  %v2753 = vadd.f32 %v2663, %v2752
  %v2754 = vpop.f32.mrf.mxu0
  %2755 = vmatprep.mubr.f32.mxu0 0.0
  %2756 = vmatmul.mubr.f32.gmra.mxu0 %v2674
  %v2757 = vpop.f32.mrf.mxu0
  %v2758 = vadd.f32 %v2663, %v2757
  %v2759 = vpop.f32.mrf.mxu0
  %2760 = vdwg.mxu0
  %v2761 = vmul.f32 %v2743, 0.5
  %v2762 = vmul.f32 %v2748, 0.5
  %v2763 = vmul.f32 %v2753, 0.5
  %v2764 = vmul.f32 %v2758, 0.5
  %v2765 = vmul.f32 %v2743, 0.70710677
  %v2766 = vmul.f32 %v2748, 0.70710677
  %v2767 = vmul.f32 %v2753, 0.70710677
  %v2768 = vmul.f32 %v2758, 0.70710677
  %v2769 = vand.u32 2147483647, %v2765
  %v2770 = vand.u32 2147483647, %v2766
  %v2771 = vand.u32 2147483647, %v2767
  %v2772 = vand.u32 2147483647, %v2768
  %v2773 = vmul.f32 %v2769, 0.3275911
  %v2774 = vmul.f32 %v2770, 0.3275911
  %v2775 = vmul.f32 %v2771, 0.3275911
  %v2776 = vmul.f32 %v2772, 0.3275911
  %v2777 = vadd.f32 %v2773, 1.0
  %v2778 = vadd.f32 %v2774, 1.0
  %v2779 = vadd.f32 %v2775, 1.0
  %v2780 = vadd.f32 %v2776, 1.0
  %v2781 = vrcp.pop %v2777
  %v2782 = vrcp.pop %v2778
  %v2783 = vrcp.pop %v2779
  %v2784 = vrcp.pop %v2780
  %v2785 = vmul.f32 %v2781, 1.0614054
  %v2786 = vmul.f32 %v2782, 1.0614054
  %v2787 = vmul.f32 %v2783, 1.0614054
  %v2788 = vmul.f32 %v2784, 1.0614054
  %v2789 = vadd.f32 %v2785, -1.4531521
  %v2790 = vadd.f32 %v2786, -1.4531521
  %v2791 = vadd.f32 %v2787, -1.4531521
  %v2792 = vadd.f32 %v2788, -1.4531521
  %v2793 = vmul.f32 %v2789, %v2781
  %v2794 = vmul.f32 %v2790, %v2782
  %v2795 = vmul.f32 %v2791, %v2783
  %v2796 = vmul.f32 %v2792, %v2784
  %v2797 = vadd.f32 %v2793, 1.4214138
  %v2798 = vadd.f32 %v2794, 1.4214138
  %v2799 = vadd.f32 %v2795, 1.4214138
  %v2800 = vadd.f32 %v2796, 1.4214138
  %v2801 = vmul.f32 %v2797, %v2781
  %v2802 = vmul.f32 %v2798, %v2782
  %v2803 = vmul.f32 %v2799, %v2783
  %v2804 = vmul.f32 %v2800, %v2784
  %v2805 = vadd.f32 %v2801, -0.28449672
  %v2806 = vadd.f32 %v2802, -0.28449672
  %v2807 = vadd.f32 %v2803, -0.28449672
  %v2808 = vadd.f32 %v2804, -0.28449672
  %v2809 = vmul.f32 %v2805, %v2781
  %v2810 = vmul.f32 %v2806, %v2782
  %v2811 = vmul.f32 %v2807, %v2783
  %v2812 = vmul.f32 %v2808, %v2784
  %v2813 = vadd.f32 %v2809, 0.2548296
  %v2814 = vadd.f32 %v2810, 0.2548296
  %v2815 = vadd.f32 %v2811, 0.2548296
  %v2816 = vadd.f32 %v2812, 0.2548296
  %v2817 = vmul.f32 %v2813, %v2781
  %v2818 = vmul.f32 %v2814, %v2782
  %v2819 = vmul.f32 %v2815, %v2783
  %v2820 = vmul.f32 %v2816, %v2784
  %v2821 = vsub.f32 0.0, %v2769
  %v2822 = vsub.f32 0.0, %v2770
  %v2823 = vsub.f32 0.0, %v2771
  %v2824 = vsub.f32 0.0, %v2772
  %v2825 = vmul.f32 %v2821, %v2769
  %v2826 = vmul.f32 %v2822, %v2770
  %v2827 = vmul.f32 %v2823, %v2771
  %v2828 = vmul.f32 %v2824, %v2772
  %v2829 = vmul.f32 %v2825, 1.442695
  %v2830 = vpow.pop %v2829
  %v2831 = vmul.f32 %v2826, 1.442695
  %v2832 = vpow.pop %v2831
  %v2833 = vmul.f32 %v2827, 1.442695
  %v2834 = vpow.pop %v2833
  %v2835 = vmul.f32 %v2828, 1.442695
  %v2836 = vpow.pop %v2835
  %v2837 = vmul.f32 %v2817, %v2830
  %v2838 = vmul.f32 %v2818, %v2832
  %v2839 = vmul.f32 %v2819, %v2834
  %v2840 = vmul.f32 %v2820, %v2836
  %v2841 = vsub.f32 1.0, %v2837
  %v2842 = vsub.f32 1.0, %v2838
  %v2843 = vsub.f32 1.0, %v2839
  %v2844 = vsub.f32 1.0, %v2840
  %vm2845 = vcmp.ge.f32.partialorder %v2765, 0.0
  %vm2846 = vcmp.ge.f32.partialorder %v2766, 0.0
  %vm2847 = vcmp.ge.f32.partialorder %v2767, 0.0
  %vm2848 = vcmp.ge.f32.partialorder %v2768, 0.0
  %v2849 = vsub.f32 0.0, %v2841
  %v2850 = vsub.f32 0.0, %v2842
  %v2851 = vsub.f32 0.0, %v2843
  %v2852 = vsub.f32 0.0, %v2844
  %v2853 = vsel %vm2845, %v2841, %v2849
  %v2854 = vsel %vm2846, %v2842, %v2850
  %v2855 = vsel %vm2847, %v2843, %v2851
  %v2856 = vsel %vm2848, %v2844, %v2852
  %v2857 = vadd.f32 %v2853, 1.0
  %v2858 = vadd.f32 %v2854, 1.0
  %v2859 = vadd.f32 %v2855, 1.0
  %v2860 = vadd.f32 %v2856, 1.0
  %v2861 = vmul.f32 %v2761, %v2857
  %v2862 = vmul.f32 %v2762, %v2858
  %v2863 = vmul.f32 %v2763, %v2859
  %v2864 = vmul.f32 %v2764, %v2860
  %v2865 = vld [vmem:[%s1 + $0x100] sm:$0xff]
  %v2866 = vld [vmem:[%s1 + $0x108] sm:$0xff]
  %v2867 = vld [vmem:[%s1 + $0x110] sm:$0xff]
  %v2868 = vld [vmem:[%s1 + $0x118] sm:$0xff]
  %v2869 = vld [vmem:[%s1 + $0x120] sm:$0xff]
  %v2870 = vld [vmem:[%s1 + $0x128] sm:$0xff]
  %v2871 = vld [vmem:[%s1 + $0x130] sm:$0xff]
  %v2872 = vld [vmem:[%s1 + $0x138] sm:$0xff]
  %v2873 = vld [vmem:[%s1 + $0x140] sm:$0xff]
  %v2874 = vld [vmem:[%s1 + $0x148] sm:$0xff]
  %v2875 = vld [vmem:[%s1 + $0x150] sm:$0xff]
  %v2876 = vld [vmem:[%s1 + $0x158] sm:$0xff]
  %v2877 = vld [vmem:[%s1 + $0x160] sm:$0xff]
  %v2878 = vld [vmem:[%s1 + $0x168] sm:$0xff]
  %v2879 = vld [vmem:[%s1 + $0x170] sm:$0xff]
  %v2880 = vld [vmem:[%s1 + $0x178] sm:$0xff]
  %2881 = vmatprep.subr.mxu0 0.0
  %2882 = vmatpush1.msra.mxu0 %v2880
  %2883 = vmatprep.subr.mxu0 0.0
  %2884 = vmatpush1.msra.mxu0 %v2879
  %2885 = vmatprep.subr.mxu0 0.0
  %2886 = vmatpush1.msra.mxu0 %v2878
  %2887 = vmatprep.subr.mxu0 0.0
  %2888 = vmatpush1.msra.mxu0 %v2877
  %2889 = vmatprep.subr.mxu0 0.0
  %2890 = vmatpush1.msra.mxu0 %v2876
  %2891 = vmatprep.subr.mxu0 0.0
  %2892 = vmatpush1.msra.mxu0 %v2875
  %2893 = vmatprep.subr.mxu0 0.0
  %2894 = vmatpush1.msra.mxu0 %v2874
  %2895 = vmatprep.subr.mxu0 0.0
  %2896 = vmatpush1.msra.mxu0 %v2873
  %2897 = vmatprep.subr.mxu0 0.0
  %2898 = vmatpush1.msra.mxu0 %v2872
  %2899 = vmatprep.subr.mxu0 0.0
  %2900 = vmatpush1.msra.mxu0 %v2871
  %2901 = vmatprep.subr.mxu0 0.0
  %2902 = vmatpush1.msra.mxu0 %v2870
  %2903 = vmatprep.subr.mxu0 0.0
  %2904 = vmatpush1.msra.mxu0 %v2869
  %2905 = vmatprep.subr.mxu0 0.0
  %2906 = vmatpush1.msra.mxu0 %v2868
  %2907 = vmatprep.subr.mxu0 0.0
  %2908 = vmatpush1.msra.mxu0 %v2867
  %2909 = vmatprep.subr.mxu0 0.0
  %2910 = vmatpush1.msra.mxu0 %v2866
  %2911 = vmatprep.subr.mxu0 0.0
  %2912 = vmatpush1.msra.mxu0 %v2865
  %2913 = vmatprep.subr.mxu0 0.0
  %2914 = vmatpush2.msra.mxu0 0.0
  %2915 = vmatprep.subr.mxu0 0.0
  %2916 = vmatpush2.msra.mxu0 0.0
  %2917 = vmatprep.subr.mxu0 0.0
  %2918 = vmatpush2.msra.mxu0 0.0
  %2919 = vmatprep.subr.mxu0 0.0
  %2920 = vmatpush2.msra.mxu0 0.0
  %2921 = vmatprep.subr.mxu0 0.0
  %2922 = vmatpush2.msra.mxu0 0.0
  %2923 = vmatprep.subr.mxu0 0.0
  %2924 = vmatpush2.msra.mxu0 0.0
  %2925 = vmatprep.subr.mxu0 0.0
  %2926 = vmatpush2.msra.mxu0 0.0
  %2927 = vmatprep.subr.mxu0 0.0
  %2928 = vmatpush2.msra.mxu0 0.0
  %2929 = vmatprep.subr.mxu0 0.0
  %2930 = vmatpush2.msra.mxu0 0.0
  %2931 = vmatprep.subr.mxu0 0.0
  %2932 = vmatpush2.msra.mxu0 0.0
  %2933 = vmatprep.subr.mxu0 0.0
  %2934 = vmatpush2.msra.mxu0 0.0
  %2935 = vmatprep.subr.mxu0 0.0
  %2936 = vmatpush2.msra.mxu0 0.0
  %2937 = vmatprep.subr.mxu0 0.0
  %2938 = vmatpush2.msra.mxu0 0.0
  %2939 = vmatprep.subr.mxu0 0.0
  %2940 = vmatpush2.msra.mxu0 0.0
  %2941 = vmatprep.subr.mxu0 0.0
  %2942 = vmatpush2.msra.mxu0 0.0
  %2943 = vmatprep.subr.mxu0 0.0
  %2944 = vmatpush2.msra.mxu0 0.0
  %2945 = vmatprep.mubr.f32.mxu0 0.0
  %2946 = vmatmul.mubr.f32.gmra.mxu0 %v2861
  %v2947 = vpop.f32.mrf.mxu0
  %v2948 = vadd.f32 0.0, %v2947
  %v2949 = vpop.f32.mrf.mxu0
  %2950 = vmatprep.mubr.f32.mxu0 0.0
  %2951 = vmatmul.mubr.f32.gmra.mxu0 %v2862
  %v2952 = vpop.f32.mrf.mxu0
  %v2953 = vadd.f32 0.0, %v2952
  %v2954 = vpop.f32.mrf.mxu0
  %2955 = vmatprep.mubr.f32.mxu0 0.0
  %2956 = vmatmul.mubr.f32.gmra.mxu0 %v2863
  %v2957 = vpop.f32.mrf.mxu0
  %v2958 = vadd.f32 0.0, %v2957
  %v2959 = vpop.f32.mrf.mxu0
  %2960 = vmatprep.mubr.f32.mxu0 0.0
  %2961 = vmatmul.mubr.f32.gmra.mxu0 %v2864
  %v2962 = vpop.f32.mrf.mxu0
  %v2963 = vadd.f32 0.0, %v2962
  %v2964 = vpop.f32.mrf.mxu0
  %2965 = vdwg.mxu0
  %v2966 = vadd.f32 %v2573, %v2948
  %v2967 = vadd.f32 %v2574, %v2953
  %v2968 = vadd.f32 %v2575, %v2958
  %v2969 = vadd.f32 %v2576, %v2963
  %v2970 = vld [vmem:[%s1 + $0xdd] sm:$0x1]
  %v2971 = vlaneseq
  %v2972 = vshrl.u32 %v2971, 7
  %v2973 = vsub.s32 0, %v2972
  %v2974 = vrot.slane %v2970, %v2973
  %v2975 = vadd.f32 %v2966, %v2974
  %v2976 = vadd.f32 %v2967, %v2974
  %v2977 = vadd.f32 %v2968, %v2974
  %v2978 = vadd.f32 %v2969, %v2974
  %v2979 = vld [vmem:[%s1 + $0x2c] sm:$0x1]
  %v2980 = vld [vmem:[%s1 + $0x2d] sm:$0x1]
  %v2981 = vsel %vm305, %v2975, 0.0
  %2982 = vadd.xlane.f32.xlu0 %v2981
  %v2983 = vpop.xlane.xlu0 %2982
  %v2984 = vsel %vm305, %v2976, 0.0
  %2985 = vadd.xlane.f32.xlu0 %v2984
  %v2986 = vpop.xlane.xlu0 %2985
  %v2987 = vsel %vm305, %v2977, 0.0
  %2988 = vadd.xlane.f32.xlu0 %v2987
  %v2989 = vpop.xlane.xlu0 %2988
  %v2990 = vsel %vm305, %v2978, 0.0
  %2991 = vadd.xlane.f32.xlu0 %v2990
  %v2992 = vpop.xlane.xlu0 %2991
  %v2993 = vmul.f32 %v2983, %v318
  %v2994 = vmul.f32 %v2986, %v318
  %v2995 = vmul.f32 %v2989, %v318
  %v2996 = vmul.f32 %v2992, %v318
  %v2997 = vmul.f32 %v2975, %v2975
  %v2998 = vmul.f32 %v2976, %v2976
  %v2999 = vmul.f32 %v2977, %v2977
  %v3000 = vmul.f32 %v2978, %v2978
  %v3001 = vsel %vm305, %v2997, 0.0
  %3002 = vadd.xlane.f32.xlu0 %v3001
  %v3003 = vpop.xlane.xlu0 %3002
  %v3004 = vsel %vm305, %v2998, 0.0
  %3005 = vadd.xlane.f32.xlu0 %v3004
  %v3006 = vpop.xlane.xlu0 %3005
  %v3007 = vsel %vm305, %v2999, 0.0
  %3008 = vadd.xlane.f32.xlu0 %v3007
  %v3009 = vpop.xlane.xlu0 %3008
  %v3010 = vsel %vm305, %v3000, 0.0
  %3011 = vadd.xlane.f32.xlu0 %v3010
  %v3012 = vpop.xlane.xlu0 %3011
  %v3013 = vmul.f32 %v3003, %v318
  %v3014 = vmul.f32 %v3006, %v318
  %v3015 = vmul.f32 %v3009, %v318
  %v3016 = vmul.f32 %v3012, %v318
  %v3017 = vmul.f32 %v2993, %v2993
  %v3018 = vmul.f32 %v2994, %v2994
  %v3019 = vmul.f32 %v2995, %v2995
  %v3020 = vmul.f32 %v2996, %v2996
  %v3021 = vsub.f32 %v3013, %v3017
  %v3022 = vsub.f32 %v3014, %v3018
  %v3023 = vsub.f32 %v3015, %v3019
  %v3024 = vsub.f32 %v3016, %v3020
  %v3025 = vsub.f32 %v2975, %v2993
  %v3026 = vsub.f32 %v2976, %v2994
  %v3027 = vsub.f32 %v2977, %v2995
  %v3028 = vsub.f32 %v2978, %v2996
  %v3029 = vadd.f32 %v3021, 1e-05
  %v3030 = vadd.f32 %v3022, 1e-05
  %v3031 = vadd.f32 %v3023, 1e-05
  %v3032 = vadd.f32 %v3024, 1e-05
  %v3033 = vrsqrt.pop %v3029
  %v3034 = vrsqrt.pop %v3030
  %v3035 = vrsqrt.pop %v3031
  %v3036 = vrsqrt.pop %v3032
  %v3037 = vmul.f32 %v3025, %v3033
  %v3038 = vmul.f32 %v3026, %v3034
  %v3039 = vmul.f32 %v3027, %v3035
  %v3040 = vmul.f32 %v3028, %v3036
  %v3041 = vlaneseq
  %v3042 = vshrl.u32 %v3041, 7
  %v3043 = vsub.s32 0, %v3042
  %v3044 = vrot.slane %v2979, %v3043
  %v3045 = vmul.f32 %v3037, %v3044
  %v3046 = vmul.f32 %v3038, %v3044
  %v3047 = vmul.f32 %v3039, %v3044
  %v3048 = vmul.f32 %v3040, %v3044
  %v3049 = vlaneseq
  %v3050 = vshrl.u32 %v3049, 7
  %v3051 = vsub.s32 0, %v3050
  %v3052 = vrot.slane %v2980, %v3051
  %v3053 = vadd.f32 %v3045, %v3052
  %v3054 = vadd.f32 %v3046, %v3052
  %v3055 = vadd.f32 %v3047, %v3052
  %v3056 = vadd.f32 %v3048, %v3052
  %v3057 = vld [vmem:[%s2 + $0x90] sm:$0xff]
  %v3058 = vld [vmem:[%s2 + $0x98] sm:$0xff]
  %v3059 = vld [vmem:[%s2 + $0xa0] sm:$0xff]
  %v3060 = vld [vmem:[%s2 + $0xa8] sm:$0xff]
  %v3061 = vld [vmem:[%s2 + $0xb0] sm:$0x1]
  %v3062 = vlaneseq
  %v3063 = vshrl.u32 %v3062, 7
  %v3064 = vsub.s32 0, %v3063
  %v3065 = vrot.slane %v3061, %v3064
  %v3067 = vsel %vm305, %v3053, 0
  %v3070 = vsel %vm305, %v3054, 0
  %v3073 = vsel %vm305, %v3055, 0
  %v3076 = vsel %vm305, %v3056, 0
  %3078 = vmatprep.subr.mxu0 0.0
  %3079 = vmatpush1.msra.mxu0 0.0
  %3080 = vmatprep.subr.mxu0 0.0
  %3081 = vmatpush1.msra.mxu0 0.0
  %3082 = vmatprep.subr.mxu0 0.0
  %3083 = vmatpush1.msra.mxu0 0.0
  %3084 = vmatprep.subr.mxu0 0.0
  %3085 = vmatpush1.msra.mxu0 0.0
  %3086 = vmatprep.subr.mxu0 0.0
  %3087 = vmatpush1.msra.mxu0 0.0
  %3088 = vmatprep.subr.mxu0 0.0
  %3089 = vmatpush1.msra.mxu0 0.0
  %3090 = vmatprep.subr.mxu0 0.0
  %3091 = vmatpush1.msra.mxu0 0.0
  %3092 = vmatprep.subr.mxu0 0.0
  %3093 = vmatpush1.msra.mxu0 0.0
  %3094 = vmatprep.subr.mxu0 0.0
  %3095 = vmatpush1.msra.mxu0 0.0
  %3096 = vmatprep.subr.mxu0 0.0
  %3097 = vmatpush1.msra.mxu0 0.0
  %3098 = vmatprep.subr.mxu0 0.0
  %3099 = vmatpush1.msra.mxu0 0.0
  %3100 = vmatprep.subr.mxu0 0.0
  %3101 = vmatpush1.msra.mxu0 0.0
  %3102 = vmatprep.subr.mxu0 0.0
  %3103 = vmatpush1.msra.mxu0 %v3060
  %3104 = vmatprep.subr.mxu0 0.0
  %3105 = vmatpush1.msra.mxu0 %v3059
  %3106 = vmatprep.subr.mxu0 0.0
  %3107 = vmatpush1.msra.mxu0 %v3058
  %3108 = vmatprep.subr.mxu0 0.0
  %3109 = vmatpush1.msra.mxu0 %v3057
  %3110 = vmatprep.subr.mxu0 0.0
  %3111 = vmatpush2.msra.mxu0 0.0
  %3112 = vmatprep.subr.mxu0 0.0
  %3113 = vmatpush2.msra.mxu0 0.0
  %3114 = vmatprep.subr.mxu0 0.0
  %3115 = vmatpush2.msra.mxu0 0.0
  %3116 = vmatprep.subr.mxu0 0.0
  %3117 = vmatpush2.msra.mxu0 0.0
  %3118 = vmatprep.subr.mxu0 0.0
  %3119 = vmatpush2.msra.mxu0 0.0
  %3120 = vmatprep.subr.mxu0 0.0
  %3121 = vmatpush2.msra.mxu0 0.0
  %3122 = vmatprep.subr.mxu0 0.0
  %3123 = vmatpush2.msra.mxu0 0.0
  %3124 = vmatprep.subr.mxu0 0.0
  %3125 = vmatpush2.msra.mxu0 0.0
  %3126 = vmatprep.subr.mxu0 0.0
  %3127 = vmatpush2.msra.mxu0 0.0
  %3128 = vmatprep.subr.mxu0 0.0
  %3129 = vmatpush2.msra.mxu0 0.0
  %3130 = vmatprep.subr.mxu0 0.0
  %3131 = vmatpush2.msra.mxu0 0.0
  %3132 = vmatprep.subr.mxu0 0.0
  %3133 = vmatpush2.msra.mxu0 0.0
  %3134 = vmatprep.subr.mxu0 0.0
  %3135 = vmatpush2.msra.mxu0 0.0
  %3136 = vmatprep.subr.mxu0 0.0
  %3137 = vmatpush2.msra.mxu0 0.0
  %3138 = vmatprep.subr.mxu0 0.0
  %3139 = vmatpush2.msra.mxu0 0.0
  %3140 = vmatprep.subr.mxu0 0.0
  %3141 = vmatpush2.msra.mxu0 0.0
  %3142 = vmatprep.mubr.f32.mxu0 0.0
  %3143 = vmatmul.mubr.f32.gmra.mxu0 %v3067
  %v3144 = vpop.f32.mrf.mxu0
  %v3145 = vadd.f32 %v3065, %v3144
  %v3146 = vpop.f32.mrf.mxu0
  %3147 = vmatprep.mubr.f32.mxu0 0.0
  %3148 = vmatmul.mubr.f32.gmra.mxu0 %v3070
  %v3149 = vpop.f32.mrf.mxu0
  %v3150 = vadd.f32 %v3065, %v3149
  %v3151 = vpop.f32.mrf.mxu0
  %3152 = vmatprep.mubr.f32.mxu0 0.0
  %3153 = vmatmul.mubr.f32.gmra.mxu0 %v3073
  %v3154 = vpop.f32.mrf.mxu0
  %v3155 = vadd.f32 %v3065, %v3154
  %v3156 = vpop.f32.mrf.mxu0
  %3157 = vmatprep.mubr.f32.mxu0 0.0
  %3158 = vmatmul.mubr.f32.gmra.mxu0 %v3076
  %v3159 = vpop.f32.mrf.mxu0
  %v3160 = vadd.f32 %v3065, %v3159
  %v3161 = vpop.f32.mrf.mxu0
  %3162 = vdwg.mxu0
  %3163 = vst [vmem:[%s3] sm:$0xff] %v3145
  %3164 = vst [vmem:[%s3 + $0x8] sm:$0xff] %v3150
  %3165 = vst [vmem:[%s3 + $0x10] sm:$0xff] %v3155
  %3166 = vst [vmem:[%s3 + $0x18] sm:$0xff] %v3160
  // Predicated region
  $region14: #{cdt_forward.1} parent=0 // pred_check
    _
  $region15: #{cdt_forward.1} parent=0 // pred_check_branch
    %3168 = sbr.rel (0) target = $region17
  $region16: #{cdt_forward.1} parent=0 // pred_region
    _
  $region17: #{cdt_forward.1} parent=0 // pred_fallthru
    _
  // Predicated region
  $region18: #{cdt_forward.1} parent=0 // pred_check
    _
  $region19: #{cdt_forward.1} parent=0 // pred_check_branch
    %3170 = sbr.rel (0) target = $region21
  $region20: #{cdt_forward.1} parent=0 // pred_region
    _
  $region21: #{cdt_forward.1} parent=0 // pred_fallthru
    _

</llo_original>
